<compile_context>
chip_gen: v6e
topology: v6e:2x2x1
jax: 0.10.0
libtpu: 0.0.40
codegen_flags: <defaults>
</compile_context>

<pallas_src>
import math

import numpy as np
import jax
import jax.numpy as jnp
from jax.experimental import pallas as pl
from jax.experimental.pallas import tpu as pltpu

LEAKY_SLOPE = 0.01

# (Cin, Cout, kernel, stride, apply_leaky_relu) — mirrors nn.Sequential in __init__
LAYER_CFG = [
    (1, 4, 2, 2, True),
    (4, 8, 2, 2, True),
    (8, 16, 4, 4, True),
    (16, 32, 3, 2, True),
    (32, 64, 2, 1, False),
]

_N_PATCH = 36        # 6x6 layer-3 output pixels per image
_PATCH_LANES = 256   # 16x16 input pixels per patch (raster order within the patch)
_DEF_B_TILE = 8      # images per grid step (multiple of 8 -> aligned blocks)


def _leaky(x):
    return jnp.where(x >= 0, x, LEAKY_SLOPE * x)


# ------------------------------- fused kernel ------------------------------- #
def _make_kernel(b_tile):
    B = b_tile

    def kernel(xp_ref, bd1_ref, b1_ref, bd2_ref, b2_ref, w3_ref, b3_ref,
               w4_ref, b4_ref, w5_ref, b5_ref, o_ref, xw_ref):
        # xp_ref: (36*B, 256) bf16. Row = one 16x16 input patch, rows ordered
        # (patch p = h3*6+w3, image b) within the step; lanes are raster (Yl*16+Xl)
        # because the fine permutation is folded into bd1.
        x = xp_ref[...]                                                  # (36B, 256)

        # Layer 1: Conv(1->4, k2 s2) + LeakyReLU as a block-diagonal GEMM.
        a1 = jnp.dot(x, bd1_ref[...], preferred_element_type=jnp.float32)
        a1 = _leaky(a1 + b1_ref[...]).astype(jnp.bfloat16)               # (36B, 256)

        # Layer 2: Conv(4->8, k2 s2) + LeakyReLU as a block-diagonal GEMM.
        a2 = jnp.dot(a1, bd2_ref[...], preferred_element_type=jnp.float32)
        a2 = _leaky(a2 + b2_ref[...]).astype(jnp.bfloat16)               # (36B, 128)

        # Layer 3: Conv(8->16, k4 s4) + LeakyReLU; one K=128 dense GEMM.
        a3 = jnp.dot(a2, w3_ref[...], preferred_element_type=jnp.float32)
        a3 = _leaky(a3 + b3_ref[...])                                    # (36B, 16) f32

        # Transition (p,b)-rows -> per-image 576-lane im2col row via 36 static
        # 16-lane stores into VMEM scratch (rows aligned to sublane tiles).
        for p in range(_N_PATCH):
            xw_ref[:, p * 16:(p + 1) * 16] = a3[p * B:(p + 1) * B, :]
        a3w = xw_ref[...].astype(jnp.bfloat16)                           # (B, 576)

        # Layer 4: Conv(16->32, k3 s2) on 6x6x16 -> 2x2x32 as ONE dense dot against a
        # combined gather/weight matrix (zeros where a (p, q) pair is not in the window).
        a4 = jnp.dot(a3w, w4_ref[...], preferred_element_type=jnp.float32)
        a4 = _leaky(a4 + b4_ref[...]).astype(jnp.bfloat16)               # (B, 128)

        # Layer 5: Conv(32->64, k2 s1) on 2x2x32 -> 64, one dense dot, no activation.
        out = jnp.dot(a4, w5_ref[...], preferred_element_type=jnp.float32) + b5_ref[...]
        o_ref[...] = out.astype(o_ref.dtype)                             # (B, 64)

    return kernel


# ------------------------------ wrapper (JAX) ------------------------------- #
def _prep_input(x_nchw, b_tile):
    # NCHW (N,1,96,96) -> (n_pad*36, 256), rows ordered (step, h3, w3, b), lanes raster.
    # Only a coarse patch transpose (contiguous 16-element inner runs); the fine lane
    # permutation is folded into the layer-1 weights.
    n = x_nchw.shape[0]
    n_pad = pl.cdiv(n, b_tile) * b_tile
    x0 = x_nchw[:, 0].astype(jnp.bfloat16)                 # (N, 96, 96)
    if n_pad != n:
        x0 = jnp.pad(x0, ((0, n_pad - n), (0, 0), (0, 0)))
    n_steps = n_pad // b_tile
    xp = x0.reshape(n_steps, b_tile, 6, 16, 6, 16)         # (s, b, h3, Yl, w3, Xl)
    xp = xp.transpose(0, 2, 4, 1, 3, 5)                    # (s, h3, w3, b, Yl, Xl)
    return xp.reshape(n_pad * _N_PATCH, _PATCH_LANES), n_pad


def _raster_to_hier_perm():
    # raster lane r = Yl*16 + Xl  ->  hierarchical lane (i3,j3,i2,j2,i1,j1)
    idx = np.empty(256, np.int32)
    for r in range(256):
        yl, xl = divmod(r, 16)
        i3, i2, i1 = yl >> 2, (yl >> 1) & 1, yl & 1
        j3, j2, j1 = xl >> 2, (xl >> 1) & 1, xl & 1
        idx[r] = ((((i3 * 4 + j3) * 2 + i2) * 2 + j2) * 2 + i1) * 2 + j1
    return idx


_RASTER2HIER = _raster_to_hier_perm()


def _fold_params(params):
    (w1, b1), (w2, b2), (w3, b3), (w4, b4), (w5, b5) = params
    f32 = jnp.float32
    bf16 = jnp.bfloat16

    # PyTorch (Cout, Cin, kh, kw) -> (kh, kw, Cin, Cout) flattened K = (i, j, c).
    w1m = jnp.transpose(w1, (2, 3, 1, 0)).reshape(4, 4).astype(f32)
    w2m = jnp.transpose(w2, (2, 3, 1, 0)).reshape(16, 8).astype(f32)
    w3m = jnp.transpose(w3, (2, 3, 1, 0)).reshape(128, 16).astype(f32)
    w4m = jnp.transpose(w4, (2, 3, 1, 0)).reshape(144, 32).astype(f32)
    w5m = jnp.transpose(w5, (2, 3, 1, 0)).reshape(128, 64).astype(f32)

    # Block-diagonal expansions for the tiny-K early layers (lane-dense MXU GEMMs).
    bd1 = jnp.kron(jnp.eye(64, dtype=f32), w1m)            # (256, 256), hier rows
    bd1 = bd1[_RASTER2HIER, :]                             # fold raster->hier lane perm
    bd2 = jnp.kron(jnp.eye(16, dtype=f32), w2m)            # (256, 128)

    # Combined gather/weight matrix for layer 4: maps the per-image 576-lane
    # (h3, w3, c2) vector directly to the (ho, wo, co) 128-lane layer-4 output.
    w4big = jnp.zeros((576, 128), f32)
    for ho in range(2):
        for wo in range(2):
            for i in range(3):
                for j in range(3):
                    p = (2 * ho + i) * 6 + (2 * wo + j)
                    k = (i * 3 + j) * 16
                    q = ho * 2 + wo
                    w4big = w4big.at[p * 16:(p + 1) * 16,
                                     q * 32:(q + 1) * 32].set(w4m[k:k + 16, :])

    return (bd1.astype(bf16), jnp.tile(b1, 64).reshape(1, 256).astype(f32),
            bd2.astype(bf16), jnp.tile(b2, 16).reshape(1, 128).astype(f32),
            w3m.astype(bf16), b3.reshape(1, 16).astype(f32),
            w4big.astype(bf16), jnp.tile(b4, 4).reshape(1, 128).astype(f32),
            w5m.astype(bf16), b5.reshape(1, 64).astype(f32))


def conv_encoder_forward(x_nchw, params, *, b_tile=_DEF_B_TILE):
    n, c, h, w = x_nchw.shape
    assert (c, h, w) == (1, 96, 96), "fused kernel is specialized to 1x96x96 grid-world inputs"
    xp, n_pad = _prep_input(x_nchw, b_tile)
    folded = _fold_params(params)
    n_steps = n_pad // b_tile

    flops = 2 * n_pad * (36 * 256 * 256 + 36 * 256 * 128 + 36 * 128 * 16
                         + 576 * 128 + 128 * 64)
    bytes_accessed = (n_pad * 36 * 256 * 2 + n_pad * 64 * 4
                      + 2 * (256 * 256 + 256 * 128 + 128 * 16 + 576 * 128 + 128 * 64)
                      + 4 * (256 + 128 + 16 + 128 + 64))

    def _const(shape):
        return pl.BlockSpec(shape, lambda i: (0, 0))

    out = pl.pallas_call(
        _make_kernel(b_tile),
        out_shape=jax.ShapeDtypeStruct((n_pad, 64), jnp.float32),
        grid_spec=pltpu.PrefetchScalarGridSpec(
            num_scalar_prefetch=0,
            grid=(n_steps,),
            in_specs=[
                pl.BlockSpec((b_tile * _N_PATCH, _PATCH_LANES), lambda i: (i, 0)),
                _const((256, 256)), _const((1, 256)),     # layer 1
                _const((256, 128)), _const((1, 128)),     # layer 2
                _const((128, 16)), _const((1, 16)),       # layer 3
                _const((576, 128)), _const((1, 128)),     # layer 4 (combined gather/weight)
                _const((128, 64)), _const((1, 64)),       # layer 5
            ],
            out_specs=pl.BlockSpec((b_tile, 64), lambda i: (i, 0)),
            scratch_shapes=[pltpu.VMEM((b_tile, 576), jnp.float32)],
        ),
        compiler_params=pltpu.CompilerParams(
            dimension_semantics=("parallel",)),
        cost_estimate=pl.CostEstimate(flops=flops, transcendentals=0,
                                      bytes_accessed=bytes_accessed),
    )(xp, *folded)
    return out[:n].reshape(n, 64, 1, 1)   # match PyTorch NCHW output (N, 64, 1, 1)


# ------------------------- deterministic parameters ------------------------- #
def init_params(key):
    # xavier_uniform_ with gain = calculate_gain('leaky_relu') = sqrt(2/(1+0.01^2));
    # biases use PyTorch Conv2d default U(-1/sqrt(fan_in), 1/sqrt(fan_in)).
    gain = math.sqrt(2.0 / (1.0 + LEAKY_SLOPE ** 2))
    params = []
    for (cin, cout, k, _, _) in LAYER_CFG:
        key, kw_, kb_ = jax.random.split(key, 3)
        fan_in = cin * k * k
        fan_out = cout * k * k
        bound = gain * math.sqrt(6.0 / (fan_in + fan_out))
        w = jax.random.uniform(kw_, (cout, cin, k, k), jnp.float32, -bound, bound)
        bbound = 1.0 / math.sqrt(fan_in)
        b = jax.random.uniform(kb_, (cout,), jnp.float32, -bbound, bbound)
        params.append((w, b))
    return params


# ------------------------------ reference check ----------------------------- #
def _reference_forward(x_nchw, params):
    x = x_nchw
    for (w, b), (_, _, _, stride, act) in zip(params, LAYER_CFG):
        x = jax.lax.conv_general_dilated(
            x, w, window_strides=(stride, stride), padding="VALID",
            dimension_numbers=("NCHW", "OIHW", "NCHW"),
            precision=jax.lax.Precision.HIGHEST,
        )
        x = x + b.reshape(1, -1, 1, 1)
        if act:
            x = jnp.where(x >= 0, x, LEAKY_SLOPE * x)
    return x


if __name__ == "__main__":
    key = jax.random.PRNGKey(0)
    k_param, k_x = jax.random.split(key)
    params = init_params(k_param)

    # grid-world images: N=10 (exercises batch padding 10->16 and a 2-step grid)
    x = jax.random.normal(k_x, (10, 1, 96, 96), dtype=jnp.float32)

    fwd = jax.jit(conv_encoder_forward)
    out = jax.block_until_ready(fwd(x, params))
    assert out.shape == (10, 64, 1, 1), out.shape

    ref = jax.block_until_ready(_reference_forward(x, params))
    # Tolerance accounts for bf16 inputs/weights/activations (accumulation stays f32).
    assert jnp.allclose(out, ref, rtol=5e-2, atol=5e-2), float(jnp.max(jnp.abs(out - ref)))

    print("KERNEL_OK")
</pallas_src>

<mosaic_0001>
module attributes {stable_mosaic.version = 11 : i64} {
  func.func @kernel(%arg0: i32, %arg1: memref<288x256xbf16, #tpu.memory_space<vmem>>, %arg2: memref<256x256xbf16, #tpu.memory_space<vmem>>, %arg3: memref<1x256xf32, #tpu.memory_space<vmem>>, %arg4: memref<256x128xbf16, #tpu.memory_space<vmem>>, %arg5: memref<1x128xf32, #tpu.memory_space<vmem>>, %arg6: memref<128x16xbf16, #tpu.memory_space<vmem>>, %arg7: memref<1x16xf32, #tpu.memory_space<vmem>>, %arg8: memref<576x128xbf16, #tpu.memory_space<vmem>>, %arg9: memref<1x128xf32, #tpu.memory_space<vmem>>, %arg10: memref<128x64xbf16, #tpu.memory_space<vmem>>, %arg11: memref<1x64xf32, #tpu.memory_space<vmem>>, %arg12: memref<8x64xf32, #tpu.memory_space<vmem>>, %arg13: memref<8x576xf32, #tpu.memory_space<vmem>>) attributes {dimension_semantics = [#tpu.dimension_semantics<parallel>], iteration_bounds = array<i64: 2>, scalar_prefetch = 0 : i64, scratch_operands = 1 : i64, tpu.core_type = #tpu.core_type<tc>, window_params = [{transform_indices = @transform_0, window_bounds = array<i64: 288, 256>}, {pipeline_mode = #tpu.pipeline_mode<synchronous>, transform_indices = @transform_1, window_bounds = array<i64: 256, 256>}, {pipeline_mode = #tpu.pipeline_mode<synchronous>, transform_indices = @transform_2, window_bounds = array<i64: 1, 256>}, {pipeline_mode = #tpu.pipeline_mode<synchronous>, transform_indices = @transform_3, window_bounds = array<i64: 256, 128>}, {pipeline_mode = #tpu.pipeline_mode<synchronous>, transform_indices = @transform_4, window_bounds = array<i64: 1, 128>}, {pipeline_mode = #tpu.pipeline_mode<synchronous>, transform_indices = @transform_5, window_bounds = array<i64: 128, 16>}, {pipeline_mode = #tpu.pipeline_mode<synchronous>, transform_indices = @transform_6, window_bounds = array<i64: 1, 16>}, {pipeline_mode = #tpu.pipeline_mode<synchronous>, transform_indices = @transform_7, window_bounds = array<i64: 576, 128>}, {pipeline_mode = #tpu.pipeline_mode<synchronous>, transform_indices = @transform_8, window_bounds = array<i64: 1, 128>}, {pipeline_mode = #tpu.pipeline_mode<synchronous>, transform_indices = @transform_9, window_bounds = array<i64: 128, 64>}, {pipeline_mode = #tpu.pipeline_mode<synchronous>, transform_indices = @transform_10, window_bounds = array<i64: 1, 64>}, {transform_indices = @transform_11, window_bounds = array<i64: 8, 64>}]} {
    %c0 = arith.constant 0 : index
    %c0_0 = arith.constant 0 : index
    %0 = vector.load %arg1[%c0, %c0_0] : memref<288x256xbf16, #tpu.memory_space<vmem>>, vector<288x256xbf16>
    %c0_1 = arith.constant 0 : index
    %c0_2 = arith.constant 0 : index
    %1 = vector.load %arg2[%c0_1, %c0_2] : memref<256x256xbf16, #tpu.memory_space<vmem>>, vector<256x256xbf16>
    %cst = arith.constant dense<0.000000e+00> : vector<288x256xf32>
    %2 = tpu.matmul %0, %1, %cst {dimension_numbers = #tpu.dot_dimension_numbers<[1], [0], [0], [1], [0, 0, 1, 1], [], []>} : vector<288x256xbf16>, vector<256x256xbf16>, vector<288x256xf32> -> vector<288x256xf32>
    %c0_3 = arith.constant 0 : index
    %c0_4 = arith.constant 0 : index
    %3 = vector.load %arg3[%c0_3, %c0_4] : memref<1x256xf32, #tpu.memory_space<vmem>>, vector<1x256xf32>
    %4 = vector.broadcast %3 : vector<1x256xf32> to vector<288x256xf32>
    %5 = arith.addf %2, %4 : vector<288x256xf32>
    %cst_5 = arith.constant 0.000000e+00 : f32
    %6 = vector.broadcast %cst_5 : f32 to vector<288x256xf32>
    %7 = arith.cmpf oge, %5, %6 : vector<288x256xf32>
    %cst_6 = arith.constant 0.00999999977 : f32
    %8 = vector.broadcast %cst_6 : f32 to vector<288x256xf32>
    %9 = arith.mulf %8, %5 : vector<288x256xf32>
    %10 = arith.select %7, %5, %9 : vector<288x256xi1>, vector<288x256xf32>
    %11 = arith.truncf %10 : vector<288x256xf32> to vector<288x256xbf16>
    %c0_7 = arith.constant 0 : index
    %c0_8 = arith.constant 0 : index
    %12 = vector.load %arg4[%c0_7, %c0_8] : memref<256x128xbf16, #tpu.memory_space<vmem>>, vector<256x128xbf16>
    %cst_9 = arith.constant dense<0.000000e+00> : vector<288x128xf32>
    %13 = tpu.matmul %11, %12, %cst_9 {dimension_numbers = #tpu.dot_dimension_numbers<[1], [0], [0], [1], [0, 0, 1, 1], [], []>} : vector<288x256xbf16>, vector<256x128xbf16>, vector<288x128xf32> -> vector<288x128xf32>
    %c0_10 = arith.constant 0 : index
    %c0_11 = arith.constant 0 : index
    %14 = vector.load %arg5[%c0_10, %c0_11] : memref<1x128xf32, #tpu.memory_space<vmem>>, vector<1x128xf32>
    %15 = vector.broadcast %14 : vector<1x128xf32> to vector<288x128xf32>
    %16 = arith.addf %13, %15 : vector<288x128xf32>
    %cst_12 = arith.constant 0.000000e+00 : f32
    %17 = vector.broadcast %cst_12 : f32 to vector<288x128xf32>
    %18 = arith.cmpf oge, %16, %17 : vector<288x128xf32>
    %cst_13 = arith.constant 0.00999999977 : f32
    %19 = vector.broadcast %cst_13 : f32 to vector<288x128xf32>
    %20 = arith.mulf %19, %16 : vector<288x128xf32>
    %21 = arith.select %18, %16, %20 : vector<288x128xi1>, vector<288x128xf32>
    %22 = arith.truncf %21 : vector<288x128xf32> to vector<288x128xbf16>
    %c0_14 = arith.constant 0 : index
    %c0_15 = arith.constant 0 : index
    %23 = vector.load %arg6[%c0_14, %c0_15] : memref<128x16xbf16, #tpu.memory_space<vmem>>, vector<128x16xbf16>
    %cst_16 = arith.constant dense<0.000000e+00> : vector<288x16xf32>
    %24 = tpu.matmul %22, %23, %cst_16 {dimension_numbers = #tpu.dot_dimension_numbers<[1], [0], [0], [1], [0, 0, 1, 1], [], []>} : vector<288x128xbf16>, vector<128x16xbf16>, vector<288x16xf32> -> vector<288x16xf32>
    %c0_17 = arith.constant 0 : index
    %c0_18 = arith.constant 0 : index
    %25 = vector.load %arg7[%c0_17, %c0_18] : memref<1x16xf32, #tpu.memory_space<vmem>>, vector<1x16xf32>
    %26 = vector.broadcast %25 : vector<1x16xf32> to vector<288x16xf32>
    %27 = arith.addf %24, %26 : vector<288x16xf32>
    %cst_19 = arith.constant 0.000000e+00 : f32
    %28 = vector.broadcast %cst_19 : f32 to vector<288x16xf32>
    %29 = arith.cmpf oge, %27, %28 : vector<288x16xf32>
    %cst_20 = arith.constant 0.00999999977 : f32
    %30 = vector.broadcast %cst_20 : f32 to vector<288x16xf32>
    %31 = arith.mulf %30, %27 : vector<288x16xf32>
    %32 = arith.select %29, %27, %31 : vector<288x16xi1>, vector<288x16xf32>
    %33 = vector.extract_strided_slice %32 {offsets = [0, 0], sizes = [8, 16], strides = [1, 1]} : vector<288x16xf32> to vector<8x16xf32>
    %c0_21 = arith.constant 0 : index
    %c0_22 = arith.constant 0 : index
    %34 = vector.load %arg13[%c0_21, %c0_22] : memref<8x576xf32, #tpu.memory_space<vmem>>, vector<8x16xf32>
    tpu.vector_store %arg13[%c0_21, %c0_22], %33 {strides = array<i32>} : memref<8x576xf32, #tpu.memory_space<vmem>>, vector<8x16xf32>,
    %35 = vector.extract_strided_slice %32 {offsets = [8, 0], sizes = [8, 16], strides = [1, 1]} : vector<288x16xf32> to vector<8x16xf32>
    %c0_23 = arith.constant 0 : index
    %c16 = arith.constant 16 : index
    %36 = vector.load %arg13[%c0_23, %c16] : memref<8x576xf32, #tpu.memory_space<vmem>>, vector<8x16xf32>
    tpu.vector_store %arg13[%c0_23, %c16], %35 {strides = array<i32>} : memref<8x576xf32, #tpu.memory_space<vmem>>, vector<8x16xf32>,
    %37 = vector.extract_strided_slice %32 {offsets = [16, 0], sizes = [8, 16], strides = [1, 1]} : vector<288x16xf32> to vector<8x16xf32>
    %c0_24 = arith.constant 0 : index
    %c32 = arith.constant 32 : index
    %38 = vector.load %arg13[%c0_24, %c32] : memref<8x576xf32, #tpu.memory_space<vmem>>, vector<8x16xf32>
    tpu.vector_store %arg13[%c0_24, %c32], %37 {strides = array<i32>} : memref<8x576xf32, #tpu.memory_space<vmem>>, vector<8x16xf32>,
    %39 = vector.extract_strided_slice %32 {offsets = [24, 0], sizes = [8, 16], strides = [1, 1]} : vector<288x16xf32> to vector<8x16xf32>
    %c0_25 = arith.constant 0 : index
    %c48 = arith.constant 48 : index
    %40 = vector.load %arg13[%c0_25, %c48] : memref<8x576xf32, #tpu.memory_space<vmem>>, vector<8x16xf32>
    tpu.vector_store %arg13[%c0_25, %c48], %39 {strides = array<i32>} : memref<8x576xf32, #tpu.memory_space<vmem>>, vector<8x16xf32>,
    %41 = vector.extract_strided_slice %32 {offsets = [32, 0], sizes = [8, 16], strides = [1, 1]} : vector<288x16xf32> to vector<8x16xf32>
    %c0_26 = arith.constant 0 : index
    %c64 = arith.constant 64 : index
    %42 = vector.load %arg13[%c0_26, %c64] : memref<8x576xf32, #tpu.memory_space<vmem>>, vector<8x16xf32>
    tpu.vector_store %arg13[%c0_26, %c64], %41 {strides = array<i32>} : memref<8x576xf32, #tpu.memory_space<vmem>>, vector<8x16xf32>,
    %43 = vector.extract_strided_slice %32 {offsets = [40, 0], sizes = [8, 16], strides = [1, 1]} : vector<288x16xf32> to vector<8x16xf32>
    %c0_27 = arith.constant 0 : index
    %c80 = arith.constant 80 : index
    %44 = vector.load %arg13[%c0_27, %c80] : memref<8x576xf32, #tpu.memory_space<vmem>>, vector<8x16xf32>
    tpu.vector_store %arg13[%c0_27, %c80], %43 {strides = array<i32>} : memref<8x576xf32, #tpu.memory_space<vmem>>, vector<8x16xf32>,
    %45 = vector.extract_strided_slice %32 {offsets = [48, 0], sizes = [8, 16], strides = [1, 1]} : vector<288x16xf32> to vector<8x16xf32>
    %c0_28 = arith.constant 0 : index
    %c96 = arith.constant 96 : index
    %46 = vector.load %arg13[%c0_28, %c96] : memref<8x576xf32, #tpu.memory_space<vmem>>, vector<8x16xf32>
    tpu.vector_store %arg13[%c0_28, %c96], %45 {strides = array<i32>} : memref<8x576xf32, #tpu.memory_space<vmem>>, vector<8x16xf32>,
    %47 = vector.extract_strided_slice %32 {offsets = [56, 0], sizes = [8, 16], strides = [1, 1]} : vector<288x16xf32> to vector<8x16xf32>
    %c0_29 = arith.constant 0 : index
    %c112 = arith.constant 112 : index
    %48 = vector.load %arg13[%c0_29, %c112] : memref<8x576xf32, #tpu.memory_space<vmem>>, vector<8x16xf32>
    tpu.vector_store %arg13[%c0_29, %c112], %47 {strides = array<i32>} : memref<8x576xf32, #tpu.memory_space<vmem>>, vector<8x16xf32>,
    %49 = vector.extract_strided_slice %32 {offsets = [64, 0], sizes = [8, 16], strides = [1, 1]} : vector<288x16xf32> to vector<8x16xf32>
    %c0_30 = arith.constant 0 : index
    %c128 = arith.constant 128 : index
    %50 = vector.load %arg13[%c0_30, %c128] : memref<8x576xf32, #tpu.memory_space<vmem>>, vector<8x16xf32>
    tpu.vector_store %arg13[%c0_30, %c128], %49 {strides = array<i32>} : memref<8x576xf32, #tpu.memory_space<vmem>>, vector<8x16xf32>,
    %51 = vector.extract_strided_slice %32 {offsets = [72, 0], sizes = [8, 16], strides = [1, 1]} : vector<288x16xf32> to vector<8x16xf32>
    %c0_31 = arith.constant 0 : index
    %c144 = arith.constant 144 : index
    %52 = vector.load %arg13[%c0_31, %c144] : memref<8x576xf32, #tpu.memory_space<vmem>>, vector<8x16xf32>
    tpu.vector_store %arg13[%c0_31, %c144], %51 {strides = array<i32>} : memref<8x576xf32, #tpu.memory_space<vmem>>, vector<8x16xf32>,
    %53 = vector.extract_strided_slice %32 {offsets = [80, 0], sizes = [8, 16], strides = [1, 1]} : vector<288x16xf32> to vector<8x16xf32>
    %c0_32 = arith.constant 0 : index
    %c160 = arith.constant 160 : index
    %54 = vector.load %arg13[%c0_32, %c160] : memref<8x576xf32, #tpu.memory_space<vmem>>, vector<8x16xf32>
    tpu.vector_store %arg13[%c0_32, %c160], %53 {strides = array<i32>} : memref<8x576xf32, #tpu.memory_space<vmem>>, vector<8x16xf32>,
    %55 = vector.extract_strided_slice %32 {offsets = [88, 0], sizes = [8, 16], strides = [1, 1]} : vector<288x16xf32> to vector<8x16xf32>
    %c0_33 = arith.constant 0 : index
    %c176 = arith.constant 176 : index
    %56 = vector.load %arg13[%c0_33, %c176] : memref<8x576xf32, #tpu.memory_space<vmem>>, vector<8x16xf32>
    tpu.vector_store %arg13[%c0_33, %c176], %55 {strides = array<i32>} : memref<8x576xf32, #tpu.memory_space<vmem>>, vector<8x16xf32>,
    %57 = vector.extract_strided_slice %32 {offsets = [96, 0], sizes = [8, 16], strides = [1, 1]} : vector<288x16xf32> to vector<8x16xf32>
    %c0_34 = arith.constant 0 : index
    %c192 = arith.constant 192 : index
    %58 = vector.load %arg13[%c0_34, %c192] : memref<8x576xf32, #tpu.memory_space<vmem>>, vector<8x16xf32>
    tpu.vector_store %arg13[%c0_34, %c192], %57 {strides = array<i32>} : memref<8x576xf32, #tpu.memory_space<vmem>>, vector<8x16xf32>,
    %59 = vector.extract_strided_slice %32 {offsets = [104, 0], sizes = [8, 16], strides = [1, 1]} : vector<288x16xf32> to vector<8x16xf32>
    %c0_35 = arith.constant 0 : index
    %c208 = arith.constant 208 : index
    %60 = vector.load %arg13[%c0_35, %c208] : memref<8x576xf32, #tpu.memory_space<vmem>>, vector<8x16xf32>
    tpu.vector_store %arg13[%c0_35, %c208], %59 {strides = array<i32>} : memref<8x576xf32, #tpu.memory_space<vmem>>, vector<8x16xf32>,
    %61 = vector.extract_strided_slice %32 {offsets = [112, 0], sizes = [8, 16], strides = [1, 1]} : vector<288x16xf32> to vector<8x16xf32>
    %c0_36 = arith.constant 0 : index
    %c224 = arith.constant 224 : index
    %62 = vector.load %arg13[%c0_36, %c224] : memref<8x576xf32, #tpu.memory_space<vmem>>, vector<8x16xf32>
    tpu.vector_store %arg13[%c0_36, %c224], %61 {strides = array<i32>} : memref<8x576xf32, #tpu.memory_space<vmem>>, vector<8x16xf32>,
    %63 = vector.extract_strided_slice %32 {offsets = [120, 0], sizes = [8, 16], strides = [1, 1]} : vector<288x16xf32> to vector<8x16xf32>
    %c0_37 = arith.constant 0 : index
    %c240 = arith.constant 240 : index
    %64 = vector.load %arg13[%c0_37, %c240] : memref<8x576xf32, #tpu.memory_space<vmem>>, vector<8x16xf32>
    tpu.vector_store %arg13[%c0_37, %c240], %63 {strides = array<i32>} : memref<8x576xf32, #tpu.memory_space<vmem>>, vector<8x16xf32>,
    %65 = vector.extract_strided_slice %32 {offsets = [128, 0], sizes = [8, 16], strides = [1, 1]} : vector<288x16xf32> to vector<8x16xf32>
    %c0_38 = arith.constant 0 : index
    %c256 = arith.constant 256 : index
    %66 = vector.load %arg13[%c0_38, %c256] : memref<8x576xf32, #tpu.memory_space<vmem>>, vector<8x16xf32>
    tpu.vector_store %arg13[%c0_38, %c256], %65 {strides = array<i32>} : memref<8x576xf32, #tpu.memory_space<vmem>>, vector<8x16xf32>,
    %67 = vector.extract_strided_slice %32 {offsets = [136, 0], sizes = [8, 16], strides = [1, 1]} : vector<288x16xf32> to vector<8x16xf32>
    %c0_39 = arith.constant 0 : index
    %c272 = arith.constant 272 : index
    %68 = vector.load %arg13[%c0_39, %c272] : memref<8x576xf32, #tpu.memory_space<vmem>>, vector<8x16xf32>
    tpu.vector_store %arg13[%c0_39, %c272], %67 {strides = array<i32>} : memref<8x576xf32, #tpu.memory_space<vmem>>, vector<8x16xf32>,
    %69 = vector.extract_strided_slice %32 {offsets = [144, 0], sizes = [8, 16], strides = [1, 1]} : vector<288x16xf32> to vector<8x16xf32>
    %c0_40 = arith.constant 0 : index
    %c288 = arith.constant 288 : index
    %70 = vector.load %arg13[%c0_40, %c288] : memref<8x576xf32, #tpu.memory_space<vmem>>, vector<8x16xf32>
    tpu.vector_store %arg13[%c0_40, %c288], %69 {strides = array<i32>} : memref<8x576xf32, #tpu.memory_space<vmem>>, vector<8x16xf32>,
    %71 = vector.extract_strided_slice %32 {offsets = [152, 0], sizes = [8, 16], strides = [1, 1]} : vector<288x16xf32> to vector<8x16xf32>
    %c0_41 = arith.constant 0 : index
    %c304 = arith.constant 304 : index
    %72 = vector.load %arg13[%c0_41, %c304] : memref<8x576xf32, #tpu.memory_space<vmem>>, vector<8x16xf32>
    tpu.vector_store %arg13[%c0_41, %c304], %71 {strides = array<i32>} : memref<8x576xf32, #tpu.memory_space<vmem>>, vector<8x16xf32>,
    %73 = vector.extract_strided_slice %32 {offsets = [160, 0], sizes = [8, 16], strides = [1, 1]} : vector<288x16xf32> to vector<8x16xf32>
    %c0_42 = arith.constant 0 : index
    %c320 = arith.constant 320 : index
    %74 = vector.load %arg13[%c0_42, %c320] : memref<8x576xf32, #tpu.memory_space<vmem>>, vector<8x16xf32>
    tpu.vector_store %arg13[%c0_42, %c320], %73 {strides = array<i32>} : memref<8x576xf32, #tpu.memory_space<vmem>>, vector<8x16xf32>,
    %75 = vector.extract_strided_slice %32 {offsets = [168, 0], sizes = [8, 16], strides = [1, 1]} : vector<288x16xf32> to vector<8x16xf32>
    %c0_43 = arith.constant 0 : index
    %c336 = arith.constant 336 : index
    %76 = vector.load %arg13[%c0_43, %c336] : memref<8x576xf32, #tpu.memory_space<vmem>>, vector<8x16xf32>
    tpu.vector_store %arg13[%c0_43, %c336], %75 {strides = array<i32>} : memref<8x576xf32, #tpu.memory_space<vmem>>, vector<8x16xf32>,
    %77 = vector.extract_strided_slice %32 {offsets = [176, 0], sizes = [8, 16], strides = [1, 1]} : vector<288x16xf32> to vector<8x16xf32>
    %c0_44 = arith.constant 0 : index
    %c352 = arith.constant 352 : index
    %78 = vector.load %arg13[%c0_44, %c352] : memref<8x576xf32, #tpu.memory_space<vmem>>, vector<8x16xf32>
    tpu.vector_store %arg13[%c0_44, %c352], %77 {strides = array<i32>} : memref<8x576xf32, #tpu.memory_space<vmem>>, vector<8x16xf32>,
    %79 = vector.extract_strided_slice %32 {offsets = [184, 0], sizes = [8, 16], strides = [1, 1]} : vector<288x16xf32> to vector<8x16xf32>
    %c0_45 = arith.constant 0 : index
    %c368 = arith.constant 368 : index
    %80 = vector.load %arg13[%c0_45, %c368] : memref<8x576xf32, #tpu.memory_space<vmem>>, vector<8x16xf32>
    tpu.vector_store %arg13[%c0_45, %c368], %79 {strides = array<i32>} : memref<8x576xf32, #tpu.memory_space<vmem>>, vector<8x16xf32>,
    %81 = vector.extract_strided_slice %32 {offsets = [192, 0], sizes = [8, 16], strides = [1, 1]} : vector<288x16xf32> to vector<8x16xf32>
    %c0_46 = arith.constant 0 : index
    %c384 = arith.constant 384 : index
    %82 = vector.load %arg13[%c0_46, %c384] : memref<8x576xf32, #tpu.memory_space<vmem>>, vector<8x16xf32>
    tpu.vector_store %arg13[%c0_46, %c384], %81 {strides = array<i32>} : memref<8x576xf32, #tpu.memory_space<vmem>>, vector<8x16xf32>,
    %83 = vector.extract_strided_slice %32 {offsets = [200, 0], sizes = [8, 16], strides = [1, 1]} : vector<288x16xf32> to vector<8x16xf32>
    %c0_47 = arith.constant 0 : index
    %c400 = arith.constant 400 : index
    %84 = vector.load %arg13[%c0_47, %c400] : memref<8x576xf32, #tpu.memory_space<vmem>>, vector<8x16xf32>
    tpu.vector_store %arg13[%c0_47, %c400], %83 {strides = array<i32>} : memref<8x576xf32, #tpu.memory_space<vmem>>, vector<8x16xf32>,
    %85 = vector.extract_strided_slice %32 {offsets = [208, 0], sizes = [8, 16], strides = [1, 1]} : vector<288x16xf32> to vector<8x16xf32>
    %c0_48 = arith.constant 0 : index
    %c416 = arith.constant 416 : index
    %86 = vector.load %arg13[%c0_48, %c416] : memref<8x576xf32, #tpu.memory_space<vmem>>, vector<8x16xf32>
    tpu.vector_store %arg13[%c0_48, %c416], %85 {strides = array<i32>} : memref<8x576xf32, #tpu.memory_space<vmem>>, vector<8x16xf32>,
    %87 = vector.extract_strided_slice %32 {offsets = [216, 0], sizes = [8, 16], strides = [1, 1]} : vector<288x16xf32> to vector<8x16xf32>
    %c0_49 = arith.constant 0 : index
    %c432 = arith.constant 432 : index
    %88 = vector.load %arg13[%c0_49, %c432] : memref<8x576xf32, #tpu.memory_space<vmem>>, vector<8x16xf32>
    tpu.vector_store %arg13[%c0_49, %c432], %87 {strides = array<i32>} : memref<8x576xf32, #tpu.memory_space<vmem>>, vector<8x16xf32>,
    %89 = vector.extract_strided_slice %32 {offsets = [224, 0], sizes = [8, 16], strides = [1, 1]} : vector<288x16xf32> to vector<8x16xf32>
    %c0_50 = arith.constant 0 : index
    %c448 = arith.constant 448 : index
    %90 = vector.load %arg13[%c0_50, %c448] : memref<8x576xf32, #tpu.memory_space<vmem>>, vector<8x16xf32>
    tpu.vector_store %arg13[%c0_50, %c448], %89 {strides = array<i32>} : memref<8x576xf32, #tpu.memory_space<vmem>>, vector<8x16xf32>,
    %91 = vector.extract_strided_slice %32 {offsets = [232, 0], sizes = [8, 16], strides = [1, 1]} : vector<288x16xf32> to vector<8x16xf32>
    %c0_51 = arith.constant 0 : index
    %c464 = arith.constant 464 : index
    %92 = vector.load %arg13[%c0_51, %c464] : memref<8x576xf32, #tpu.memory_space<vmem>>, vector<8x16xf32>
    tpu.vector_store %arg13[%c0_51, %c464], %91 {strides = array<i32>} : memref<8x576xf32, #tpu.memory_space<vmem>>, vector<8x16xf32>,
    %93 = vector.extract_strided_slice %32 {offsets = [240, 0], sizes = [8, 16], strides = [1, 1]} : vector<288x16xf32> to vector<8x16xf32>
    %c0_52 = arith.constant 0 : index
    %c480 = arith.constant 480 : index
    %94 = vector.load %arg13[%c0_52, %c480] : memref<8x576xf32, #tpu.memory_space<vmem>>, vector<8x16xf32>
    tpu.vector_store %arg13[%c0_52, %c480], %93 {strides = array<i32>} : memref<8x576xf32, #tpu.memory_space<vmem>>, vector<8x16xf32>,
    %95 = vector.extract_strided_slice %32 {offsets = [248, 0], sizes = [8, 16], strides = [1, 1]} : vector<288x16xf32> to vector<8x16xf32>
    %c0_53 = arith.constant 0 : index
    %c496 = arith.constant 496 : index
    %96 = vector.load %arg13[%c0_53, %c496] : memref<8x576xf32, #tpu.memory_space<vmem>>, vector<8x16xf32>
    tpu.vector_store %arg13[%c0_53, %c496], %95 {strides = array<i32>} : memref<8x576xf32, #tpu.memory_space<vmem>>, vector<8x16xf32>,
    %97 = vector.extract_strided_slice %32 {offsets = [256, 0], sizes = [8, 16], strides = [1, 1]} : vector<288x16xf32> to vector<8x16xf32>
    %c0_54 = arith.constant 0 : index
    %c512 = arith.constant 512 : index
    %98 = vector.load %arg13[%c0_54, %c512] : memref<8x576xf32, #tpu.memory_space<vmem>>, vector<8x16xf32>
    tpu.vector_store %arg13[%c0_54, %c512], %97 {strides = array<i32>} : memref<8x576xf32, #tpu.memory_space<vmem>>, vector<8x16xf32>,
    %99 = vector.extract_strided_slice %32 {offsets = [264, 0], sizes = [8, 16], strides = [1, 1]} : vector<288x16xf32> to vector<8x16xf32>
    %c0_55 = arith.constant 0 : index
    %c528 = arith.constant 528 : index
    %100 = vector.load %arg13[%c0_55, %c528] : memref<8x576xf32, #tpu.memory_space<vmem>>, vector<8x16xf32>
    tpu.vector_store %arg13[%c0_55, %c528], %99 {strides = array<i32>} : memref<8x576xf32, #tpu.memory_space<vmem>>, vector<8x16xf32>,
    %101 = vector.extract_strided_slice %32 {offsets = [272, 0], sizes = [8, 16], strides = [1, 1]} : vector<288x16xf32> to vector<8x16xf32>
    %c0_56 = arith.constant 0 : index
    %c544 = arith.constant 544 : index
    %102 = vector.load %arg13[%c0_56, %c544] : memref<8x576xf32, #tpu.memory_space<vmem>>, vector<8x16xf32>
    tpu.vector_store %arg13[%c0_56, %c544], %101 {strides = array<i32>} : memref<8x576xf32, #tpu.memory_space<vmem>>, vector<8x16xf32>,
    %103 = vector.extract_strided_slice %32 {offsets = [280, 0], sizes = [8, 16], strides = [1, 1]} : vector<288x16xf32> to vector<8x16xf32>
    %c0_57 = arith.constant 0 : index
    %c560 = arith.constant 560 : index
    %104 = vector.load %arg13[%c0_57, %c560] : memref<8x576xf32, #tpu.memory_space<vmem>>, vector<8x16xf32>
    tpu.vector_store %arg13[%c0_57, %c560], %103 {strides = array<i32>} : memref<8x576xf32, #tpu.memory_space<vmem>>, vector<8x16xf32>,
    %c0_58 = arith.constant 0 : index
    %c0_59 = arith.constant 0 : index
    %105 = vector.load %arg13[%c0_58, %c0_59] : memref<8x576xf32, #tpu.memory_space<vmem>>, vector<8x576xf32>
    %106 = arith.truncf %105 : vector<8x576xf32> to vector<8x576xbf16>
    %c0_60 = arith.constant 0 : index
    %c0_61 = arith.constant 0 : index
    %107 = vector.load %arg8[%c0_60, %c0_61] : memref<576x128xbf16, #tpu.memory_space<vmem>>, vector<576x128xbf16>
    %cst_62 = arith.constant dense<0.000000e+00> : vector<8x128xf32>
    %108 = tpu.matmul %106, %107, %cst_62 {dimension_numbers = #tpu.dot_dimension_numbers<[1], [0], [0], [1], [0, 0, 1, 1], [], []>} : vector<8x576xbf16>, vector<576x128xbf16>, vector<8x128xf32> -> vector<8x128xf32>
    %c0_63 = arith.constant 0 : index
    %c0_64 = arith.constant 0 : index
    %109 = vector.load %arg9[%c0_63, %c0_64] : memref<1x128xf32, #tpu.memory_space<vmem>>, vector<1x128xf32>
    %110 = vector.broadcast %109 : vector<1x128xf32> to vector<8x128xf32>
    %111 = arith.addf %108, %110 : vector<8x128xf32>
    %cst_65 = arith.constant 0.000000e+00 : f32
    %112 = vector.broadcast %cst_65 : f32 to vector<8x128xf32>
    %113 = arith.cmpf oge, %111, %112 : vector<8x128xf32>
    %cst_66 = arith.constant 0.00999999977 : f32
    %114 = vector.broadcast %cst_66 : f32 to vector<8x128xf32>
    %115 = arith.mulf %114, %111 : vector<8x128xf32>
    %116 = arith.select %113, %111, %115 : vector<8x128xi1>, vector<8x128xf32>
    %117 = arith.truncf %116 : vector<8x128xf32> to vector<8x128xbf16>
    %c0_67 = arith.constant 0 : index
    %c0_68 = arith.constant 0 : index
    %118 = vector.load %arg10[%c0_67, %c0_68] : memref<128x64xbf16, #tpu.memory_space<vmem>>, vector<128x64xbf16>
    %cst_69 = arith.constant dense<0.000000e+00> : vector<8x64xf32>
    %119 = tpu.matmul %117, %118, %cst_69 {dimension_numbers = #tpu.dot_dimension_numbers<[1], [0], [0], [1], [0, 0, 1, 1], [], []>} : vector<8x128xbf16>, vector<128x64xbf16>, vector<8x64xf32> -> vector<8x64xf32>
    %c0_70 = arith.constant 0 : index
    %c0_71 = arith.constant 0 : index
    %120 = vector.load %arg11[%c0_70, %c0_71] : memref<1x64xf32, #tpu.memory_space<vmem>>, vector<1x64xf32>
    %121 = vector.broadcast %120 : vector<1x64xf32> to vector<8x64xf32>
    %122 = arith.addf %119, %121 : vector<8x64xf32>
    %c0_72 = arith.constant 0 : index
    %c0_73 = arith.constant 0 : index
    %123 = vector.load %arg12[%c0_72, %c0_73] : memref<8x64xf32, #tpu.memory_space<vmem>>, vector<8x64xf32>
    tpu.vector_store %arg12[%c0_72, %c0_73], %122 {strides = array<i32>} : memref<8x64xf32, #tpu.memory_space<vmem>>, vector<8x64xf32>,
    return
  }
  func.func @transform_0(%arg0: i32) -> (i32, i32) {
    %c0_i32 = arith.constant 0 : i32
    %c0_i32_0 = arith.constant 0 : i32
    return %arg0, %c0_i32 : i32, i32
  }
  func.func @transform_1(%arg0: i32) -> (i32, i32) {
    %c0_i32 = arith.constant 0 : i32
    %c0_i32_0 = arith.constant 0 : i32
    %c0_i32_1 = arith.constant 0 : i32
    return %c0_i32, %c0_i32_0 : i32, i32
  }
  func.func @transform_2(%arg0: i32) -> (i32, i32) {
    %c0_i32 = arith.constant 0 : i32
    %c0_i32_0 = arith.constant 0 : i32
    %c0_i32_1 = arith.constant 0 : i32
    return %c0_i32, %c0_i32_0 : i32, i32
  }
  func.func @transform_3(%arg0: i32) -> (i32, i32) {
    %c0_i32 = arith.constant 0 : i32
    %c0_i32_0 = arith.constant 0 : i32
    %c0_i32_1 = arith.constant 0 : i32
    return %c0_i32, %c0_i32_0 : i32, i32
  }
  func.func @transform_4(%arg0: i32) -> (i32, i32) {
    %c0_i32 = arith.constant 0 : i32
    %c0_i32_0 = arith.constant 0 : i32
    %c0_i32_1 = arith.constant 0 : i32
    return %c0_i32, %c0_i32_0 : i32, i32
  }
  func.func @transform_5(%arg0: i32) -> (i32, i32) {
    %c0_i32 = arith.constant 0 : i32
    %c0_i32_0 = arith.constant 0 : i32
    %c0_i32_1 = arith.constant 0 : i32
    return %c0_i32, %c0_i32_0 : i32, i32
  }
  func.func @transform_6(%arg0: i32) -> (i32, i32) {
    %c0_i32 = arith.constant 0 : i32
    %c0_i32_0 = arith.constant 0 : i32
    %c0_i32_1 = arith.constant 0 : i32
    return %c0_i32, %c0_i32_0 : i32, i32
  }
  func.func @transform_7(%arg0: i32) -> (i32, i32) {
    %c0_i32 = arith.constant 0 : i32
    %c0_i32_0 = arith.constant 0 : i32
    %c0_i32_1 = arith.constant 0 : i32
    return %c0_i32, %c0_i32_0 : i32, i32
  }
  func.func @transform_8(%arg0: i32) -> (i32, i32) {
    %c0_i32 = arith.constant 0 : i32
    %c0_i32_0 = arith.constant 0 : i32
    %c0_i32_1 = arith.constant 0 : i32
    return %c0_i32, %c0_i32_0 : i32, i32
  }
  func.func @transform_9(%arg0: i32) -> (i32, i32) {
    %c0_i32 = arith.constant 0 : i32
    %c0_i32_0 = arith.constant 0 : i32
    %c0_i32_1 = arith.constant 0 : i32
    return %c0_i32, %c0_i32_0 : i32, i32
  }
  func.func @transform_10(%arg0: i32) -> (i32, i32) {
    %c0_i32 = arith.constant 0 : i32
    %c0_i32_0 = arith.constant 0 : i32
    %c0_i32_1 = arith.constant 0 : i32
    return %c0_i32, %c0_i32_0 : i32, i32
  }
  func.func @transform_11(%arg0: i32) -> (i32, i32) {
    %c0_i32 = arith.constant 0 : i32
    %c0_i32_0 = arith.constant 0 : i32
    return %arg0, %c0_i32 : i32, i32
  }
}

</mosaic_0001>

<llo_original>
// kernel: tile.18
$region0: #{tile.18}
  #allocation0 [shape = 's32[1]{0}', space=sflag, size = 0x4, scoped, tag = 'scoped memory for tile.18']
  %s0 = inlined_call_operand.vmem [shape: f32[4], index: 0, kind: input, shape index: {}]
  %s1 = inlined_call_operand.vmem [shape: f32[64,4], index: 1, kind: output, shape index: {}]
  // Predicated region
  $region2: #{tile.18} parent=0 // pred_check
    _
  $region3: #{tile.18} parent=0 // pred_check_branch
    %3 = sbr.rel (0) target = $region5
  $region4: #{tile.18} parent=0 // pred_region
    _
  $region5: #{tile.18} parent=0 // pred_fallthru
    _
  %v4 = vld [vmem:[%s0] ss:$0 sm:$0xff]
  %5 = vst [vmem:[%s1] sm:$0xff] %v4
  %s6 = scalar_lea.vmem %s1, 8
  %7 = vst [vmem:[%s6] sm:$0xff] %v4
  %s8 = scalar_lea.vmem %s1, 16
  %9 = vst [vmem:[%s8] sm:$0xff] %v4
  %s10 = scalar_lea.vmem %s1, 24
  %11 = vst [vmem:[%s10] sm:$0xff] %v4
  %s12 = scalar_lea.vmem %s1, 32
  %13 = vst [vmem:[%s12] sm:$0xff] %v4
  %s14 = scalar_lea.vmem %s1, 40
  %15 = vst [vmem:[%s14] sm:$0xff] %v4
  %s16 = scalar_lea.vmem %s1, 48
  %17 = vst [vmem:[%s16] sm:$0xff] %v4
  %s18 = scalar_lea.vmem %s1, 56
  %19 = vst [vmem:[%s18] sm:$0xff] %v4

// kernel: tile.19
$region0: #{tile.19}
  %s0 = inlined_call_operand.vmem [shape: f32[64,4], index: 0, kind: input, shape index: {}]
  %s1 = inlined_call_operand.vmem [shape: f32[1,256], index: 1, kind: output, shape index: {}]
  $region1: #{tile.19} parent=0
    #allocation0 [shape = 'u8[8192]{0}', space=vmem, size = 0x2000, scoped, tag = 'scoped mem for output reshape']
    %v2 = vld [vmem:[%s0] sm:$0x1]
    %s3 = scalar_lea.vmem %s0, 31
    %v4 = vld [vmem:[%s3] sm:$0x2]
    %vm5 = vcmask 1041409
    %v6 = vsel %vm5, %v4, %v2
    %vm7 = vcmask 31744
    %8 = vst.msk [vmem:[#allocation0] ss:$8 sm:$0x3] %vm7, %v6
    %s9 = scalar_lea.vmem %s0, 31
    %v10 = vld [vmem:[%s9] sm:$0x1]
    %s11 = scalar_lea.vmem %s0, 62
    %v12 = vld [vmem:[%s11] sm:$0x2]
    %vm13 = vcmask 1041409
    %v14 = vsel %vm13, %v12, %v10
    %15 = vrot.lane.b32.xlu0 %v14, 124
    %v16 = vpop.permute.xlu0 %15
    %vm17 = vcmask 1048544
    %18 = vst.msk [vmem:[#allocation0] ss:$8 sm:$0x3] %vm17, %v16
    %s19 = scalar_lea.vmem %s0, 30
    %v20 = vld [vmem:[%s19] sm:$0x1]
    %s21 = scalar_lea.vmem %s0, 61
    %v22 = vld [vmem:[%s21] sm:$0x2]
    %vm23 = vcmask 1041409
    %v24 = vsel %vm23, %v22, %v20
    %25 = vrot.lane.b32.xlu0 %v24, 120
    %v26 = vpop.permute.xlu0 %25
    %vm27 = vcmask 1015744
    %28 = vst.msk [vmem:[#allocation0] ss:$8 sm:$0x3] %vm27, %v26
    %s29 = scalar_lea.vmem %s0, 29
    %v30 = vld [vmem:[%s29] sm:$0x1]
    %s31 = scalar_lea.vmem %s0, 60
    %v32 = vld [vmem:[%s31] sm:$0x2]
    %vm33 = vcmask 1041409
    %v34 = vsel %vm33, %v32, %v30
    %35 = vrot.lane.b32.xlu0 %v34, 116
    %v36 = vpop.permute.xlu0 %35
    %vm37 = vcmask 982944
    %38 = vst.msk [vmem:[#allocation0] ss:$8 sm:$0x3] %vm37, %v36
    %s39 = scalar_lea.vmem %s0, 28
    %v40 = vld [vmem:[%s39] sm:$0x1]
    %s41 = scalar_lea.vmem %s0, 59
    %v42 = vld [vmem:[%s41] sm:$0x2]
    %vm43 = vcmask 1041409
    %v44 = vsel %vm43, %v42, %v40
    %45 = vrot.lane.b32.xlu0 %v44, 112
    %v46 = vpop.permute.xlu0 %45
    %vm47 = vcmask 950144
    %48 = vst.msk [vmem:[#allocation0] ss:$8 sm:$0x3] %vm47, %v46
    %s49 = scalar_lea.vmem %s0, 27
    %v50 = vld [vmem:[%s49] sm:$0x1]
    %s51 = scalar_lea.vmem %s0, 58
    %v52 = vld [vmem:[%s51] sm:$0x2]
    %vm53 = vcmask 1041409
    %v54 = vsel %vm53, %v52, %v50
    %55 = vrot.lane.b32.xlu0 %v54, 108
    %v56 = vpop.permute.xlu0 %55
    %vm57 = vcmask 917344
    %58 = vst.msk [vmem:[#allocation0] ss:$8 sm:$0x3] %vm57, %v56
    %s59 = scalar_lea.vmem %s0, 26
    %v60 = vld [vmem:[%s59] sm:$0x1]
    %s61 = scalar_lea.vmem %s0, 57
    %v62 = vld [vmem:[%s61] sm:$0x2]
    %vm63 = vcmask 1041409
    %v64 = vsel %vm63, %v62, %v60
    %65 = vrot.lane.b32.xlu0 %v64, 104
    %v66 = vpop.permute.xlu0 %65
    %vm67 = vcmask 884544
    %68 = vst.msk [vmem:[#allocation0] ss:$8 sm:$0x3] %vm67, %v66
    %s69 = scalar_lea.vmem %s0, 25
    %v70 = vld [vmem:[%s69] sm:$0x1]
    %s71 = scalar_lea.vmem %s0, 56
    %v72 = vld [vmem:[%s71] sm:$0x2]
    %vm73 = vcmask 1041409
    %v74 = vsel %vm73, %v72, %v70
    %75 = vrot.lane.b32.xlu0 %v74, 100
    %v76 = vpop.permute.xlu0 %75
    %vm77 = vcmask 851744
    %78 = vst.msk [vmem:[#allocation0] ss:$8 sm:$0x3] %vm77, %v76
    %s79 = scalar_lea.vmem %s0, 24
    %v80 = vld [vmem:[%s79] sm:$0x1]
    %s81 = scalar_lea.vmem %s0, 55
    %v82 = vld [vmem:[%s81] sm:$0x2]
    %vm83 = vcmask 1041409
    %v84 = vsel %vm83, %v82, %v80
    %85 = vrot.lane.b32.xlu0 %v84, 96
    %v86 = vpop.permute.xlu0 %85
    %vm87 = vcmask 818944
    %88 = vst.msk [vmem:[#allocation0] ss:$8 sm:$0x3] %vm87, %v86
    %s89 = scalar_lea.vmem %s0, 23
    %v90 = vld [vmem:[%s89] sm:$0x1]
    %s91 = scalar_lea.vmem %s0, 54
    %v92 = vld [vmem:[%s91] sm:$0x2]
    %vm93 = vcmask 1041409
    %v94 = vsel %vm93, %v92, %v90
    %95 = vrot.lane.b32.xlu0 %v94, 92
    %v96 = vpop.permute.xlu0 %95
    %vm97 = vcmask 786144
    %98 = vst.msk [vmem:[#allocation0] ss:$8 sm:$0x3] %vm97, %v96
    %s99 = scalar_lea.vmem %s0, 22
    %v100 = vld [vmem:[%s99] sm:$0x1]
    %s101 = scalar_lea.vmem %s0, 53
    %v102 = vld [vmem:[%s101] sm:$0x2]
    %vm103 = vcmask 1041409
    %v104 = vsel %vm103, %v102, %v100
    %105 = vrot.lane.b32.xlu0 %v104, 88
    %v106 = vpop.permute.xlu0 %105
    %vm107 = vcmask 753344
    %108 = vst.msk [vmem:[#allocation0] ss:$8 sm:$0x3] %vm107, %v106
    %s109 = scalar_lea.vmem %s0, 21
    %v110 = vld [vmem:[%s109] sm:$0x1]
    %s111 = scalar_lea.vmem %s0, 52
    %v112 = vld [vmem:[%s111] sm:$0x2]
    %vm113 = vcmask 1041409
    %v114 = vsel %vm113, %v112, %v110
    %115 = vrot.lane.b32.xlu0 %v114, 84
    %v116 = vpop.permute.xlu0 %115
    %vm117 = vcmask 720544
    %118 = vst.msk [vmem:[#allocation0] ss:$8 sm:$0x3] %vm117, %v116
    %s119 = scalar_lea.vmem %s0, 20
    %v120 = vld [vmem:[%s119] sm:$0x1]
    %s121 = scalar_lea.vmem %s0, 51
    %v122 = vld [vmem:[%s121] sm:$0x2]
    %vm123 = vcmask 1041409
    %v124 = vsel %vm123, %v122, %v120
    %125 = vrot.lane.b32.xlu0 %v124, 80
    %v126 = vpop.permute.xlu0 %125
    %vm127 = vcmask 687744
    %128 = vst.msk [vmem:[#allocation0] ss:$8 sm:$0x3] %vm127, %v126
    %s129 = scalar_lea.vmem %s0, 19
    %v130 = vld [vmem:[%s129] sm:$0x1]
    %s131 = scalar_lea.vmem %s0, 50
    %v132 = vld [vmem:[%s131] sm:$0x2]
    %vm133 = vcmask 1041409
    %v134 = vsel %vm133, %v132, %v130
    %135 = vrot.lane.b32.xlu0 %v134, 76
    %v136 = vpop.permute.xlu0 %135
    %vm137 = vcmask 654944
    %138 = vst.msk [vmem:[#allocation0] ss:$8 sm:$0x3] %vm137, %v136
    %s139 = scalar_lea.vmem %s0, 18
    %v140 = vld [vmem:[%s139] sm:$0x1]
    %s141 = scalar_lea.vmem %s0, 49
    %v142 = vld [vmem:[%s141] sm:$0x2]
    %vm143 = vcmask 1041409
    %v144 = vsel %vm143, %v142, %v140
    %145 = vrot.lane.b32.xlu0 %v144, 72
    %v146 = vpop.permute.xlu0 %145
    %vm147 = vcmask 622144
    %148 = vst.msk [vmem:[#allocation0] ss:$8 sm:$0x3] %vm147, %v146
    %s149 = scalar_lea.vmem %s0, 17
    %v150 = vld [vmem:[%s149] sm:$0x1]
    %s151 = scalar_lea.vmem %s0, 48
    %v152 = vld [vmem:[%s151] sm:$0x2]
    %vm153 = vcmask 1041409
    %v154 = vsel %vm153, %v152, %v150
    %155 = vrot.lane.b32.xlu0 %v154, 68
    %v156 = vpop.permute.xlu0 %155
    %vm157 = vcmask 589344
    %158 = vst.msk [vmem:[#allocation0] ss:$8 sm:$0x3] %vm157, %v156
    %s159 = scalar_lea.vmem %s0, 16
    %v160 = vld [vmem:[%s159] sm:$0x1]
    %s161 = scalar_lea.vmem %s0, 47
    %v162 = vld [vmem:[%s161] sm:$0x2]
    %vm163 = vcmask 1041409
    %v164 = vsel %vm163, %v162, %v160
    %165 = vrot.lane.b32.xlu0 %v164, 64
    %v166 = vpop.permute.xlu0 %165
    %vm167 = vcmask 556544
    %168 = vst.msk [vmem:[#allocation0] ss:$8 sm:$0x3] %vm167, %v166
    %s169 = scalar_lea.vmem %s0, 15
    %v170 = vld [vmem:[%s169] sm:$0x1]
    %s171 = scalar_lea.vmem %s0, 46
    %v172 = vld [vmem:[%s171] sm:$0x2]
    %vm173 = vcmask 1041409
    %v174 = vsel %vm173, %v172, %v170
    %175 = vrot.lane.b32.xlu0 %v174, 60
    %v176 = vpop.permute.xlu0 %175
    %vm177 = vcmask 523744
    %178 = vst.msk [vmem:[#allocation0] ss:$8 sm:$0x3] %vm177, %v176
    %s179 = scalar_lea.vmem %s0, 14
    %v180 = vld [vmem:[%s179] sm:$0x1]
    %s181 = scalar_lea.vmem %s0, 45
    %v182 = vld [vmem:[%s181] sm:$0x2]
    %vm183 = vcmask 1041409
    %v184 = vsel %vm183, %v182, %v180
    %185 = vrot.lane.b32.xlu0 %v184, 56
    %v186 = vpop.permute.xlu0 %185
    %vm187 = vcmask 490944
    %188 = vst.msk [vmem:[#allocation0] ss:$8 sm:$0x3] %vm187, %v186
    %s189 = scalar_lea.vmem %s0, 13
    %v190 = vld [vmem:[%s189] sm:$0x1]
    %s191 = scalar_lea.vmem %s0, 44
    %v192 = vld [vmem:[%s191] sm:$0x2]
    %vm193 = vcmask 1041409
    %v194 = vsel %vm193, %v192, %v190
    %195 = vrot.lane.b32.xlu0 %v194, 52
    %v196 = vpop.permute.xlu0 %195
    %vm197 = vcmask 458144
    %198 = vst.msk [vmem:[#allocation0] ss:$8 sm:$0x3] %vm197, %v196
    %s199 = scalar_lea.vmem %s0, 12
    %v200 = vld [vmem:[%s199] sm:$0x1]
    %s201 = scalar_lea.vmem %s0, 43
    %v202 = vld [vmem:[%s201] sm:$0x2]
    %vm203 = vcmask 1041409
    %v204 = vsel %vm203, %v202, %v200
    %205 = vrot.lane.b32.xlu0 %v204, 48
    %v206 = vpop.permute.xlu0 %205
    %vm207 = vcmask 425344
    %208 = vst.msk [vmem:[#allocation0] ss:$8 sm:$0x3] %vm207, %v206
    %s209 = scalar_lea.vmem %s0, 11
    %v210 = vld [vmem:[%s209] sm:$0x1]
    %s211 = scalar_lea.vmem %s0, 42
    %v212 = vld [vmem:[%s211] sm:$0x2]
    %vm213 = vcmask 1041409
    %v214 = vsel %vm213, %v212, %v210
    %215 = vrot.lane.b32.xlu0 %v214, 44
    %v216 = vpop.permute.xlu0 %215
    %vm217 = vcmask 392544
    %218 = vst.msk [vmem:[#allocation0] ss:$8 sm:$0x3] %vm217, %v216
    %s219 = scalar_lea.vmem %s0, 10
    %v220 = vld [vmem:[%s219] sm:$0x1]
    %s221 = scalar_lea.vmem %s0, 41
    %v222 = vld [vmem:[%s221] sm:$0x2]
    %vm223 = vcmask 1041409
    %v224 = vsel %vm223, %v222, %v220
    %225 = vrot.lane.b32.xlu0 %v224, 40
    %v226 = vpop.permute.xlu0 %225
    %vm227 = vcmask 359744
    %228 = vst.msk [vmem:[#allocation0] ss:$8 sm:$0x3] %vm227, %v226
    %s229 = scalar_lea.vmem %s0, 9
    %v230 = vld [vmem:[%s229] sm:$0x1]
    %s231 = scalar_lea.vmem %s0, 40
    %v232 = vld [vmem:[%s231] sm:$0x2]
    %vm233 = vcmask 1041409
    %v234 = vsel %vm233, %v232, %v230
    %235 = vrot.lane.b32.xlu0 %v234, 36
    %v236 = vpop.permute.xlu0 %235
    %vm237 = vcmask 326944
    %238 = vst.msk [vmem:[#allocation0] ss:$8 sm:$0x3] %vm237, %v236
    %s239 = scalar_lea.vmem %s0, 8
    %v240 = vld [vmem:[%s239] sm:$0x1]
    %s241 = scalar_lea.vmem %s0, 39
    %v242 = vld [vmem:[%s241] sm:$0x2]
    %vm243 = vcmask 1041409
    %v244 = vsel %vm243, %v242, %v240
    %245 = vrot.lane.b32.xlu0 %v244, 32
    %v246 = vpop.permute.xlu0 %245
    %vm247 = vcmask 294144
    %248 = vst.msk [vmem:[#allocation0] ss:$8 sm:$0x3] %vm247, %v246
    %s249 = scalar_lea.vmem %s0, 7
    %v250 = vld [vmem:[%s249] sm:$0x1]
    %s251 = scalar_lea.vmem %s0, 38
    %v252 = vld [vmem:[%s251] sm:$0x2]
    %vm253 = vcmask 1041409
    %v254 = vsel %vm253, %v252, %v250
    %255 = vrot.lane.b32.xlu0 %v254, 28
    %v256 = vpop.permute.xlu0 %255
    %vm257 = vcmask 261344
    %258 = vst.msk [vmem:[#allocation0] ss:$8 sm:$0x3] %vm257, %v256
    %s259 = scalar_lea.vmem %s0, 6
    %v260 = vld [vmem:[%s259] sm:$0x1]
    %s261 = scalar_lea.vmem %s0, 37
    %v262 = vld [vmem:[%s261] sm:$0x2]
    %vm263 = vcmask 1041409
    %v264 = vsel %vm263, %v262, %v260
    %265 = vrot.lane.b32.xlu0 %v264, 24
    %v266 = vpop.permute.xlu0 %265
    %vm267 = vcmask 228544
    %268 = vst.msk [vmem:[#allocation0] ss:$8 sm:$0x3] %vm267, %v266
    %s269 = scalar_lea.vmem %s0, 5
    %v270 = vld [vmem:[%s269] sm:$0x1]
    %s271 = scalar_lea.vmem %s0, 36
    %v272 = vld [vmem:[%s271] sm:$0x2]
    %vm273 = vcmask 1041409
    %v274 = vsel %vm273, %v272, %v270
    %275 = vrot.lane.b32.xlu0 %v274, 20
    %v276 = vpop.permute.xlu0 %275
    %vm277 = vcmask 195744
    %278 = vst.msk [vmem:[#allocation0] ss:$8 sm:$0x3] %vm277, %v276
    %s279 = scalar_lea.vmem %s0, 4
    %v280 = vld [vmem:[%s279] sm:$0x1]
    %s281 = scalar_lea.vmem %s0, 35
    %v282 = vld [vmem:[%s281] sm:$0x2]
    %vm283 = vcmask 1041409
    %v284 = vsel %vm283, %v282, %v280
    %285 = vrot.lane.b32.xlu0 %v284, 16
    %v286 = vpop.permute.xlu0 %285
    %vm287 = vcmask 162944
    %288 = vst.msk [vmem:[#allocation0] ss:$8 sm:$0x3] %vm287, %v286
    %s289 = scalar_lea.vmem %s0, 3
    %v290 = vld [vmem:[%s289] sm:$0x1]
    %s291 = scalar_lea.vmem %s0, 34
    %v292 = vld [vmem:[%s291] sm:$0x2]
    %vm293 = vcmask 1041409
    %v294 = vsel %vm293, %v292, %v290
    %295 = vrot.lane.b32.xlu0 %v294, 12
    %v296 = vpop.permute.xlu0 %295
    %vm297 = vcmask 130144
    %298 = vst.msk [vmem:[#allocation0] ss:$8 sm:$0x3] %vm297, %v296
    %s299 = scalar_lea.vmem %s0, 2
    %v300 = vld [vmem:[%s299] sm:$0x1]
    %s301 = scalar_lea.vmem %s0, 33
    %v302 = vld [vmem:[%s301] sm:$0x2]
    %vm303 = vcmask 1041409
    %v304 = vsel %vm303, %v302, %v300
    %305 = vrot.lane.b32.xlu0 %v304, 8
    %v306 = vpop.permute.xlu0 %305
    %vm307 = vcmask 97344
    %308 = vst.msk [vmem:[#allocation0] ss:$8 sm:$0x3] %vm307, %v306
    %s309 = scalar_lea.vmem %s0, 1
    %v310 = vld [vmem:[%s309] sm:$0x1]
    %s311 = scalar_lea.vmem %s0, 32
    %v312 = vld [vmem:[%s311] sm:$0x2]
    %vm313 = vcmask 1041409
    %v314 = vsel %vm313, %v312, %v310
    %315 = vrot.lane.b32.xlu0 %v314, 4
    %v316 = vpop.permute.xlu0 %315
    %vm317 = vcmask 64544
    %318 = vst.msk [vmem:[#allocation0] ss:$8 sm:$0x3] %vm317, %v316
    %s320 = sshll.u32 1, 1
    %s321 = ssub.s32 %s320, 1
    %v323 = vld [vmem:[#allocation0] sm:%s321]
    %s324 = sshll.u32 1, 1
    %s325 = ssub.s32 %s324, 1
    %326 = vst [vmem:[%s1] sm:%s325] %v323
    %s327 = scalar_lea.vmem [#allocation0], 8
    %v328 = vld [vmem:[%s327] sm:%s321]
    %s329 = sshll.u32 1, 1
    %s330 = ssub.s32 %s329, 1
    %s331 = scalar_lea.vmem %s1, 1
    %332 = vst [vmem:[%s331] sm:%s330] %v328

// kernel: tile.23
$region0: #{tile.23}
  #allocation0 [shape = 's32[1]{0}', space=sflag, size = 0x4, scoped, tag = 'scoped memory for tile.23']
  %s0 = inlined_call_operand.vmem [shape: f32[8], index: 0, kind: input, shape index: {}]
  %s1 = inlined_call_operand.vmem [shape: f32[16,8], index: 1, kind: output, shape index: {}]
  // Predicated region
  $region2: #{tile.23} parent=0 // pred_check
    _
  $region3: #{tile.23} parent=0 // pred_check_branch
    %3 = sbr.rel (0) target = $region5
  $region4: #{tile.23} parent=0 // pred_region
    _
  $region5: #{tile.23} parent=0 // pred_fallthru
    _
  %v4 = vld [vmem:[%s0] ss:$0 sm:$0xff]
  %5 = vst [vmem:[%s1] sm:$0xff] %v4
  %s6 = scalar_lea.vmem %s1, 8
  %7 = vst [vmem:[%s6] sm:$0xff] %v4

// kernel: tile.24
$region0: #{tile.24}
  %s0 = inlined_call_operand.vmem [shape: f32[16,8], index: 0, kind: input, shape index: {}]
  %s1 = inlined_call_operand.vmem [shape: f32[1,128], index: 1, kind: output, shape index: {}]
  $region1: #{tile.24} parent=0
    #allocation0 [shape = 'u8[4096]{0}', space=vmem, size = 0x1000, scoped, tag = 'scoped mem for output reshape']
    %v2 = vld [vmem:[%s0] sm:$0x1]
    %vm3 = vcmask 64512
    %4 = vst.msk [vmem:[#allocation0] sm:$0x1] %vm3, %v2
    %s5 = scalar_lea.vmem %s0, 15
    %v6 = vld [vmem:[%s5] sm:$0x1]
    %7 = vrot.lane.b32.xlu0 %v6, 120
    %v8 = vpop.permute.xlu0 %7
    %vm9 = vcmask 1048512
    %10 = vst.msk [vmem:[#allocation0] sm:$0x1] %vm9, %v8
    %s11 = scalar_lea.vmem %s0, 14
    %v12 = vld [vmem:[%s11] sm:$0x1]
    %13 = vrot.lane.b32.xlu0 %v12, 112
    %v14 = vpop.permute.xlu0 %13
    %vm15 = vcmask 982912
    %16 = vst.msk [vmem:[#allocation0] sm:$0x1] %vm15, %v14
    %s17 = scalar_lea.vmem %s0, 13
    %v18 = vld [vmem:[%s17] sm:$0x1]
    %19 = vrot.lane.b32.xlu0 %v18, 104
    %v20 = vpop.permute.xlu0 %19
    %vm21 = vcmask 917312
    %22 = vst.msk [vmem:[#allocation0] sm:$0x1] %vm21, %v20
    %s23 = scalar_lea.vmem %s0, 12
    %v24 = vld [vmem:[%s23] sm:$0x1]
    %25 = vrot.lane.b32.xlu0 %v24, 96
    %v26 = vpop.permute.xlu0 %25
    %vm27 = vcmask 851712
    %28 = vst.msk [vmem:[#allocation0] sm:$0x1] %vm27, %v26
    %s29 = scalar_lea.vmem %s0, 11
    %v30 = vld [vmem:[%s29] sm:$0x1]
    %31 = vrot.lane.b32.xlu0 %v30, 88
    %v32 = vpop.permute.xlu0 %31
    %vm33 = vcmask 786112
    %34 = vst.msk [vmem:[#allocation0] sm:$0x1] %vm33, %v32
    %s35 = scalar_lea.vmem %s0, 10
    %v36 = vld [vmem:[%s35] sm:$0x1]
    %37 = vrot.lane.b32.xlu0 %v36, 80
    %v38 = vpop.permute.xlu0 %37
    %vm39 = vcmask 720512
    %40 = vst.msk [vmem:[#allocation0] sm:$0x1] %vm39, %v38
    %s41 = scalar_lea.vmem %s0, 9
    %v42 = vld [vmem:[%s41] sm:$0x1]
    %43 = vrot.lane.b32.xlu0 %v42, 72
    %v44 = vpop.permute.xlu0 %43
    %vm45 = vcmask 654912
    %46 = vst.msk [vmem:[#allocation0] sm:$0x1] %vm45, %v44
    %s47 = scalar_lea.vmem %s0, 8
    %v48 = vld [vmem:[%s47] sm:$0x1]
    %49 = vrot.lane.b32.xlu0 %v48, 64
    %v50 = vpop.permute.xlu0 %49
    %vm51 = vcmask 589312
    %52 = vst.msk [vmem:[#allocation0] sm:$0x1] %vm51, %v50
    %s53 = scalar_lea.vmem %s0, 7
    %v54 = vld [vmem:[%s53] sm:$0x1]
    %55 = vrot.lane.b32.xlu0 %v54, 56
    %v56 = vpop.permute.xlu0 %55
    %vm57 = vcmask 523712
    %58 = vst.msk [vmem:[#allocation0] sm:$0x1] %vm57, %v56
    %s59 = scalar_lea.vmem %s0, 6
    %v60 = vld [vmem:[%s59] sm:$0x1]
    %61 = vrot.lane.b32.xlu0 %v60, 48
    %v62 = vpop.permute.xlu0 %61
    %vm63 = vcmask 458112
    %64 = vst.msk [vmem:[#allocation0] sm:$0x1] %vm63, %v62
    %s65 = scalar_lea.vmem %s0, 5
    %v66 = vld [vmem:[%s65] sm:$0x1]
    %67 = vrot.lane.b32.xlu0 %v66, 40
    %v68 = vpop.permute.xlu0 %67
    %vm69 = vcmask 392512
    %70 = vst.msk [vmem:[#allocation0] sm:$0x1] %vm69, %v68
    %s71 = scalar_lea.vmem %s0, 4
    %v72 = vld [vmem:[%s71] sm:$0x1]
    %73 = vrot.lane.b32.xlu0 %v72, 32
    %v74 = vpop.permute.xlu0 %73
    %vm75 = vcmask 326912
    %76 = vst.msk [vmem:[#allocation0] sm:$0x1] %vm75, %v74
    %s77 = scalar_lea.vmem %s0, 3
    %v78 = vld [vmem:[%s77] sm:$0x1]
    %79 = vrot.lane.b32.xlu0 %v78, 24
    %v80 = vpop.permute.xlu0 %79
    %vm81 = vcmask 261312
    %82 = vst.msk [vmem:[#allocation0] sm:$0x1] %vm81, %v80
    %s83 = scalar_lea.vmem %s0, 2
    %v84 = vld [vmem:[%s83] sm:$0x1]
    %85 = vrot.lane.b32.xlu0 %v84, 16
    %v86 = vpop.permute.xlu0 %85
    %vm87 = vcmask 195712
    %88 = vst.msk [vmem:[#allocation0] sm:$0x1] %vm87, %v86
    %s89 = scalar_lea.vmem %s0, 1
    %v90 = vld [vmem:[%s89] sm:$0x1]
    %91 = vrot.lane.b32.xlu0 %v90, 8
    %v92 = vpop.permute.xlu0 %91
    %vm93 = vcmask 130112
    %94 = vst.msk [vmem:[#allocation0] sm:$0x1] %vm93, %v92
    %s96 = sshll.u32 1, 1
    %s97 = ssub.s32 %s96, 1
    %v99 = vld [vmem:[#allocation0] sm:%s97]
    %s100 = sshll.u32 1, 1
    %s101 = ssub.s32 %s100, 1
    %102 = vst [vmem:[%s1] sm:%s101] %v99

// kernel: tile.28
$region0: #{tile.28}
  #allocation0 [shape = 's32[1]{0}', space=sflag, size = 0x4, scoped, tag = 'scoped memory for tile.28']
  %s0 = inlined_call_operand.vmem [shape: f32[32], index: 0, kind: input, shape index: {}]
  %s1 = inlined_call_operand.vmem [shape: f32[4,32], index: 1, kind: output, shape index: {}]
  // Predicated region
  $region2: #{tile.28} parent=0 // pred_check
    _
  $region3: #{tile.28} parent=0 // pred_check_branch
    %3 = sbr.rel (0) target = $region5
  $region4: #{tile.28} parent=0 // pred_region
    _
  $region5: #{tile.28} parent=0 // pred_fallthru
    _
  %v4 = vld [vmem:[%s0] ss:$0 sm:$0xff]
  %5 = vst [vmem:[%s1] sm:$0xf] %v4

// kernel: tile.29
$region0: #{tile.29}
  %s0 = inlined_call_operand.vmem [shape: f32[4,32], index: 0, kind: input, shape index: {}]
  %s1 = inlined_call_operand.vmem [shape: f32[1,128], index: 1, kind: output, shape index: {}]
  $region1: #{tile.29} parent=0
    #allocation0 [shape = 'u8[4096]{0}', space=vmem, size = 0x1000, scoped, tag = 'scoped mem for output reshape']
    #allocation1 [shape = 'u8[4096]{0}', space=vmem, size = 0x1000, scoped, tag = 'scoped mem for input reshape']
    %s3 = sshll.u32 1, 4
    %s4 = ssub.s32 %s3, 1
    %v5 = vld [vmem:[%s0] sm:%s4]
    %6 = vst [vmem:[#allocation1] sm:%s4] %v5
    %v7 = vld [vmem:[#allocation1] sm:$0x1]
    %vm8 = vcmask 261120
    %9 = vst.msk [vmem:[#allocation0] sm:$0x1] %vm8, %v7
    %s10 = scalar_lea.vmem [#allocation1], 3
    %v11 = vld [vmem:[%s10] sm:$0x1]
    %12 = vrot.lane.b32.xlu0 %v11, 96
    %v13 = vpop.permute.xlu0 %12
    %vm14 = vcmask 1048320
    %15 = vst.msk [vmem:[#allocation0] sm:$0x1] %vm14, %v13
    %s16 = scalar_lea.vmem [#allocation1], 2
    %v17 = vld [vmem:[%s16] sm:$0x1]
    %18 = vrot.lane.b32.xlu0 %v17, 64
    %v19 = vpop.permute.xlu0 %18
    %vm20 = vcmask 785920
    %21 = vst.msk [vmem:[#allocation0] sm:$0x1] %vm20, %v19
    %s22 = scalar_lea.vmem [#allocation1], 1
    %v23 = vld [vmem:[%s22] sm:$0x1]
    %24 = vrot.lane.b32.xlu0 %v23, 32
    %v25 = vpop.permute.xlu0 %24
    %vm26 = vcmask 523520
    %27 = vst.msk [vmem:[#allocation0] sm:$0x1] %vm26, %v25
    %s29 = sshll.u32 1, 1
    %s30 = ssub.s32 %s29, 1
    %v32 = vld [vmem:[#allocation0] sm:%s30]
    %s33 = sshll.u32 1, 1
    %s34 = ssub.s32 %s33, 1
    %35 = vst [vmem:[%s1] sm:%s34] %v32

// kernel: conv_encoder_forward.1
$region0: #{conv_encoder_forward.1}
  #allocation0 [shape = 'u32[]', space=smem, size = 0x4, offset = 0x4, fixed_abs, tag = 'smem constant byte address 0x4 - core index']
  #allocation1 [shape = 'u32[144,128]{1,0:T(1,128)}', space=vmem, size = 0x12000, scoped, tag = 'internal scratch']
  #allocation2 [shape = 'f32[8,576]{1,0:T(8,128)}', space=vmem, size = 0x5000, scoped, tag = 'scratch operand']
  %s0 = inlined_call_operand.vmem [shape: bf16[576,256], index: 0, kind: input, shape index: {}]
  %s1 = inlined_call_operand.vmem [shape: bf16[256,256], index: 1, kind: input, shape index: {}]
  %s2 = inlined_call_operand.vmem [shape: f32[1,256], index: 2, kind: input, shape index: {}]
  %s3 = inlined_call_operand.vmem [shape: bf16[256,128], index: 3, kind: input, shape index: {}]
  %s4 = inlined_call_operand.vmem [shape: f32[1,128], index: 4, kind: input, shape index: {}]
  %s5 = inlined_call_operand.vmem [shape: bf16[128,16], index: 5, kind: input, shape index: {}]
  %s6 = inlined_call_operand.vmem [shape: f32[1,16], index: 6, kind: input, shape index: {}]
  %s7 = inlined_call_operand.vmem [shape: bf16[576,128], index: 7, kind: input, shape index: {}]
  %s8 = inlined_call_operand.vmem [shape: f32[1,128], index: 8, kind: input, shape index: {}]
  %s9 = inlined_call_operand.vmem [shape: bf16[128,64], index: 9, kind: input, shape index: {}]
  %s10 = inlined_call_operand.vmem [shape: f32[1,64], index: 10, kind: input, shape index: {}]
  %s11 = inlined_call_operand.vmem [shape: f32[16,64], index: 11, kind: output, shape index: {}]
  %s12 = sld [smem:[#allocation0]]
  $region77: #{conv_encoder_forward.1} parent=0
    _
  %s14 = ssub.s32 1, %s12
  %s15 = scalar_select 0, %s14, %s12
  loop: start=0, step=1, limit=4
  $region2: #{conv_encoder_forward.1} parent=0 // loop_pre_header
    _
  $region3: #{conv_encoder_forward.1} parent=0 // loop_header
    %s17 = sphi 0, %s21
    %p18 = scmp.ge.s32.totalorder %s17, 4
    %s27 = sphi 0, %s29
    %s30 = sphi 0, %s27
    %s31 = sphi 0, %s30
    %s47 = sphi 0, %s31
    %s51 = sphi 0, %s51
    %s53 = sphi 0, %s51
    %s54 = sphi 0, %s53
    %s68 = sphi 0, %s54
    %s72 = sphi 0, %s72
    %s74 = sphi 0, %s72
    %s75 = sphi 0, %s74
    %s89 = sphi 0, %s75
    %s93 = sphi 0, %s93
    %s95 = sphi 0, %s93
    %s96 = sphi 0, %s95
    %s110 = sphi 0, %s96
    %s114 = sphi 0, %s114
    %s116 = sphi 0, %s114
    %s117 = sphi 0, %s116
    %s131 = sphi 0, %s117
    %s135 = sphi 0, %s135
    %s137 = sphi 0, %s135
    %s138 = sphi 0, %s137
    %s152 = sphi 0, %s138
    %s156 = sphi 0, %s156
    %s158 = sphi 0, %s156
    %s159 = sphi 0, %s158
    %s173 = sphi 0, %s159
    %s177 = sphi 0, %s177
    %s179 = sphi 0, %s177
    %s180 = sphi 0, %s179
    %s194 = sphi 0, %s180
    %s198 = sphi 0, %s198
    %s200 = sphi 0, %s198
    %s201 = sphi 0, %s200
    %s215 = sphi 0, %s201
    %s219 = sphi 0, %s219
    %s221 = sphi 0, %s219
    %s222 = sphi 0, %s221
    %s236 = sphi 0, %s222
    %s240 = sphi 0, %s240
    %s242 = sphi 0, %s240
    %s243 = sphi 0, %s242
    %s257 = sphi 0, %s243
    %s263 = sphi 0, %s265
    %s266 = sphi 0, %s263
    %s267 = sphi 0, %s266
    %s283 = sphi 0, %s267
  $region4: #{conv_encoder_forward.1} parent=0 // loop_header_branch
    %20 = sbr.rel (%p18) target = $region8
  $region5: #{conv_encoder_forward.1} parent=0 // loop_body
    %s22 = ssub.s32 %s17, 1
    %s23 = ssub.s32 %s17, 2
    %s24 = sadd.s32 %s17, 1
    %s25 = ssub.s32 %s17, %s24
    %p26 = scmp.eq.s32.totalorder %s25, 0
    %s28 = sadd.s32 %s27, 1
    %s29 = scalar_select %p26, %s27, %s28
    %p32 = pneg %p26
    %p33 = scmp.eq.s32.totalorder %s17, 1
    %p34 = por %p32, %p33
    %p35 = scmp.ne.s32.totalorder %s27, %s30
    %p36 = scmp.eq.s32.totalorder %s17, 0
    %p37 = por %p35, %p36
    %p38 = scmp.ne.s32.totalorder %s27, %s30
    %p39 = scmp.eq.s32.totalorder %s22, 1
    %p40 = por %p38, %p39
    %p41 = scmp.ne.s32.totalorder %s30, %s31
    %p42 = scmp.eq.s32.totalorder %s22, 0
    %p43 = por %p41, %p42
    %p44 = scmp.ne.s32.totalorder %s30, %s31
    %p45 = scmp.eq.s32.totalorder %s23, 1
    %p46 = por %p44, %p45
    %p48 = scmp.ne.s32.totalorder %s31, %s47
    %p49 = scmp.eq.s32.totalorder %s23, 0
    %p50 = por %p48, %p49
    %s52 = sadd.s32 %s51, 1
    %p55 = scmp.eq.s32.totalorder %s17, 1
    %p56 = scmp.ne.s32.totalorder %s51, %s53
    %p57 = scmp.eq.s32.totalorder %s17, 0
    %p58 = por %p56, %p57
    %p59 = scmp.ne.s32.totalorder %s51, %s53
    %p60 = scmp.eq.s32.totalorder %s22, 1
    %p61 = por %p59, %p60
    %p62 = scmp.ne.s32.totalorder %s53, %s54
    %p63 = scmp.eq.s32.totalorder %s22, 0
    %p64 = por %p62, %p63
    %p65 = scmp.ne.s32.totalorder %s53, %s54
    %p66 = scmp.eq.s32.totalorder %s23, 1
    %p67 = por %p65, %p66
    %p69 = scmp.ne.s32.totalorder %s54, %s68
    %p70 = scmp.eq.s32.totalorder %s23, 0
    %p71 = por %p69, %p70
    %s73 = sadd.s32 %s72, 1
    %p76 = scmp.eq.s32.totalorder %s17, 1
    %p77 = scmp.ne.s32.totalorder %s72, %s74
    %p78 = scmp.eq.s32.totalorder %s17, 0
    %p79 = por %p77, %p78
    %p80 = scmp.ne.s32.totalorder %s72, %s74
    %p81 = scmp.eq.s32.totalorder %s22, 1
    %p82 = por %p80, %p81
    %p83 = scmp.ne.s32.totalorder %s74, %s75
    %p84 = scmp.eq.s32.totalorder %s22, 0
    %p85 = por %p83, %p84
    %p86 = scmp.ne.s32.totalorder %s74, %s75
    %p87 = scmp.eq.s32.totalorder %s23, 1
    %p88 = por %p86, %p87
    %p90 = scmp.ne.s32.totalorder %s75, %s89
    %p91 = scmp.eq.s32.totalorder %s23, 0
    %p92 = por %p90, %p91
    %s94 = sadd.s32 %s93, 1
    %p97 = scmp.eq.s32.totalorder %s17, 1
    %p98 = scmp.ne.s32.totalorder %s93, %s95
    %p99 = scmp.eq.s32.totalorder %s17, 0
    %p100 = por %p98, %p99
    %p101 = scmp.ne.s32.totalorder %s93, %s95
    %p102 = scmp.eq.s32.totalorder %s22, 1
    %p103 = por %p101, %p102
    %p104 = scmp.ne.s32.totalorder %s95, %s96
    %p105 = scmp.eq.s32.totalorder %s22, 0
    %p106 = por %p104, %p105
    %p107 = scmp.ne.s32.totalorder %s95, %s96
    %p108 = scmp.eq.s32.totalorder %s23, 1
    %p109 = por %p107, %p108
    %p111 = scmp.ne.s32.totalorder %s96, %s110
    %p112 = scmp.eq.s32.totalorder %s23, 0
    %p113 = por %p111, %p112
    %s115 = sadd.s32 %s114, 1
    %p118 = scmp.eq.s32.totalorder %s17, 1
    %p119 = scmp.ne.s32.totalorder %s114, %s116
    %p120 = scmp.eq.s32.totalorder %s17, 0
    %p121 = por %p119, %p120
    %p122 = scmp.ne.s32.totalorder %s114, %s116
    %p123 = scmp.eq.s32.totalorder %s22, 1
    %p124 = por %p122, %p123
    %p125 = scmp.ne.s32.totalorder %s116, %s117
    %p126 = scmp.eq.s32.totalorder %s22, 0
    %p127 = por %p125, %p126
    %p128 = scmp.ne.s32.totalorder %s116, %s117
    %p129 = scmp.eq.s32.totalorder %s23, 1
    %p130 = por %p128, %p129
    %p132 = scmp.ne.s32.totalorder %s117, %s131
    %p133 = scmp.eq.s32.totalorder %s23, 0
    %p134 = por %p132, %p133
    %s136 = sadd.s32 %s135, 1
    %p139 = scmp.eq.s32.totalorder %s17, 1
    %p140 = scmp.ne.s32.totalorder %s135, %s137
    %p141 = scmp.eq.s32.totalorder %s17, 0
    %p142 = por %p140, %p141
    %p143 = scmp.ne.s32.totalorder %s135, %s137
    %p144 = scmp.eq.s32.totalorder %s22, 1
    %p145 = por %p143, %p144
    %p146 = scmp.ne.s32.totalorder %s137, %s138
    %p147 = scmp.eq.s32.totalorder %s22, 0
    %p148 = por %p146, %p147
    %p149 = scmp.ne.s32.totalorder %s137, %s138
    %p150 = scmp.eq.s32.totalorder %s23, 1
    %p151 = por %p149, %p150
    %p153 = scmp.ne.s32.totalorder %s138, %s152
    %p154 = scmp.eq.s32.totalorder %s23, 0
    %p155 = por %p153, %p154
    %s157 = sadd.s32 %s156, 1
    %p160 = scmp.eq.s32.totalorder %s17, 1
    %p161 = scmp.ne.s32.totalorder %s156, %s158
    %p162 = scmp.eq.s32.totalorder %s17, 0
    %p163 = por %p161, %p162
    %p164 = scmp.ne.s32.totalorder %s156, %s158
    %p165 = scmp.eq.s32.totalorder %s22, 1
    %p166 = por %p164, %p165
    %p167 = scmp.ne.s32.totalorder %s158, %s159
    %p168 = scmp.eq.s32.totalorder %s22, 0
    %p169 = por %p167, %p168
    %p170 = scmp.ne.s32.totalorder %s158, %s159
    %p171 = scmp.eq.s32.totalorder %s23, 1
    %p172 = por %p170, %p171
    %p174 = scmp.ne.s32.totalorder %s159, %s173
    %p175 = scmp.eq.s32.totalorder %s23, 0
    %p176 = por %p174, %p175
    %s178 = sadd.s32 %s177, 1
    %p181 = scmp.eq.s32.totalorder %s17, 1
    %p182 = scmp.ne.s32.totalorder %s177, %s179
    %p183 = scmp.eq.s32.totalorder %s17, 0
    %p184 = por %p182, %p183
    %p185 = scmp.ne.s32.totalorder %s177, %s179
    %p186 = scmp.eq.s32.totalorder %s22, 1
    %p187 = por %p185, %p186
    %p188 = scmp.ne.s32.totalorder %s179, %s180
    %p189 = scmp.eq.s32.totalorder %s22, 0
    %p190 = por %p188, %p189
    %p191 = scmp.ne.s32.totalorder %s179, %s180
    %p192 = scmp.eq.s32.totalorder %s23, 1
    %p193 = por %p191, %p192
    %p195 = scmp.ne.s32.totalorder %s180, %s194
    %p196 = scmp.eq.s32.totalorder %s23, 0
    %p197 = por %p195, %p196
    %s199 = sadd.s32 %s198, 1
    %p202 = scmp.eq.s32.totalorder %s17, 1
    %p203 = scmp.ne.s32.totalorder %s198, %s200
    %p204 = scmp.eq.s32.totalorder %s17, 0
    %p205 = por %p203, %p204
    %p206 = scmp.ne.s32.totalorder %s198, %s200
    %p207 = scmp.eq.s32.totalorder %s22, 1
    %p208 = por %p206, %p207
    %p209 = scmp.ne.s32.totalorder %s200, %s201
    %p210 = scmp.eq.s32.totalorder %s22, 0
    %p211 = por %p209, %p210
    %p212 = scmp.ne.s32.totalorder %s200, %s201
    %p213 = scmp.eq.s32.totalorder %s23, 1
    %p214 = por %p212, %p213
    %p216 = scmp.ne.s32.totalorder %s201, %s215
    %p217 = scmp.eq.s32.totalorder %s23, 0
    %p218 = por %p216, %p217
    %s220 = sadd.s32 %s219, 1
    %p223 = scmp.eq.s32.totalorder %s17, 1
    %p224 = scmp.ne.s32.totalorder %s219, %s221
    %p225 = scmp.eq.s32.totalorder %s17, 0
    %p226 = por %p224, %p225
    %p227 = scmp.ne.s32.totalorder %s219, %s221
    %p228 = scmp.eq.s32.totalorder %s22, 1
    %p229 = por %p227, %p228
    %p230 = scmp.ne.s32.totalorder %s221, %s222
    %p231 = scmp.eq.s32.totalorder %s22, 0
    %p232 = por %p230, %p231
    %p233 = scmp.ne.s32.totalorder %s221, %s222
    %p234 = scmp.eq.s32.totalorder %s23, 1
    %p235 = por %p233, %p234
    %p237 = scmp.ne.s32.totalorder %s222, %s236
    %p238 = scmp.eq.s32.totalorder %s23, 0
    %p239 = por %p237, %p238
    %s241 = sadd.s32 %s240, 1
    %p244 = scmp.eq.s32.totalorder %s17, 1
    %p245 = scmp.ne.s32.totalorder %s240, %s242
    %p246 = scmp.eq.s32.totalorder %s17, 0
    %p247 = por %p245, %p246
    %p248 = scmp.ne.s32.totalorder %s240, %s242
    %p249 = scmp.eq.s32.totalorder %s22, 1
    %p250 = por %p248, %p249
    %p251 = scmp.ne.s32.totalorder %s242, %s243
    %p252 = scmp.eq.s32.totalorder %s22, 0
    %p253 = por %p251, %p252
    %p254 = scmp.ne.s32.totalorder %s242, %s243
    %p255 = scmp.eq.s32.totalorder %s23, 1
    %p256 = por %p254, %p255
    %p258 = scmp.ne.s32.totalorder %s243, %s257
    %p259 = scmp.eq.s32.totalorder %s23, 0
    %p260 = por %p258, %p259
    %s261 = ssub.s32 %s17, %s24
    %p262 = scmp.eq.s32.totalorder %s261, 0
    %s264 = sadd.s32 %s263, 1
    %s265 = scalar_select %p262, %s263, %s264
    %p268 = pneg %p262
    %p269 = scmp.eq.s32.totalorder %s17, 1
    %p270 = por %p268, %p269
    %p271 = scmp.ne.s32.totalorder %s263, %s266
    %p272 = scmp.eq.s32.totalorder %s17, 0
    %p273 = por %p271, %p272
    %p274 = scmp.ne.s32.totalorder %s263, %s266
    %p275 = scmp.eq.s32.totalorder %s22, 1
    %p276 = por %p274, %p275
    %p277 = scmp.ne.s32.totalorder %s266, %s267
    %p278 = scmp.eq.s32.totalorder %s22, 0
    %p279 = por %p277, %p278
    %p280 = scmp.ne.s32.totalorder %s266, %s267
    %p281 = scmp.eq.s32.totalorder %s23, 1
    %p282 = por %p280, %p281
    %p284 = scmp.ne.s32.totalorder %s267, %s283
    %p285 = scmp.eq.s32.totalorder %s23, 0
    %p286 = por %p284, %p285
    %p287 = scmp.le.s32.totalorder 1, %s17
    %p288 = scmp.lt.s32.totalorder %s17, 3
    %p289 = pnand %p287, %p288
    %p290 = pneg %p289
    // Predicated region
    $region9: #{conv_encoder_forward.1} parent=5 // pred_check
      _
    $region10: #{conv_encoder_forward.1} parent=5 // pred_check_branch
      %292 = sbr.rel (%p289) target = $region12
    $region11: #{conv_encoder_forward.1} parent=5 // pred_region
      %s293 = ssub.s32 %s17, 1
      // Predicated region
      $region13: #{conv_encoder_forward.1} parent=11 // pred_check
        %p294 = pneg %p64
      $region14: #{conv_encoder_forward.1} parent=11 // pred_check_branch
        %296 = sbr.rel (%p294) target = $region16
      $region15: #{conv_encoder_forward.1} parent=11 // pred_region
        _
      $region16: #{conv_encoder_forward.1} parent=11 // pred_fallthru
        _
      // Predicated region
      $region17: #{conv_encoder_forward.1} parent=11 // pred_check
        %p297 = pneg %p85
      $region18: #{conv_encoder_forward.1} parent=11 // pred_check_branch
        %299 = sbr.rel (%p297) target = $region20
      $region19: #{conv_encoder_forward.1} parent=11 // pred_region
        _
      $region20: #{conv_encoder_forward.1} parent=11 // pred_fallthru
        _
      // Predicated region
      $region21: #{conv_encoder_forward.1} parent=11 // pred_check
        %p300 = pneg %p106
      $region22: #{conv_encoder_forward.1} parent=11 // pred_check_branch
        %302 = sbr.rel (%p300) target = $region24
      $region23: #{conv_encoder_forward.1} parent=11 // pred_region
        _
      $region24: #{conv_encoder_forward.1} parent=11 // pred_fallthru
        _
      // Predicated region
      $region25: #{conv_encoder_forward.1} parent=11 // pred_check
        %p303 = pneg %p127
      $region26: #{conv_encoder_forward.1} parent=11 // pred_check_branch
        %305 = sbr.rel (%p303) target = $region28
      $region27: #{conv_encoder_forward.1} parent=11 // pred_region
        _
      $region28: #{conv_encoder_forward.1} parent=11 // pred_fallthru
        _
      // Predicated region
      $region29: #{conv_encoder_forward.1} parent=11 // pred_check
        %p306 = pneg %p148
      $region30: #{conv_encoder_forward.1} parent=11 // pred_check_branch
        %308 = sbr.rel (%p306) target = $region32
      $region31: #{conv_encoder_forward.1} parent=11 // pred_region
        _
      $region32: #{conv_encoder_forward.1} parent=11 // pred_fallthru
        _
      // Predicated region
      $region33: #{conv_encoder_forward.1} parent=11 // pred_check
        %p309 = pneg %p169
      $region34: #{conv_encoder_forward.1} parent=11 // pred_check_branch
        %311 = sbr.rel (%p309) target = $region36
      $region35: #{conv_encoder_forward.1} parent=11 // pred_region
        _
      $region36: #{conv_encoder_forward.1} parent=11 // pred_fallthru
        _
      // Predicated region
      $region37: #{conv_encoder_forward.1} parent=11 // pred_check
        %p312 = pneg %p190
      $region38: #{conv_encoder_forward.1} parent=11 // pred_check_branch
        %314 = sbr.rel (%p312) target = $region40
      $region39: #{conv_encoder_forward.1} parent=11 // pred_region
        _
      $region40: #{conv_encoder_forward.1} parent=11 // pred_fallthru
        _
      // Predicated region
      $region41: #{conv_encoder_forward.1} parent=11 // pred_check
        %p315 = pneg %p211
      $region42: #{conv_encoder_forward.1} parent=11 // pred_check_branch
        %317 = sbr.rel (%p315) target = $region44
      $region43: #{conv_encoder_forward.1} parent=11 // pred_region
        _
      $region44: #{conv_encoder_forward.1} parent=11 // pred_fallthru
        _
      // Predicated region
      $region45: #{conv_encoder_forward.1} parent=11 // pred_check
        %p318 = pneg %p232
      $region46: #{conv_encoder_forward.1} parent=11 // pred_check_branch
        %320 = sbr.rel (%p318) target = $region48
      $region47: #{conv_encoder_forward.1} parent=11 // pred_region
        _
      $region48: #{conv_encoder_forward.1} parent=11 // pred_fallthru
        _
      // Predicated region
      $region49: #{conv_encoder_forward.1} parent=11 // pred_check
        %p321 = pneg %p253
      $region50: #{conv_encoder_forward.1} parent=11 // pred_check_branch
        %323 = sbr.rel (%p321) target = $region52
      $region51: #{conv_encoder_forward.1} parent=11 // pred_region
        _
      $region52: #{conv_encoder_forward.1} parent=11 // pred_fallthru
        _
    $region12: #{conv_encoder_forward.1} parent=5 // pred_fallthru
      _
    %p324 = scmp.lt.s32.totalorder %s17, 2
    // Predicated region
    $region53: #{conv_encoder_forward.1} parent=5 // pred_check
      %p325 = pneg %p324
    $region54: #{conv_encoder_forward.1} parent=5 // pred_check_branch
      %327 = sbr.rel (%p325) target = $region56
    $region55: #{conv_encoder_forward.1} parent=5 // pred_region
      // Predicated region
      $region57: #{conv_encoder_forward.1} parent=55 // pred_check
        %p328 = pneg %p37
      $region58: #{conv_encoder_forward.1} parent=55 // pred_check_branch
        %330 = sbr.rel (%p328) target = $region60
      $region59: #{conv_encoder_forward.1} parent=55 // pred_region
        %s331 = smul.u32 36, %s17
        %p332 = scmp.lt.s32.totalorder %s331, 71
        %s333 = scalar_select %p332, %s331, 71
        %s334 = smul.addr %s333, 2
        %s335 = smul.addr %s334, 4
        %s336 = scalar_lea.vmem %s0, %s335
        %s337 = smul.u32 36, %s17
      $region60: #{conv_encoder_forward.1} parent=55 // pred_fallthru
        _
    $region56: #{conv_encoder_forward.1} parent=5 // pred_fallthru
      _
    %p338 = scmp.le.s32.totalorder 1, %s17
    %p339 = scmp.lt.s32.totalorder %s17, 3
    %p340 = pnand %p338, %p339
    %p341 = pneg %p340
    // Predicated region
    $region61: #{conv_encoder_forward.1} parent=5 // pred_check
      _
    $region62: #{conv_encoder_forward.1} parent=5 // pred_check_branch
      %343 = sbr.rel (%p340) target = $region64
    $region63: #{conv_encoder_forward.1} parent=5 // pred_region
      %s344 = ssub.s32 %s17, 1
      %s345 = smul.u32 36, %s22
      %p346 = scmp.lt.s32.totalorder %s345, 71
      %s347 = scalar_select %p346, %s345, 71
      %s348 = smul.addr %s347, 2
      %s349 = smul.addr %s348, 4
      %s350 = scalar_lea.vmem %s0, %s349
      %p351 = pneg %p43
      %p352 = pneg %p40
      %p353 = pneg %p64
      %p354 = pneg %p61
      %p355 = pneg %p85
      %p356 = pneg %p82
      %p357 = pneg %p106
      %p358 = pneg %p103
      %p359 = pneg %p127
      %p360 = pneg %p124
      %p361 = pneg %p148
      %p362 = pneg %p145
      %p363 = pneg %p169
      %p364 = pneg %p166
      %p365 = pneg %p190
      %p366 = pneg %p187
      %p367 = pneg %p211
      %p368 = pneg %p208
      %p369 = pneg %p232
      %p370 = pneg %p229
      %p371 = pneg %p253
      %p372 = pneg %p250
      %p373 = pneg %p279
      %p374 = pneg %p276
      %p375 = scmp.lt.s32.totalorder %s22, 1
      %s376 = scalar_select %p375, %s22, 1
      %s377 = smul.addr %s376, 8
      %s378 = scalar_lea.vmem %s11, %s377
      %s379 = smul.u32 36, %s22
      %p380 = scmp.lt.s32.totalorder %s379, 71
      %s381 = scalar_select %p380, %s379, 71
      %s382 = smul.addr %s381, 2
      %s383 = smul.addr %s382, 4
      %s384 = scalar_lea.vmem %s0, %s383
      %s385 = smul.u32 36, %s22
      %p386 = scmp.lt.s32.totalorder %s22, 1
      %s387 = scalar_select %p386, %s22, 1
      %s388 = smul.addr %s387, 8
      %s389 = scalar_lea.vmem %s11, %s388
      %v391 = vld [vmem:[%s384] sm:$0xff]
      %v392 = vld [vmem:[%s384 + $0x8] sm:$0xff]
      %v393 = vld [vmem:[%s384 + $0x10] sm:$0xff]
      %v394 = vld [vmem:[%s384 + $0x18] sm:$0xff]
      %v395 = vld [vmem:[%s384 + $0x20] sm:$0xff]
      %v396 = vld [vmem:[%s384 + $0x28] sm:$0xff]
      %v397 = vld [vmem:[%s384 + $0x30] sm:$0xff]
      %v398 = vld [vmem:[%s384 + $0x38] sm:$0xff]
      %v399 = vld [vmem:[%s384 + $0x40] sm:$0xff]
      %v400 = vld [vmem:[%s384 + $0x48] sm:$0xff]
      %v401 = vld [vmem:[%s384 + $0x50] sm:$0xff]
      %v402 = vld [vmem:[%s384 + $0x58] sm:$0xff]
      %v403 = vld [vmem:[%s384 + $0x60] sm:$0xff]
      %v404 = vld [vmem:[%s384 + $0x68] sm:$0xff]
      %v405 = vld [vmem:[%s384 + $0x70] sm:$0xff]
      %v406 = vld [vmem:[%s384 + $0x78] sm:$0xff]
      %v407 = vld [vmem:[%s384 + $0x80] sm:$0xff]
      %v408 = vld [vmem:[%s384 + $0x88] sm:$0xff]
      %v409 = vld [vmem:[%s384 + $0x90] sm:$0xff]
      %v410 = vld [vmem:[%s384 + $0x98] sm:$0xff]
      %v411 = vld [vmem:[%s384 + $0xa0] sm:$0xff]
      %v412 = vld [vmem:[%s384 + $0xa8] sm:$0xff]
      %v413 = vld [vmem:[%s384 + $0xb0] sm:$0xff]
      %v414 = vld [vmem:[%s384 + $0xb8] sm:$0xff]
      %v415 = vld [vmem:[%s384 + $0xc0] sm:$0xff]
      %v416 = vld [vmem:[%s384 + $0xc8] sm:$0xff]
      %v417 = vld [vmem:[%s384 + $0xd0] sm:$0xff]
      %v418 = vld [vmem:[%s384 + $0xd8] sm:$0xff]
      %v419 = vld [vmem:[%s384 + $0xe0] sm:$0xff]
      %v420 = vld [vmem:[%s384 + $0xe8] sm:$0xff]
      %v421 = vld [vmem:[%s384 + $0xf0] sm:$0xff]
      %v422 = vld [vmem:[%s384 + $0xf8] sm:$0xff]
      %v423 = vld [vmem:[%s384 + $0x100] sm:$0xff]
      %v424 = vld [vmem:[%s384 + $0x108] sm:$0xff]
      %v425 = vld [vmem:[%s384 + $0x110] sm:$0xff]
      %v426 = vld [vmem:[%s384 + $0x118] sm:$0xff]
      %v427 = vld [vmem:[%s1] sm:$0xff]
      %v428 = vld [vmem:[%s1 + $0x8] sm:$0xff]
      %v429 = vld [vmem:[%s1 + $0x10] sm:$0xff]
      %v430 = vld [vmem:[%s1 + $0x18] sm:$0xff]
      %v431 = vld [vmem:[%s1 + $0x20] sm:$0xff]
      %v432 = vld [vmem:[%s1 + $0x28] sm:$0xff]
      %v433 = vld [vmem:[%s1 + $0x30] sm:$0xff]
      %v434 = vld [vmem:[%s1 + $0x38] sm:$0xff]
      %v435 = vld [vmem:[%s1 + $0x40] sm:$0xff]
      %v436 = vld [vmem:[%s1 + $0x48] sm:$0xff]
      %v437 = vld [vmem:[%s1 + $0x50] sm:$0xff]
      %v438 = vld [vmem:[%s1 + $0x58] sm:$0xff]
      %v439 = vld [vmem:[%s1 + $0x60] sm:$0xff]
      %v440 = vld [vmem:[%s1 + $0x68] sm:$0xff]
      %v441 = vld [vmem:[%s1 + $0x70] sm:$0xff]
      %v442 = vld [vmem:[%s1 + $0x78] sm:$0xff]
      %v443 = vld [vmem:[%s1 + $0x80] sm:$0xff]
      %v444 = vld [vmem:[%s1 + $0x88] sm:$0xff]
      %v445 = vld [vmem:[%s1 + $0x90] sm:$0xff]
      %v446 = vld [vmem:[%s1 + $0x98] sm:$0xff]
      %v447 = vld [vmem:[%s1 + $0xa0] sm:$0xff]
      %v448 = vld [vmem:[%s1 + $0xa8] sm:$0xff]
      %v449 = vld [vmem:[%s1 + $0xb0] sm:$0xff]
      %v450 = vld [vmem:[%s1 + $0xb8] sm:$0xff]
      %v451 = vld [vmem:[%s1 + $0xc0] sm:$0xff]
      %v452 = vld [vmem:[%s1 + $0xc8] sm:$0xff]
      %v453 = vld [vmem:[%s1 + $0xd0] sm:$0xff]
      %v454 = vld [vmem:[%s1 + $0xd8] sm:$0xff]
      %v455 = vld [vmem:[%s1 + $0xe0] sm:$0xff]
      %v456 = vld [vmem:[%s1 + $0xe8] sm:$0xff]
      %v457 = vld [vmem:[%s1 + $0xf0] sm:$0xff]
      %v458 = vld [vmem:[%s1 + $0xf8] sm:$0xff]
      %v459 = vld [vmem:[%s2] sm:$0x3]
      %v461 = vlaneseq
      %v462 = vshrl.u32 %v461, 7
      %v463 = vsub.s32 0, %v462
      %v464 = vrot.slane %v459, %v463
      %v465 = vlaneseq
      %v466 = vshrl.u32 %v465, 7
      %v467 = vsub.s32 1, %v466
      %v468 = vrot.slane %v459, %v467
      %v507 = vunpack.c.l.b16 %v391
      %v508 = vunpack.c.h.b16 %v391
      %v509 = vunpack.c.l.b16 %v392
      %v510 = vunpack.c.h.b16 %v392
      %v511 = vunpack.c.l.b16 %v393
      %v512 = vunpack.c.h.b16 %v393
      %v513 = vunpack.c.l.b16 %v394
      %v514 = vunpack.c.h.b16 %v394
      %v515 = vunpack.c.l.b16 %v395
      %v516 = vunpack.c.h.b16 %v395
      %v517 = vunpack.c.l.b16 %v396
      %v518 = vunpack.c.h.b16 %v396
      %v519 = vunpack.c.l.b16 %v397
      %v520 = vunpack.c.h.b16 %v397
      %v521 = vunpack.c.l.b16 %v398
      %v522 = vunpack.c.h.b16 %v398
      %v523 = vunpack.c.l.b16 %v399
      %v524 = vunpack.c.h.b16 %v399
      %v525 = vunpack.c.l.b16 %v400
      %v526 = vunpack.c.h.b16 %v400
      %v527 = vunpack.c.l.b16 %v401
      %v528 = vunpack.c.h.b16 %v401
      %v529 = vunpack.c.l.b16 %v402
      %v530 = vunpack.c.h.b16 %v402
      %v531 = vunpack.c.l.b16 %v403
      %v532 = vunpack.c.h.b16 %v403
      %v533 = vunpack.c.l.b16 %v404
      %v534 = vunpack.c.h.b16 %v404
      %v535 = vunpack.c.l.b16 %v405
      %v536 = vunpack.c.h.b16 %v405
      %v537 = vunpack.c.l.b16 %v406
      %v538 = vunpack.c.h.b16 %v406
      %v539 = vunpack.c.l.b16 %v407
      %v540 = vunpack.c.h.b16 %v407
      %v541 = vunpack.c.l.b16 %v408
      %v542 = vunpack.c.h.b16 %v408
      %v543 = vunpack.c.l.b16 %v409
      %v544 = vunpack.c.h.b16 %v409
      %v545 = vunpack.c.l.b16 %v410
      %v546 = vunpack.c.h.b16 %v410
      %v547 = vunpack.c.l.b16 %v411
      %v548 = vunpack.c.h.b16 %v411
      %v549 = vunpack.c.l.b16 %v412
      %v550 = vunpack.c.h.b16 %v412
      %v551 = vunpack.c.l.b16 %v413
      %v552 = vunpack.c.h.b16 %v413
      %v553 = vunpack.c.l.b16 %v414
      %v554 = vunpack.c.h.b16 %v414
      %v555 = vunpack.c.l.b16 %v415
      %v556 = vunpack.c.h.b16 %v415
      %v557 = vunpack.c.l.b16 %v416
      %v558 = vunpack.c.h.b16 %v416
      %v559 = vunpack.c.l.b16 %v417
      %v560 = vunpack.c.h.b16 %v417
      %v561 = vunpack.c.l.b16 %v418
      %v562 = vunpack.c.h.b16 %v418
      %v563 = vunpack.c.l.b16 %v419
      %v564 = vunpack.c.h.b16 %v419
      %v565 = vunpack.c.l.b16 %v420
      %v566 = vunpack.c.h.b16 %v420
      %v567 = vunpack.c.l.b16 %v421
      %v568 = vunpack.c.h.b16 %v421
      %v569 = vunpack.c.l.b16 %v422
      %v570 = vunpack.c.h.b16 %v422
      %v571 = vunpack.c.l.b16 %v423
      %v572 = vunpack.c.h.b16 %v423
      %v573 = vunpack.c.l.b16 %v424
      %v574 = vunpack.c.h.b16 %v424
      %v575 = vunpack.c.l.b16 %v425
      %v576 = vunpack.c.h.b16 %v425
      %v577 = vunpack.c.l.b16 %v426
      %v578 = vunpack.c.h.b16 %v426
      %v579 = vpack.c.b16 %v509, %v507
      %v580 = vpack.c.b16 %v510, %v508
      %v581 = vpack.c.b16 %v513, %v511
      %v582 = vpack.c.b16 %v514, %v512
      %v583 = vpack.c.b16 %v517, %v515
      %v584 = vpack.c.b16 %v518, %v516
      %v585 = vpack.c.b16 %v521, %v519
      %v586 = vpack.c.b16 %v522, %v520
      %v587 = vpack.c.b16 %v525, %v523
      %v588 = vpack.c.b16 %v526, %v524
      %v589 = vpack.c.b16 %v529, %v527
      %v590 = vpack.c.b16 %v530, %v528
      %v591 = vpack.c.b16 %v533, %v531
      %v592 = vpack.c.b16 %v534, %v532
      %v593 = vpack.c.b16 %v537, %v535
      %v594 = vpack.c.b16 %v538, %v536
      %v595 = vpack.c.b16 %v541, %v539
      %v596 = vpack.c.b16 %v542, %v540
      %v597 = vpack.c.b16 %v545, %v543
      %v598 = vpack.c.b16 %v546, %v544
      %v599 = vpack.c.b16 %v549, %v547
      %v600 = vpack.c.b16 %v550, %v548
      %v601 = vpack.c.b16 %v553, %v551
      %v602 = vpack.c.b16 %v554, %v552
      %v603 = vpack.c.b16 %v557, %v555
      %v604 = vpack.c.b16 %v558, %v556
      %v605 = vpack.c.b16 %v561, %v559
      %v606 = vpack.c.b16 %v562, %v560
      %v607 = vpack.c.b16 %v565, %v563
      %v608 = vpack.c.b16 %v566, %v564
      %v609 = vpack.c.b16 %v569, %v567
      %v610 = vpack.c.b16 %v570, %v568
      %v611 = vpack.c.b16 %v573, %v571
      %v612 = vpack.c.b16 %v574, %v572
      %v613 = vpack.c.b16 %v577, %v575
      %v614 = vpack.c.b16 %v578, %v576
      %v683 = vunpack.c.l.b16 %v427
      %v684 = vunpack.c.h.b16 %v427
      %v685 = vunpack.c.l.b16 %v428
      %v686 = vunpack.c.h.b16 %v428
      %v687 = vunpack.c.l.b16 %v429
      %v688 = vunpack.c.h.b16 %v429
      %v689 = vunpack.c.l.b16 %v430
      %v690 = vunpack.c.h.b16 %v430
      %v691 = vunpack.c.l.b16 %v431
      %v692 = vunpack.c.h.b16 %v431
      %v693 = vunpack.c.l.b16 %v432
      %v694 = vunpack.c.h.b16 %v432
      %v695 = vunpack.c.l.b16 %v433
      %v696 = vunpack.c.h.b16 %v433
      %v697 = vunpack.c.l.b16 %v434
      %v698 = vunpack.c.h.b16 %v434
      %v699 = vunpack.c.l.b16 %v435
      %v700 = vunpack.c.h.b16 %v435
      %v701 = vunpack.c.l.b16 %v436
      %v702 = vunpack.c.h.b16 %v436
      %v703 = vunpack.c.l.b16 %v437
      %v704 = vunpack.c.h.b16 %v437
      %v705 = vunpack.c.l.b16 %v438
      %v706 = vunpack.c.h.b16 %v438
      %v707 = vunpack.c.l.b16 %v439
      %v708 = vunpack.c.h.b16 %v439
      %v709 = vunpack.c.l.b16 %v440
      %v710 = vunpack.c.h.b16 %v440
      %v711 = vunpack.c.l.b16 %v441
      %v712 = vunpack.c.h.b16 %v441
      %v713 = vunpack.c.l.b16 %v442
      %v714 = vunpack.c.h.b16 %v442
      %v715 = vunpack.c.l.b16 %v443
      %v716 = vunpack.c.h.b16 %v443
      %v717 = vunpack.c.l.b16 %v444
      %v718 = vunpack.c.h.b16 %v444
      %v719 = vunpack.c.l.b16 %v445
      %v720 = vunpack.c.h.b16 %v445
      %v721 = vunpack.c.l.b16 %v446
      %v722 = vunpack.c.h.b16 %v446
      %v723 = vunpack.c.l.b16 %v447
      %v724 = vunpack.c.h.b16 %v447
      %v725 = vunpack.c.l.b16 %v448
      %v726 = vunpack.c.h.b16 %v448
      %v727 = vunpack.c.l.b16 %v449
      %v728 = vunpack.c.h.b16 %v449
      %v729 = vunpack.c.l.b16 %v450
      %v730 = vunpack.c.h.b16 %v450
      %v731 = vunpack.c.l.b16 %v451
      %v732 = vunpack.c.h.b16 %v451
      %v733 = vunpack.c.l.b16 %v452
      %v734 = vunpack.c.h.b16 %v452
      %v735 = vunpack.c.l.b16 %v453
      %v736 = vunpack.c.h.b16 %v453
      %v737 = vunpack.c.l.b16 %v454
      %v738 = vunpack.c.h.b16 %v454
      %v739 = vunpack.c.l.b16 %v455
      %v740 = vunpack.c.h.b16 %v455
      %v741 = vunpack.c.l.b16 %v456
      %v742 = vunpack.c.h.b16 %v456
      %v743 = vunpack.c.l.b16 %v457
      %v744 = vunpack.c.h.b16 %v457
      %v745 = vunpack.c.l.b16 %v458
      %v746 = vunpack.c.h.b16 %v458
      %v747 = vpack.c.b16 %v685, %v683
      %v748 = vpack.c.b16 %v686, %v684
      %v749 = vpack.c.b16 %v689, %v687
      %v750 = vpack.c.b16 %v690, %v688
      %v751 = vpack.c.b16 %v693, %v691
      %v752 = vpack.c.b16 %v694, %v692
      %v753 = vpack.c.b16 %v697, %v695
      %v754 = vpack.c.b16 %v698, %v696
      %v755 = vpack.c.b16 %v701, %v699
      %v756 = vpack.c.b16 %v702, %v700
      %v757 = vpack.c.b16 %v705, %v703
      %v758 = vpack.c.b16 %v706, %v704
      %v759 = vpack.c.b16 %v709, %v707
      %v760 = vpack.c.b16 %v710, %v708
      %v761 = vpack.c.b16 %v713, %v711
      %v762 = vpack.c.b16 %v714, %v712
      %v763 = vpack.c.b16 %v717, %v715
      %v764 = vpack.c.b16 %v718, %v716
      %v765 = vpack.c.b16 %v721, %v719
      %v766 = vpack.c.b16 %v722, %v720
      %v767 = vpack.c.b16 %v725, %v723
      %v768 = vpack.c.b16 %v726, %v724
      %v769 = vpack.c.b16 %v729, %v727
      %v770 = vpack.c.b16 %v730, %v728
      %v771 = vpack.c.b16 %v733, %v731
      %v772 = vpack.c.b16 %v734, %v732
      %v773 = vpack.c.b16 %v737, %v735
      %v774 = vpack.c.b16 %v738, %v736
      %v775 = vpack.c.b16 %v741, %v739
      %v776 = vpack.c.b16 %v742, %v740
      %v777 = vpack.c.b16 %v745, %v743
      %v778 = vpack.c.b16 %v746, %v744
      %811 = vmatprep.subr.bf16.mxu0 %v762
      %812 = vmatpush1.bf16.msra.mxu0 %v761
      %813 = vmatprep.subr.bf16.mxu0 %v760
      %814 = vmatpush1.bf16.msra.mxu0 %v759
      %815 = vmatprep.subr.bf16.mxu0 %v758
      %816 = vmatpush1.bf16.msra.mxu0 %v757
      %817 = vmatprep.subr.bf16.mxu0 %v756
      %818 = vmatpush1.bf16.msra.mxu0 %v755
      %819 = vmatprep.subr.bf16.mxu0 %v754
      %820 = vmatpush1.bf16.msra.mxu0 %v753
      %821 = vmatprep.subr.bf16.mxu0 %v752
      %822 = vmatpush1.bf16.msra.mxu0 %v751
      %823 = vmatprep.subr.bf16.mxu0 %v750
      %824 = vmatpush1.bf16.msra.mxu0 %v749
      %825 = vmatprep.subr.bf16.mxu0 %v748
      %826 = vmatpush1.bf16.msra.mxu0 %v747
      %827 = vmatprep.subr.bf16.mxu0 %v778
      %828 = vmatpush2.bf16.msra.mxu0 %v777
      %829 = vmatprep.subr.bf16.mxu0 %v776
      %830 = vmatpush2.bf16.msra.mxu0 %v775
      %831 = vmatprep.subr.bf16.mxu0 %v774
      %832 = vmatpush2.bf16.msra.mxu0 %v773
      %833 = vmatprep.subr.bf16.mxu0 %v772
      %834 = vmatpush2.bf16.msra.mxu0 %v771
      %835 = vmatprep.subr.bf16.mxu0 %v770
      %836 = vmatpush2.bf16.msra.mxu0 %v769
      %837 = vmatprep.subr.bf16.mxu0 %v768
      %838 = vmatpush2.bf16.msra.mxu0 %v767
      %839 = vmatprep.subr.bf16.mxu0 %v766
      %840 = vmatpush2.bf16.msra.mxu0 %v765
      %841 = vmatprep.subr.bf16.mxu0 %v764
      %842 = vmatpush2.bf16.msra.mxu0 %v763
      %843 = vmatprep.mubr.bf16.mxu0 %v580
      %844 = vmatmul.mubr.bf16.gmra.mxu0 %v579
      %v845 = vpop.f32.mrf.mxu0
      %v846 = vadd.f32 %v464, %v845
      %v847 = vpop.f32.mrf.mxu0
      %v848 = vadd.f32 %v468, %v847
      %v849 = vpop.f32.mrf.mxu0
      %v850 = vadd.f32 %v464, %v849
      %v851 = vpop.f32.mrf.mxu0
      %v852 = vadd.f32 %v468, %v851
      %853 = vmatprep.mubr.bf16.mxu0 %v582
      %854 = vmatmul.mubr.bf16.gmra.mxu0 %v581
      %v855 = vpop.f32.mrf.mxu0
      %v856 = vadd.f32 %v464, %v855
      %v857 = vpop.f32.mrf.mxu0
      %v858 = vadd.f32 %v468, %v857
      %v859 = vpop.f32.mrf.mxu0
      %v860 = vadd.f32 %v464, %v859
      %v861 = vpop.f32.mrf.mxu0
      %v862 = vadd.f32 %v468, %v861
      %863 = vmatprep.mubr.bf16.mxu0 %v584
      %864 = vmatmul.mubr.bf16.gmra.mxu0 %v583
      %v865 = vpop.f32.mrf.mxu0
      %v866 = vadd.f32 %v464, %v865
      %v867 = vpop.f32.mrf.mxu0
      %v868 = vadd.f32 %v468, %v867
      %v869 = vpop.f32.mrf.mxu0
      %v870 = vadd.f32 %v464, %v869
      %v871 = vpop.f32.mrf.mxu0
      %v872 = vadd.f32 %v468, %v871
      %873 = vmatprep.mubr.bf16.mxu0 %v586
      %874 = vmatmul.mubr.bf16.gmra.mxu0 %v585
      %v875 = vpop.f32.mrf.mxu0
      %v876 = vadd.f32 %v464, %v875
      %v877 = vpop.f32.mrf.mxu0
      %v878 = vadd.f32 %v468, %v877
      %v879 = vpop.f32.mrf.mxu0
      %v880 = vadd.f32 %v464, %v879
      %v881 = vpop.f32.mrf.mxu0
      %v882 = vadd.f32 %v468, %v881
      %883 = vmatprep.mubr.bf16.mxu0 %v588
      %884 = vmatmul.mubr.bf16.gmra.mxu0 %v587
      %v885 = vpop.f32.mrf.mxu0
      %v886 = vadd.f32 %v464, %v885
      %v887 = vpop.f32.mrf.mxu0
      %v888 = vadd.f32 %v468, %v887
      %v889 = vpop.f32.mrf.mxu0
      %v890 = vadd.f32 %v464, %v889
      %v891 = vpop.f32.mrf.mxu0
      %v892 = vadd.f32 %v468, %v891
      %893 = vmatprep.mubr.bf16.mxu0 %v590
      %894 = vmatmul.mubr.bf16.gmra.mxu0 %v589
      %v895 = vpop.f32.mrf.mxu0
      %v896 = vadd.f32 %v464, %v895
      %v897 = vpop.f32.mrf.mxu0
      %v898 = vadd.f32 %v468, %v897
      %v899 = vpop.f32.mrf.mxu0
      %v900 = vadd.f32 %v464, %v899
      %v901 = vpop.f32.mrf.mxu0
      %v902 = vadd.f32 %v468, %v901
      %903 = vmatprep.mubr.bf16.mxu0 %v592
      %904 = vmatmul.mubr.bf16.gmra.mxu0 %v591
      %v905 = vpop.f32.mrf.mxu0
      %v906 = vadd.f32 %v464, %v905
      %v907 = vpop.f32.mrf.mxu0
      %v908 = vadd.f32 %v468, %v907
      %v909 = vpop.f32.mrf.mxu0
      %v910 = vadd.f32 %v464, %v909
      %v911 = vpop.f32.mrf.mxu0
      %v912 = vadd.f32 %v468, %v911
      %913 = vmatprep.mubr.bf16.mxu0 %v594
      %914 = vmatmul.mubr.bf16.gmra.mxu0 %v593
      %v915 = vpop.f32.mrf.mxu0
      %v916 = vadd.f32 %v464, %v915
      %v917 = vpop.f32.mrf.mxu0
      %v918 = vadd.f32 %v468, %v917
      %v919 = vpop.f32.mrf.mxu0
      %v920 = vadd.f32 %v464, %v919
      %v921 = vpop.f32.mrf.mxu0
      %v922 = vadd.f32 %v468, %v921
      %923 = vmatprep.mubr.bf16.mxu0 %v596
      %924 = vmatmul.mubr.bf16.gmra.mxu0 %v595
      %v925 = vpop.f32.mrf.mxu0
      %v926 = vadd.f32 %v464, %v925
      %v927 = vpop.f32.mrf.mxu0
      %v928 = vadd.f32 %v468, %v927
      %v929 = vpop.f32.mrf.mxu0
      %v930 = vadd.f32 %v464, %v929
      %v931 = vpop.f32.mrf.mxu0
      %v932 = vadd.f32 %v468, %v931
      %933 = vmatprep.mubr.bf16.mxu0 %v598
      %934 = vmatmul.mubr.bf16.gmra.mxu0 %v597
      %v935 = vpop.f32.mrf.mxu0
      %v936 = vadd.f32 %v464, %v935
      %v937 = vpop.f32.mrf.mxu0
      %v938 = vadd.f32 %v468, %v937
      %v939 = vpop.f32.mrf.mxu0
      %v940 = vadd.f32 %v464, %v939
      %v941 = vpop.f32.mrf.mxu0
      %v942 = vadd.f32 %v468, %v941
      %943 = vmatprep.mubr.bf16.mxu0 %v600
      %944 = vmatmul.mubr.bf16.gmra.mxu0 %v599
      %v945 = vpop.f32.mrf.mxu0
      %v946 = vadd.f32 %v464, %v945
      %v947 = vpop.f32.mrf.mxu0
      %v948 = vadd.f32 %v468, %v947
      %v949 = vpop.f32.mrf.mxu0
      %v950 = vadd.f32 %v464, %v949
      %v951 = vpop.f32.mrf.mxu0
      %v952 = vadd.f32 %v468, %v951
      %953 = vmatprep.mubr.bf16.mxu0 %v602
      %954 = vmatmul.mubr.bf16.gmra.mxu0 %v601
      %v955 = vpop.f32.mrf.mxu0
      %v956 = vadd.f32 %v464, %v955
      %v957 = vpop.f32.mrf.mxu0
      %v958 = vadd.f32 %v468, %v957
      %v959 = vpop.f32.mrf.mxu0
      %v960 = vadd.f32 %v464, %v959
      %v961 = vpop.f32.mrf.mxu0
      %v962 = vadd.f32 %v468, %v961
      %963 = vmatprep.mubr.bf16.mxu0 %v604
      %964 = vmatmul.mubr.bf16.gmra.mxu0 %v603
      %v965 = vpop.f32.mrf.mxu0
      %v966 = vadd.f32 %v464, %v965
      %v967 = vpop.f32.mrf.mxu0
      %v968 = vadd.f32 %v468, %v967
      %v969 = vpop.f32.mrf.mxu0
      %v970 = vadd.f32 %v464, %v969
      %v971 = vpop.f32.mrf.mxu0
      %v972 = vadd.f32 %v468, %v971
      %973 = vmatprep.mubr.bf16.mxu0 %v606
      %974 = vmatmul.mubr.bf16.gmra.mxu0 %v605
      %v975 = vpop.f32.mrf.mxu0
      %v976 = vadd.f32 %v464, %v975
      %v977 = vpop.f32.mrf.mxu0
      %v978 = vadd.f32 %v468, %v977
      %v979 = vpop.f32.mrf.mxu0
      %v980 = vadd.f32 %v464, %v979
      %v981 = vpop.f32.mrf.mxu0
      %v982 = vadd.f32 %v468, %v981
      %983 = vmatprep.mubr.bf16.mxu0 %v608
      %984 = vmatmul.mubr.bf16.gmra.mxu0 %v607
      %v985 = vpop.f32.mrf.mxu0
      %v986 = vadd.f32 %v464, %v985
      %v987 = vpop.f32.mrf.mxu0
      %v988 = vadd.f32 %v468, %v987
      %v989 = vpop.f32.mrf.mxu0
      %v990 = vadd.f32 %v464, %v989
      %v991 = vpop.f32.mrf.mxu0
      %v992 = vadd.f32 %v468, %v991
      %993 = vmatprep.mubr.bf16.mxu0 %v610
      %994 = vmatmul.mubr.bf16.gmra.mxu0 %v609
      %v995 = vpop.f32.mrf.mxu0
      %v996 = vadd.f32 %v464, %v995
      %v997 = vpop.f32.mrf.mxu0
      %v998 = vadd.f32 %v468, %v997
      %v999 = vpop.f32.mrf.mxu0
      %v1000 = vadd.f32 %v464, %v999
      %v1001 = vpop.f32.mrf.mxu0
      %v1002 = vadd.f32 %v468, %v1001
      %1003 = vmatprep.mubr.bf16.mxu0 %v612
      %1004 = vmatmul.mubr.bf16.gmra.mxu0 %v611
      %v1005 = vpop.f32.mrf.mxu0
      %v1006 = vadd.f32 %v464, %v1005
      %v1007 = vpop.f32.mrf.mxu0
      %v1008 = vadd.f32 %v468, %v1007
      %v1009 = vpop.f32.mrf.mxu0
      %v1010 = vadd.f32 %v464, %v1009
      %v1011 = vpop.f32.mrf.mxu0
      %v1012 = vadd.f32 %v468, %v1011
      %1013 = vmatprep.mubr.bf16.mxu0 %v614
      %1014 = vmatmul.mubr.bf16.gmra.mxu0 %v613
      %v1015 = vpop.f32.mrf.mxu0
      %v1016 = vadd.f32 %v464, %v1015
      %v1017 = vpop.f32.mrf.mxu0
      %v1018 = vadd.f32 %v468, %v1017
      %v1019 = vpop.f32.mrf.mxu0
      %v1020 = vadd.f32 %v464, %v1019
      %v1021 = vpop.f32.mrf.mxu0
      %v1022 = vadd.f32 %v468, %v1021
      %1023 = vdwg.mxu0
      %vm1024 = vcmp.ge.f32.partialorder %v846, 0.0
      %vm1025 = vcmp.ge.f32.partialorder %v848, 0.0
      %vm1026 = vcmp.ge.f32.partialorder %v850, 0.0
      %vm1027 = vcmp.ge.f32.partialorder %v852, 0.0
      %vm1028 = vcmp.ge.f32.partialorder %v856, 0.0
      %vm1029 = vcmp.ge.f32.partialorder %v858, 0.0
      %vm1030 = vcmp.ge.f32.partialorder %v860, 0.0
      %vm1031 = vcmp.ge.f32.partialorder %v862, 0.0
      %vm1032 = vcmp.ge.f32.partialorder %v866, 0.0
      %vm1033 = vcmp.ge.f32.partialorder %v868, 0.0
      %vm1034 = vcmp.ge.f32.partialorder %v870, 0.0
      %vm1035 = vcmp.ge.f32.partialorder %v872, 0.0
      %vm1036 = vcmp.ge.f32.partialorder %v876, 0.0
      %vm1037 = vcmp.ge.f32.partialorder %v878, 0.0
      %vm1038 = vcmp.ge.f32.partialorder %v880, 0.0
      %vm1039 = vcmp.ge.f32.partialorder %v882, 0.0
      %vm1040 = vcmp.ge.f32.partialorder %v886, 0.0
      %vm1041 = vcmp.ge.f32.partialorder %v888, 0.0
      %vm1042 = vcmp.ge.f32.partialorder %v890, 0.0
      %vm1043 = vcmp.ge.f32.partialorder %v892, 0.0
      %vm1044 = vcmp.ge.f32.partialorder %v896, 0.0
      %vm1045 = vcmp.ge.f32.partialorder %v898, 0.0
      %vm1046 = vcmp.ge.f32.partialorder %v900, 0.0
      %vm1047 = vcmp.ge.f32.partialorder %v902, 0.0
      %vm1048 = vcmp.ge.f32.partialorder %v906, 0.0
      %vm1049 = vcmp.ge.f32.partialorder %v908, 0.0
      %vm1050 = vcmp.ge.f32.partialorder %v910, 0.0
      %vm1051 = vcmp.ge.f32.partialorder %v912, 0.0
      %vm1052 = vcmp.ge.f32.partialorder %v916, 0.0
      %vm1053 = vcmp.ge.f32.partialorder %v918, 0.0
      %vm1054 = vcmp.ge.f32.partialorder %v920, 0.0
      %vm1055 = vcmp.ge.f32.partialorder %v922, 0.0
      %vm1056 = vcmp.ge.f32.partialorder %v926, 0.0
      %vm1057 = vcmp.ge.f32.partialorder %v928, 0.0
      %vm1058 = vcmp.ge.f32.partialorder %v930, 0.0
      %vm1059 = vcmp.ge.f32.partialorder %v932, 0.0
      %vm1060 = vcmp.ge.f32.partialorder %v936, 0.0
      %vm1061 = vcmp.ge.f32.partialorder %v938, 0.0
      %vm1062 = vcmp.ge.f32.partialorder %v940, 0.0
      %vm1063 = vcmp.ge.f32.partialorder %v942, 0.0
      %vm1064 = vcmp.ge.f32.partialorder %v946, 0.0
      %vm1065 = vcmp.ge.f32.partialorder %v948, 0.0
      %vm1066 = vcmp.ge.f32.partialorder %v950, 0.0
      %vm1067 = vcmp.ge.f32.partialorder %v952, 0.0
      %vm1068 = vcmp.ge.f32.partialorder %v956, 0.0
      %vm1069 = vcmp.ge.f32.partialorder %v958, 0.0
      %vm1070 = vcmp.ge.f32.partialorder %v960, 0.0
      %vm1071 = vcmp.ge.f32.partialorder %v962, 0.0
      %vm1072 = vcmp.ge.f32.partialorder %v966, 0.0
      %vm1073 = vcmp.ge.f32.partialorder %v968, 0.0
      %vm1074 = vcmp.ge.f32.partialorder %v970, 0.0
      %vm1075 = vcmp.ge.f32.partialorder %v972, 0.0
      %vm1076 = vcmp.ge.f32.partialorder %v976, 0.0
      %vm1077 = vcmp.ge.f32.partialorder %v978, 0.0
      %vm1078 = vcmp.ge.f32.partialorder %v980, 0.0
      %vm1079 = vcmp.ge.f32.partialorder %v982, 0.0
      %vm1080 = vcmp.ge.f32.partialorder %v986, 0.0
      %vm1081 = vcmp.ge.f32.partialorder %v988, 0.0
      %vm1082 = vcmp.ge.f32.partialorder %v990, 0.0
      %vm1083 = vcmp.ge.f32.partialorder %v992, 0.0
      %vm1084 = vcmp.ge.f32.partialorder %v996, 0.0
      %vm1085 = vcmp.ge.f32.partialorder %v998, 0.0
      %vm1086 = vcmp.ge.f32.partialorder %v1000, 0.0
      %vm1087 = vcmp.ge.f32.partialorder %v1002, 0.0
      %vm1088 = vcmp.ge.f32.partialorder %v1006, 0.0
      %vm1089 = vcmp.ge.f32.partialorder %v1008, 0.0
      %vm1090 = vcmp.ge.f32.partialorder %v1010, 0.0
      %vm1091 = vcmp.ge.f32.partialorder %v1012, 0.0
      %vm1092 = vcmp.ge.f32.partialorder %v1016, 0.0
      %vm1093 = vcmp.ge.f32.partialorder %v1018, 0.0
      %vm1094 = vcmp.ge.f32.partialorder %v1020, 0.0
      %vm1095 = vcmp.ge.f32.partialorder %v1022, 0.0
      %v1096 = vmul.f32 %v846, 0.01
      %v1097 = vmul.f32 %v848, 0.01
      %v1098 = vmul.f32 %v850, 0.01
      %v1099 = vmul.f32 %v852, 0.01
      %v1100 = vmul.f32 %v856, 0.01
      %v1101 = vmul.f32 %v858, 0.01
      %v1102 = vmul.f32 %v860, 0.01
      %v1103 = vmul.f32 %v862, 0.01
      %v1104 = vmul.f32 %v866, 0.01
      %v1105 = vmul.f32 %v868, 0.01
      %v1106 = vmul.f32 %v870, 0.01
      %v1107 = vmul.f32 %v872, 0.01
      %v1108 = vmul.f32 %v876, 0.01
      %v1109 = vmul.f32 %v878, 0.01
      %v1110 = vmul.f32 %v880, 0.01
      %v1111 = vmul.f32 %v882, 0.01
      %v1112 = vmul.f32 %v886, 0.01
      %v1113 = vmul.f32 %v888, 0.01
      %v1114 = vmul.f32 %v890, 0.01
      %v1115 = vmul.f32 %v892, 0.01
      %v1116 = vmul.f32 %v896, 0.01
      %v1117 = vmul.f32 %v898, 0.01
      %v1118 = vmul.f32 %v900, 0.01
      %v1119 = vmul.f32 %v902, 0.01
      %v1120 = vmul.f32 %v906, 0.01
      %v1121 = vmul.f32 %v908, 0.01
      %v1122 = vmul.f32 %v910, 0.01
      %v1123 = vmul.f32 %v912, 0.01
      %v1124 = vmul.f32 %v916, 0.01
      %v1125 = vmul.f32 %v918, 0.01
      %v1126 = vmul.f32 %v920, 0.01
      %v1127 = vmul.f32 %v922, 0.01
      %v1128 = vmul.f32 %v926, 0.01
      %v1129 = vmul.f32 %v928, 0.01
      %v1130 = vmul.f32 %v930, 0.01
      %v1131 = vmul.f32 %v932, 0.01
      %v1132 = vmul.f32 %v936, 0.01
      %v1133 = vmul.f32 %v938, 0.01
      %v1134 = vmul.f32 %v940, 0.01
      %v1135 = vmul.f32 %v942, 0.01
      %v1136 = vmul.f32 %v946, 0.01
      %v1137 = vmul.f32 %v948, 0.01
      %v1138 = vmul.f32 %v950, 0.01
      %v1139 = vmul.f32 %v952, 0.01
      %v1140 = vmul.f32 %v956, 0.01
      %v1141 = vmul.f32 %v958, 0.01
      %v1142 = vmul.f32 %v960, 0.01
      %v1143 = vmul.f32 %v962, 0.01
      %v1144 = vmul.f32 %v966, 0.01
      %v1145 = vmul.f32 %v968, 0.01
      %v1146 = vmul.f32 %v970, 0.01
      %v1147 = vmul.f32 %v972, 0.01
      %v1148 = vmul.f32 %v976, 0.01
      %v1149 = vmul.f32 %v978, 0.01
      %v1150 = vmul.f32 %v980, 0.01
      %v1151 = vmul.f32 %v982, 0.01
      %v1152 = vmul.f32 %v986, 0.01
      %v1153 = vmul.f32 %v988, 0.01
      %v1154 = vmul.f32 %v990, 0.01
      %v1155 = vmul.f32 %v992, 0.01
      %v1156 = vmul.f32 %v996, 0.01
      %v1157 = vmul.f32 %v998, 0.01
      %v1158 = vmul.f32 %v1000, 0.01
      %v1159 = vmul.f32 %v1002, 0.01
      %v1160 = vmul.f32 %v1006, 0.01
      %v1161 = vmul.f32 %v1008, 0.01
      %v1162 = vmul.f32 %v1010, 0.01
      %v1163 = vmul.f32 %v1012, 0.01
      %v1164 = vmul.f32 %v1016, 0.01
      %v1165 = vmul.f32 %v1018, 0.01
      %v1166 = vmul.f32 %v1020, 0.01
      %v1167 = vmul.f32 %v1022, 0.01
      %v1168 = vsel %vm1024, %v846, %v1096
      %v1169 = vsel %vm1025, %v848, %v1097
      %v1170 = vsel %vm1026, %v850, %v1098
      %v1171 = vsel %vm1027, %v852, %v1099
      %v1172 = vsel %vm1028, %v856, %v1100
      %v1173 = vsel %vm1029, %v858, %v1101
      %v1174 = vsel %vm1030, %v860, %v1102
      %v1175 = vsel %vm1031, %v862, %v1103
      %v1176 = vsel %vm1032, %v866, %v1104
      %v1177 = vsel %vm1033, %v868, %v1105
      %v1178 = vsel %vm1034, %v870, %v1106
      %v1179 = vsel %vm1035, %v872, %v1107
      %v1180 = vsel %vm1036, %v876, %v1108
      %v1181 = vsel %vm1037, %v878, %v1109
      %v1182 = vsel %vm1038, %v880, %v1110
      %v1183 = vsel %vm1039, %v882, %v1111
      %v1184 = vsel %vm1040, %v886, %v1112
      %v1185 = vsel %vm1041, %v888, %v1113
      %v1186 = vsel %vm1042, %v890, %v1114
      %v1187 = vsel %vm1043, %v892, %v1115
      %v1188 = vsel %vm1044, %v896, %v1116
      %v1189 = vsel %vm1045, %v898, %v1117
      %v1190 = vsel %vm1046, %v900, %v1118
      %v1191 = vsel %vm1047, %v902, %v1119
      %v1192 = vsel %vm1048, %v906, %v1120
      %v1193 = vsel %vm1049, %v908, %v1121
      %v1194 = vsel %vm1050, %v910, %v1122
      %v1195 = vsel %vm1051, %v912, %v1123
      %v1196 = vsel %vm1052, %v916, %v1124
      %v1197 = vsel %vm1053, %v918, %v1125
      %v1198 = vsel %vm1054, %v920, %v1126
      %v1199 = vsel %vm1055, %v922, %v1127
      %v1200 = vsel %vm1056, %v926, %v1128
      %v1201 = vsel %vm1057, %v928, %v1129
      %v1202 = vsel %vm1058, %v930, %v1130
      %v1203 = vsel %vm1059, %v932, %v1131
      %v1204 = vsel %vm1060, %v936, %v1132
      %v1205 = vsel %vm1061, %v938, %v1133
      %v1206 = vsel %vm1062, %v940, %v1134
      %v1207 = vsel %vm1063, %v942, %v1135
      %v1208 = vsel %vm1064, %v946, %v1136
      %v1209 = vsel %vm1065, %v948, %v1137
      %v1210 = vsel %vm1066, %v950, %v1138
      %v1211 = vsel %vm1067, %v952, %v1139
      %v1212 = vsel %vm1068, %v956, %v1140
      %v1213 = vsel %vm1069, %v958, %v1141
      %v1214 = vsel %vm1070, %v960, %v1142
      %v1215 = vsel %vm1071, %v962, %v1143
      %v1216 = vsel %vm1072, %v966, %v1144
      %v1217 = vsel %vm1073, %v968, %v1145
      %v1218 = vsel %vm1074, %v970, %v1146
      %v1219 = vsel %vm1075, %v972, %v1147
      %v1220 = vsel %vm1076, %v976, %v1148
      %v1221 = vsel %vm1077, %v978, %v1149
      %v1222 = vsel %vm1078, %v980, %v1150
      %v1223 = vsel %vm1079, %v982, %v1151
      %v1224 = vsel %vm1080, %v986, %v1152
      %v1225 = vsel %vm1081, %v988, %v1153
      %v1226 = vsel %vm1082, %v990, %v1154
      %v1227 = vsel %vm1083, %v992, %v1155
      %v1228 = vsel %vm1084, %v996, %v1156
      %v1229 = vsel %vm1085, %v998, %v1157
      %v1230 = vsel %vm1086, %v1000, %v1158
      %v1231 = vsel %vm1087, %v1002, %v1159
      %v1232 = vsel %vm1088, %v1006, %v1160
      %v1233 = vsel %vm1089, %v1008, %v1161
      %v1234 = vsel %vm1090, %v1010, %v1162
      %v1235 = vsel %vm1091, %v1012, %v1163
      %v1236 = vsel %vm1092, %v1016, %v1164
      %v1237 = vsel %vm1093, %v1018, %v1165
      %v1238 = vsel %vm1094, %v1020, %v1166
      %v1239 = vsel %vm1095, %v1022, %v1167
      %v1240 = vpack.c.bf16 %v1170, %v1168
      %v1241 = vpack.c.bf16 %v1171, %v1169
      %v1242 = vpack.c.bf16 %v1174, %v1172
      %v1243 = vpack.c.bf16 %v1175, %v1173
      %v1244 = vpack.c.bf16 %v1178, %v1176
      %v1245 = vpack.c.bf16 %v1179, %v1177
      %v1246 = vpack.c.bf16 %v1182, %v1180
      %v1247 = vpack.c.bf16 %v1183, %v1181
      %v1248 = vpack.c.bf16 %v1186, %v1184
      %v1249 = vpack.c.bf16 %v1187, %v1185
      %v1250 = vpack.c.bf16 %v1190, %v1188
      %v1251 = vpack.c.bf16 %v1191, %v1189
      %v1252 = vpack.c.bf16 %v1194, %v1192
      %v1253 = vpack.c.bf16 %v1195, %v1193
      %v1254 = vpack.c.bf16 %v1198, %v1196
      %v1255 = vpack.c.bf16 %v1199, %v1197
      %v1256 = vpack.c.bf16 %v1202, %v1200
      %v1257 = vpack.c.bf16 %v1203, %v1201
      %v1258 = vpack.c.bf16 %v1206, %v1204
      %v1259 = vpack.c.bf16 %v1207, %v1205
      %v1260 = vpack.c.bf16 %v1210, %v1208
      %v1261 = vpack.c.bf16 %v1211, %v1209
      %v1262 = vpack.c.bf16 %v1214, %v1212
      %v1263 = vpack.c.bf16 %v1215, %v1213
      %v1264 = vpack.c.bf16 %v1218, %v1216
      %v1265 = vpack.c.bf16 %v1219, %v1217
      %v1266 = vpack.c.bf16 %v1222, %v1220
      %v1267 = vpack.c.bf16 %v1223, %v1221
      %v1268 = vpack.c.bf16 %v1226, %v1224
      %v1269 = vpack.c.bf16 %v1227, %v1225
      %v1270 = vpack.c.bf16 %v1230, %v1228
      %v1271 = vpack.c.bf16 %v1231, %v1229
      %v1272 = vpack.c.bf16 %v1234, %v1232
      %v1273 = vpack.c.bf16 %v1235, %v1233
      %v1274 = vpack.c.bf16 %v1238, %v1236
      %v1275 = vpack.c.bf16 %v1239, %v1237
      %v1276 = vld [vmem:[%s3] sm:$0xf]
      %v1277 = vld [vmem:[%s3 + $0x4] sm:$0xf]
      %v1278 = vld [vmem:[%s3 + $0x8] sm:$0xf]
      %v1279 = vld [vmem:[%s3 + $0xc] sm:$0xf]
      %v1280 = vld [vmem:[%s3 + $0x10] sm:$0xf]
      %v1281 = vld [vmem:[%s3 + $0x14] sm:$0xf]
      %v1282 = vld [vmem:[%s3 + $0x18] sm:$0xf]
      %v1283 = vld [vmem:[%s3 + $0x1c] sm:$0xf]
      %v1284 = vld [vmem:[%s3 + $0x20] sm:$0xf]
      %v1285 = vld [vmem:[%s3 + $0x24] sm:$0xf]
      %v1286 = vld [vmem:[%s3 + $0x28] sm:$0xf]
      %v1287 = vld [vmem:[%s3 + $0x2c] sm:$0xf]
      %v1288 = vld [vmem:[%s3 + $0x30] sm:$0xf]
      %v1289 = vld [vmem:[%s3 + $0x34] sm:$0xf]
      %v1290 = vld [vmem:[%s3 + $0x38] sm:$0xf]
      %v1291 = vld [vmem:[%s3 + $0x3c] sm:$0xf]
      %v1292 = vld [vmem:[%s3 + $0x40] sm:$0xf]
      %v1293 = vld [vmem:[%s3 + $0x44] sm:$0xf]
      %v1294 = vld [vmem:[%s3 + $0x48] sm:$0xf]
      %v1295 = vld [vmem:[%s3 + $0x4c] sm:$0xf]
      %v1296 = vld [vmem:[%s3 + $0x50] sm:$0xf]
      %v1297 = vld [vmem:[%s3 + $0x54] sm:$0xf]
      %v1298 = vld [vmem:[%s3 + $0x58] sm:$0xf]
      %v1299 = vld [vmem:[%s3 + $0x5c] sm:$0xf]
      %v1300 = vld [vmem:[%s3 + $0x60] sm:$0xf]
      %v1301 = vld [vmem:[%s3 + $0x64] sm:$0xf]
      %v1302 = vld [vmem:[%s3 + $0x68] sm:$0xf]
      %v1303 = vld [vmem:[%s3 + $0x6c] sm:$0xf]
      %v1304 = vld [vmem:[%s3 + $0x70] sm:$0xf]
      %v1305 = vld [vmem:[%s3 + $0x74] sm:$0xf]
      %v1306 = vld [vmem:[%s3 + $0x78] sm:$0xf]
      %v1307 = vld [vmem:[%s3 + $0x7c] sm:$0xf]
      %v1308 = vld [vmem:[%s4] sm:$0x1]
      %v1310 = vlaneseq
      %v1311 = vshrl.u32 %v1310, 7
      %v1312 = vsub.s32 0, %v1311
      %v1313 = vrot.slane %v1308, %v1312
      %v1347 = vunpack.c.l.b16 %v1276
      %v1348 = vunpack.c.l.b16 %v1277
      %v1349 = vunpack.c.l.b16 %v1278
      %v1350 = vunpack.c.l.b16 %v1279
      %v1351 = vunpack.c.l.b16 %v1280
      %v1352 = vunpack.c.l.b16 %v1281
      %v1353 = vunpack.c.l.b16 %v1282
      %v1354 = vunpack.c.l.b16 %v1283
      %v1355 = vunpack.c.l.b16 %v1284
      %v1356 = vunpack.c.l.b16 %v1285
      %v1357 = vunpack.c.l.b16 %v1286
      %v1358 = vunpack.c.l.b16 %v1287
      %v1359 = vunpack.c.l.b16 %v1288
      %v1360 = vunpack.c.l.b16 %v1289
      %v1361 = vunpack.c.l.b16 %v1290
      %v1362 = vunpack.c.l.b16 %v1291
      %v1363 = vunpack.c.l.b16 %v1292
      %v1364 = vunpack.c.l.b16 %v1293
      %v1365 = vunpack.c.l.b16 %v1294
      %v1366 = vunpack.c.l.b16 %v1295
      %v1367 = vunpack.c.l.b16 %v1296
      %v1368 = vunpack.c.l.b16 %v1297
      %v1369 = vunpack.c.l.b16 %v1298
      %v1370 = vunpack.c.l.b16 %v1299
      %v1371 = vunpack.c.l.b16 %v1300
      %v1372 = vunpack.c.l.b16 %v1301
      %v1373 = vunpack.c.l.b16 %v1302
      %v1374 = vunpack.c.l.b16 %v1303
      %v1375 = vunpack.c.l.b16 %v1304
      %v1376 = vunpack.c.l.b16 %v1305
      %v1377 = vunpack.c.l.b16 %v1306
      %v1378 = vunpack.c.l.b16 %v1307
      %v1379 = vpack.c.b16 %v1348, %v1347
      %v1380 = vpack.c.b16 %v1350, %v1349
      %v1381 = vpack.c.b16 %v1352, %v1351
      %v1382 = vpack.c.b16 %v1354, %v1353
      %v1383 = vpack.c.b16 %v1356, %v1355
      %v1384 = vpack.c.b16 %v1358, %v1357
      %v1385 = vpack.c.b16 %v1360, %v1359
      %v1386 = vpack.c.b16 %v1362, %v1361
      %v1387 = vpack.c.b16 %v1364, %v1363
      %v1388 = vpack.c.b16 %v1366, %v1365
      %v1389 = vpack.c.b16 %v1368, %v1367
      %v1390 = vpack.c.b16 %v1370, %v1369
      %v1391 = vpack.c.b16 %v1372, %v1371
      %v1392 = vpack.c.b16 %v1374, %v1373
      %v1393 = vpack.c.b16 %v1376, %v1375
      %v1394 = vpack.c.b16 %v1378, %v1377
      %1411 = vmatprep.subr.bf16.mxu0 0
      %1412 = vmatpush1.bf16.msra.mxu0 %v1386
      %1413 = vmatprep.subr.bf16.mxu0 0
      %1414 = vmatpush1.bf16.msra.mxu0 %v1385
      %1415 = vmatprep.subr.bf16.mxu0 0
      %1416 = vmatpush1.bf16.msra.mxu0 %v1384
      %1417 = vmatprep.subr.bf16.mxu0 0
      %1418 = vmatpush1.bf16.msra.mxu0 %v1383
      %1419 = vmatprep.subr.bf16.mxu0 0
      %1420 = vmatpush1.bf16.msra.mxu0 %v1382
      %1421 = vmatprep.subr.bf16.mxu0 0
      %1422 = vmatpush1.bf16.msra.mxu0 %v1381
      %1423 = vmatprep.subr.bf16.mxu0 0
      %1424 = vmatpush1.bf16.msra.mxu0 %v1380
      %1425 = vmatprep.subr.bf16.mxu0 0
      %1426 = vmatpush1.bf16.msra.mxu0 %v1379
      %1427 = vmatprep.subr.bf16.mxu0 0
      %1428 = vmatpush2.bf16.msra.mxu0 %v1394
      %1429 = vmatprep.subr.bf16.mxu0 0
      %1430 = vmatpush2.bf16.msra.mxu0 %v1393
      %1431 = vmatprep.subr.bf16.mxu0 0
      %1432 = vmatpush2.bf16.msra.mxu0 %v1392
      %1433 = vmatprep.subr.bf16.mxu0 0
      %1434 = vmatpush2.bf16.msra.mxu0 %v1391
      %1435 = vmatprep.subr.bf16.mxu0 0
      %1436 = vmatpush2.bf16.msra.mxu0 %v1390
      %1437 = vmatprep.subr.bf16.mxu0 0
      %1438 = vmatpush2.bf16.msra.mxu0 %v1389
      %1439 = vmatprep.subr.bf16.mxu0 0
      %1440 = vmatpush2.bf16.msra.mxu0 %v1388
      %1441 = vmatprep.subr.bf16.mxu0 0
      %1442 = vmatpush2.bf16.msra.mxu0 %v1387
      %1443 = vmatprep.mubr.bf16.mxu0 %v1241
      %1444 = vmatmul.mubr.bf16.gmra.mxu0 %v1240
      %v1445 = vpop.f32.mrf.mxu0
      %v1446 = vadd.f32 %v1313, %v1445
      %v1447 = vpop.f32.mrf.mxu0
      %v1448 = vpop.f32.mrf.mxu0
      %v1449 = vadd.f32 %v1313, %v1448
      %v1450 = vpop.f32.mrf.mxu0
      %1451 = vmatprep.mubr.bf16.mxu0 %v1243
      %1452 = vmatmul.mubr.bf16.gmra.mxu0 %v1242
      %v1453 = vpop.f32.mrf.mxu0
      %v1454 = vadd.f32 %v1313, %v1453
      %v1455 = vpop.f32.mrf.mxu0
      %v1456 = vpop.f32.mrf.mxu0
      %v1457 = vadd.f32 %v1313, %v1456
      %v1458 = vpop.f32.mrf.mxu0
      %1459 = vmatprep.mubr.bf16.mxu0 %v1245
      %1460 = vmatmul.mubr.bf16.gmra.mxu0 %v1244
      %v1461 = vpop.f32.mrf.mxu0
      %v1462 = vadd.f32 %v1313, %v1461
      %v1463 = vpop.f32.mrf.mxu0
      %v1464 = vpop.f32.mrf.mxu0
      %v1465 = vadd.f32 %v1313, %v1464
      %v1466 = vpop.f32.mrf.mxu0
      %1467 = vmatprep.mubr.bf16.mxu0 %v1247
      %1468 = vmatmul.mubr.bf16.gmra.mxu0 %v1246
      %v1469 = vpop.f32.mrf.mxu0
      %v1470 = vadd.f32 %v1313, %v1469
      %v1471 = vpop.f32.mrf.mxu0
      %v1472 = vpop.f32.mrf.mxu0
      %v1473 = vadd.f32 %v1313, %v1472
      %v1474 = vpop.f32.mrf.mxu0
      %1475 = vmatprep.mubr.bf16.mxu0 %v1249
      %1476 = vmatmul.mubr.bf16.gmra.mxu0 %v1248
      %v1477 = vpop.f32.mrf.mxu0
      %v1478 = vadd.f32 %v1313, %v1477
      %v1479 = vpop.f32.mrf.mxu0
      %v1480 = vpop.f32.mrf.mxu0
      %v1481 = vadd.f32 %v1313, %v1480
      %v1482 = vpop.f32.mrf.mxu0
      %1483 = vmatprep.mubr.bf16.mxu0 %v1251
      %1484 = vmatmul.mubr.bf16.gmra.mxu0 %v1250
      %v1485 = vpop.f32.mrf.mxu0
      %v1486 = vadd.f32 %v1313, %v1485
      %v1487 = vpop.f32.mrf.mxu0
      %v1488 = vpop.f32.mrf.mxu0
      %v1489 = vadd.f32 %v1313, %v1488
      %v1490 = vpop.f32.mrf.mxu0
      %1491 = vmatprep.mubr.bf16.mxu0 %v1253
      %1492 = vmatmul.mubr.bf16.gmra.mxu0 %v1252
      %v1493 = vpop.f32.mrf.mxu0
      %v1494 = vadd.f32 %v1313, %v1493
      %v1495 = vpop.f32.mrf.mxu0
      %v1496 = vpop.f32.mrf.mxu0
      %v1497 = vadd.f32 %v1313, %v1496
      %v1498 = vpop.f32.mrf.mxu0
      %1499 = vmatprep.mubr.bf16.mxu0 %v1255
      %1500 = vmatmul.mubr.bf16.gmra.mxu0 %v1254
      %v1501 = vpop.f32.mrf.mxu0
      %v1502 = vadd.f32 %v1313, %v1501
      %v1503 = vpop.f32.mrf.mxu0
      %v1504 = vpop.f32.mrf.mxu0
      %v1505 = vadd.f32 %v1313, %v1504
      %v1506 = vpop.f32.mrf.mxu0
      %1507 = vmatprep.mubr.bf16.mxu0 %v1257
      %1508 = vmatmul.mubr.bf16.gmra.mxu0 %v1256
      %v1509 = vpop.f32.mrf.mxu0
      %v1510 = vadd.f32 %v1313, %v1509
      %v1511 = vpop.f32.mrf.mxu0
      %v1512 = vpop.f32.mrf.mxu0
      %v1513 = vadd.f32 %v1313, %v1512
      %v1514 = vpop.f32.mrf.mxu0
      %1515 = vmatprep.mubr.bf16.mxu0 %v1259
      %1516 = vmatmul.mubr.bf16.gmra.mxu0 %v1258
      %v1517 = vpop.f32.mrf.mxu0
      %v1518 = vadd.f32 %v1313, %v1517
      %v1519 = vpop.f32.mrf.mxu0
      %v1520 = vpop.f32.mrf.mxu0
      %v1521 = vadd.f32 %v1313, %v1520
      %v1522 = vpop.f32.mrf.mxu0
      %1523 = vmatprep.mubr.bf16.mxu0 %v1261
      %1524 = vmatmul.mubr.bf16.gmra.mxu0 %v1260
      %v1525 = vpop.f32.mrf.mxu0
      %v1526 = vadd.f32 %v1313, %v1525
      %v1527 = vpop.f32.mrf.mxu0
      %v1528 = vpop.f32.mrf.mxu0
      %v1529 = vadd.f32 %v1313, %v1528
      %v1530 = vpop.f32.mrf.mxu0
      %1531 = vmatprep.mubr.bf16.mxu0 %v1263
      %1532 = vmatmul.mubr.bf16.gmra.mxu0 %v1262
      %v1533 = vpop.f32.mrf.mxu0
      %v1534 = vadd.f32 %v1313, %v1533
      %v1535 = vpop.f32.mrf.mxu0
      %v1536 = vpop.f32.mrf.mxu0
      %v1537 = vadd.f32 %v1313, %v1536
      %v1538 = vpop.f32.mrf.mxu0
      %1539 = vmatprep.mubr.bf16.mxu0 %v1265
      %1540 = vmatmul.mubr.bf16.gmra.mxu0 %v1264
      %v1541 = vpop.f32.mrf.mxu0
      %v1542 = vadd.f32 %v1313, %v1541
      %v1543 = vpop.f32.mrf.mxu0
      %v1544 = vpop.f32.mrf.mxu0
      %v1545 = vadd.f32 %v1313, %v1544
      %v1546 = vpop.f32.mrf.mxu0
      %1547 = vmatprep.mubr.bf16.mxu0 %v1267
      %1548 = vmatmul.mubr.bf16.gmra.mxu0 %v1266
      %v1549 = vpop.f32.mrf.mxu0
      %v1550 = vadd.f32 %v1313, %v1549
      %v1551 = vpop.f32.mrf.mxu0
      %v1552 = vpop.f32.mrf.mxu0
      %v1553 = vadd.f32 %v1313, %v1552
      %v1554 = vpop.f32.mrf.mxu0
      %1555 = vmatprep.mubr.bf16.mxu0 %v1269
      %1556 = vmatmul.mubr.bf16.gmra.mxu0 %v1268
      %v1557 = vpop.f32.mrf.mxu0
      %v1558 = vadd.f32 %v1313, %v1557
      %v1559 = vpop.f32.mrf.mxu0
      %v1560 = vpop.f32.mrf.mxu0
      %v1561 = vadd.f32 %v1313, %v1560
      %v1562 = vpop.f32.mrf.mxu0
      %1563 = vmatprep.mubr.bf16.mxu0 %v1271
      %1564 = vmatmul.mubr.bf16.gmra.mxu0 %v1270
      %v1565 = vpop.f32.mrf.mxu0
      %v1566 = vadd.f32 %v1313, %v1565
      %v1567 = vpop.f32.mrf.mxu0
      %v1568 = vpop.f32.mrf.mxu0
      %v1569 = vadd.f32 %v1313, %v1568
      %v1570 = vpop.f32.mrf.mxu0
      %1571 = vmatprep.mubr.bf16.mxu0 %v1273
      %1572 = vmatmul.mubr.bf16.gmra.mxu0 %v1272
      %v1573 = vpop.f32.mrf.mxu0
      %v1574 = vadd.f32 %v1313, %v1573
      %v1575 = vpop.f32.mrf.mxu0
      %v1576 = vpop.f32.mrf.mxu0
      %v1577 = vadd.f32 %v1313, %v1576
      %v1578 = vpop.f32.mrf.mxu0
      %1579 = vmatprep.mubr.bf16.mxu0 %v1275
      %1580 = vmatmul.mubr.bf16.gmra.mxu0 %v1274
      %v1581 = vpop.f32.mrf.mxu0
      %v1582 = vadd.f32 %v1313, %v1581
      %v1583 = vpop.f32.mrf.mxu0
      %v1584 = vpop.f32.mrf.mxu0
      %v1585 = vadd.f32 %v1313, %v1584
      %v1586 = vpop.f32.mrf.mxu0
      %1587 = vdwg.mxu0
      %vm1588 = vcmp.ge.f32.partialorder %v1446, 0.0
      %vm1589 = vcmp.ge.f32.partialorder %v1449, 0.0
      %vm1590 = vcmp.ge.f32.partialorder %v1454, 0.0
      %vm1591 = vcmp.ge.f32.partialorder %v1457, 0.0
      %vm1592 = vcmp.ge.f32.partialorder %v1462, 0.0
      %vm1593 = vcmp.ge.f32.partialorder %v1465, 0.0
      %vm1594 = vcmp.ge.f32.partialorder %v1470, 0.0
      %vm1595 = vcmp.ge.f32.partialorder %v1473, 0.0
      %vm1596 = vcmp.ge.f32.partialorder %v1478, 0.0
      %vm1597 = vcmp.ge.f32.partialorder %v1481, 0.0
      %vm1598 = vcmp.ge.f32.partialorder %v1486, 0.0
      %vm1599 = vcmp.ge.f32.partialorder %v1489, 0.0
      %vm1600 = vcmp.ge.f32.partialorder %v1494, 0.0
      %vm1601 = vcmp.ge.f32.partialorder %v1497, 0.0
      %vm1602 = vcmp.ge.f32.partialorder %v1502, 0.0
      %vm1603 = vcmp.ge.f32.partialorder %v1505, 0.0
      %vm1604 = vcmp.ge.f32.partialorder %v1510, 0.0
      %vm1605 = vcmp.ge.f32.partialorder %v1513, 0.0
      %vm1606 = vcmp.ge.f32.partialorder %v1518, 0.0
      %vm1607 = vcmp.ge.f32.partialorder %v1521, 0.0
      %vm1608 = vcmp.ge.f32.partialorder %v1526, 0.0
      %vm1609 = vcmp.ge.f32.partialorder %v1529, 0.0
      %vm1610 = vcmp.ge.f32.partialorder %v1534, 0.0
      %vm1611 = vcmp.ge.f32.partialorder %v1537, 0.0
      %vm1612 = vcmp.ge.f32.partialorder %v1542, 0.0
      %vm1613 = vcmp.ge.f32.partialorder %v1545, 0.0
      %vm1614 = vcmp.ge.f32.partialorder %v1550, 0.0
      %vm1615 = vcmp.ge.f32.partialorder %v1553, 0.0
      %vm1616 = vcmp.ge.f32.partialorder %v1558, 0.0
      %vm1617 = vcmp.ge.f32.partialorder %v1561, 0.0
      %vm1618 = vcmp.ge.f32.partialorder %v1566, 0.0
      %vm1619 = vcmp.ge.f32.partialorder %v1569, 0.0
      %vm1620 = vcmp.ge.f32.partialorder %v1574, 0.0
      %vm1621 = vcmp.ge.f32.partialorder %v1577, 0.0
      %vm1622 = vcmp.ge.f32.partialorder %v1582, 0.0
      %vm1623 = vcmp.ge.f32.partialorder %v1585, 0.0
      %v1624 = vmul.f32 %v1446, 0.01
      %v1625 = vmul.f32 %v1449, 0.01
      %v1626 = vmul.f32 %v1454, 0.01
      %v1627 = vmul.f32 %v1457, 0.01
      %v1628 = vmul.f32 %v1462, 0.01
      %v1629 = vmul.f32 %v1465, 0.01
      %v1630 = vmul.f32 %v1470, 0.01
      %v1631 = vmul.f32 %v1473, 0.01
      %v1632 = vmul.f32 %v1478, 0.01
      %v1633 = vmul.f32 %v1481, 0.01
      %v1634 = vmul.f32 %v1486, 0.01
      %v1635 = vmul.f32 %v1489, 0.01
      %v1636 = vmul.f32 %v1494, 0.01
      %v1637 = vmul.f32 %v1497, 0.01
      %v1638 = vmul.f32 %v1502, 0.01
      %v1639 = vmul.f32 %v1505, 0.01
      %v1640 = vmul.f32 %v1510, 0.01
      %v1641 = vmul.f32 %v1513, 0.01
      %v1642 = vmul.f32 %v1518, 0.01
      %v1643 = vmul.f32 %v1521, 0.01
      %v1644 = vmul.f32 %v1526, 0.01
      %v1645 = vmul.f32 %v1529, 0.01
      %v1646 = vmul.f32 %v1534, 0.01
      %v1647 = vmul.f32 %v1537, 0.01
      %v1648 = vmul.f32 %v1542, 0.01
      %v1649 = vmul.f32 %v1545, 0.01
      %v1650 = vmul.f32 %v1550, 0.01
      %v1651 = vmul.f32 %v1553, 0.01
      %v1652 = vmul.f32 %v1558, 0.01
      %v1653 = vmul.f32 %v1561, 0.01
      %v1654 = vmul.f32 %v1566, 0.01
      %v1655 = vmul.f32 %v1569, 0.01
      %v1656 = vmul.f32 %v1574, 0.01
      %v1657 = vmul.f32 %v1577, 0.01
      %v1658 = vmul.f32 %v1582, 0.01
      %v1659 = vmul.f32 %v1585, 0.01
      %v1660 = vsel %vm1588, %v1446, %v1624
      %v1661 = vsel %vm1589, %v1449, %v1625
      %v1662 = vsel %vm1590, %v1454, %v1626
      %v1663 = vsel %vm1591, %v1457, %v1627
      %v1664 = vsel %vm1592, %v1462, %v1628
      %v1665 = vsel %vm1593, %v1465, %v1629
      %v1666 = vsel %vm1594, %v1470, %v1630
      %v1667 = vsel %vm1595, %v1473, %v1631
      %v1668 = vsel %vm1596, %v1478, %v1632
      %v1669 = vsel %vm1597, %v1481, %v1633
      %v1670 = vsel %vm1598, %v1486, %v1634
      %v1671 = vsel %vm1599, %v1489, %v1635
      %v1672 = vsel %vm1600, %v1494, %v1636
      %v1673 = vsel %vm1601, %v1497, %v1637
      %v1674 = vsel %vm1602, %v1502, %v1638
      %v1675 = vsel %vm1603, %v1505, %v1639
      %v1676 = vsel %vm1604, %v1510, %v1640
      %v1677 = vsel %vm1605, %v1513, %v1641
      %v1678 = vsel %vm1606, %v1518, %v1642
      %v1679 = vsel %vm1607, %v1521, %v1643
      %v1680 = vsel %vm1608, %v1526, %v1644
      %v1681 = vsel %vm1609, %v1529, %v1645
      %v1682 = vsel %vm1610, %v1534, %v1646
      %v1683 = vsel %vm1611, %v1537, %v1647
      %v1684 = vsel %vm1612, %v1542, %v1648
      %v1685 = vsel %vm1613, %v1545, %v1649
      %v1686 = vsel %vm1614, %v1550, %v1650
      %v1687 = vsel %vm1615, %v1553, %v1651
      %v1688 = vsel %vm1616, %v1558, %v1652
      %v1689 = vsel %vm1617, %v1561, %v1653
      %v1690 = vsel %vm1618, %v1566, %v1654
      %v1691 = vsel %vm1619, %v1569, %v1655
      %v1692 = vsel %vm1620, %v1574, %v1656
      %v1693 = vsel %vm1621, %v1577, %v1657
      %v1694 = vsel %vm1622, %v1582, %v1658
      %v1695 = vsel %vm1623, %v1585, %v1659
      %v1696 = vpack.c.bf16 %v1661, %v1660
      %v1697 = vpack.c.bf16 %v1663, %v1662
      %v1698 = vpack.c.bf16 %v1665, %v1664
      %v1699 = vpack.c.bf16 %v1667, %v1666
      %v1700 = vpack.c.bf16 %v1669, %v1668
      %v1701 = vpack.c.bf16 %v1671, %v1670
      %v1702 = vpack.c.bf16 %v1673, %v1672
      %v1703 = vpack.c.bf16 %v1675, %v1674
      %v1704 = vpack.c.bf16 %v1677, %v1676
      %v1705 = vpack.c.bf16 %v1679, %v1678
      %v1706 = vpack.c.bf16 %v1681, %v1680
      %v1707 = vpack.c.bf16 %v1683, %v1682
      %v1708 = vpack.c.bf16 %v1685, %v1684
      %v1709 = vpack.c.bf16 %v1687, %v1686
      %v1710 = vpack.c.bf16 %v1689, %v1688
      %v1711 = vpack.c.bf16 %v1691, %v1690
      %v1712 = vpack.c.bf16 %v1693, %v1692
      %v1713 = vpack.c.bf16 %v1695, %v1694
      %v1714 = vld [vmem:[%s5] sm:$0xf]
      %v1715 = vld [vmem:[%s5 + $0x4] sm:$0xf]
      %v1716 = vld [vmem:[%s5 + $0x8] sm:$0xf]
      %v1717 = vld [vmem:[%s5 + $0xc] sm:$0xf]
      %v1718 = vld [vmem:[%s5 + $0x10] sm:$0xf]
      %v1719 = vld [vmem:[%s5 + $0x14] sm:$0xf]
      %v1720 = vld [vmem:[%s5 + $0x18] sm:$0xf]
      %v1721 = vld [vmem:[%s5 + $0x1c] sm:$0xf]
      %v1722 = vld [vmem:[%s5 + $0x20] sm:$0xf]
      %v1723 = vld [vmem:[%s5 + $0x24] sm:$0xf]
      %v1724 = vld [vmem:[%s5 + $0x28] sm:$0xf]
      %v1725 = vld [vmem:[%s5 + $0x2c] sm:$0xf]
      %v1726 = vld [vmem:[%s5 + $0x30] sm:$0xf]
      %v1727 = vld [vmem:[%s5 + $0x34] sm:$0xf]
      %v1728 = vld [vmem:[%s5 + $0x38] sm:$0xf]
      %v1729 = vld [vmem:[%s5 + $0x3c] sm:$0xf]
      %v1730 = vld [vmem:[%s6] sm:$0x1]
      %v1732 = vlaneseq
      %v1733 = vshrl.u32 %v1732, 7
      %v1734 = vsub.s32 0, %v1733
      %v1735 = vrot.slane %v1730, %v1734
      %v1753 = vunpack.c.l.b16 %v1714
      %v1754 = vunpack.c.l.b16 %v1715
      %v1755 = vunpack.c.l.b16 %v1716
      %v1756 = vunpack.c.l.b16 %v1717
      %v1757 = vunpack.c.l.b16 %v1718
      %v1758 = vunpack.c.l.b16 %v1719
      %v1759 = vunpack.c.l.b16 %v1720
      %v1760 = vunpack.c.l.b16 %v1721
      %v1761 = vunpack.c.l.b16 %v1722
      %v1762 = vunpack.c.l.b16 %v1723
      %v1763 = vunpack.c.l.b16 %v1724
      %v1764 = vunpack.c.l.b16 %v1725
      %v1765 = vunpack.c.l.b16 %v1726
      %v1766 = vunpack.c.l.b16 %v1727
      %v1767 = vunpack.c.l.b16 %v1728
      %v1768 = vunpack.c.l.b16 %v1729
      %v1769 = vpack.c.b16 %v1754, %v1753
      %v1770 = vpack.c.b16 %v1756, %v1755
      %v1771 = vpack.c.b16 %v1758, %v1757
      %v1772 = vpack.c.b16 %v1760, %v1759
      %v1773 = vpack.c.b16 %v1762, %v1761
      %v1774 = vpack.c.b16 %v1764, %v1763
      %v1775 = vpack.c.b16 %v1766, %v1765
      %v1776 = vpack.c.b16 %v1768, %v1767
      %1785 = vmatprep.subr.bf16.mxu0 0
      %1786 = vmatpush1.bf16.msra.mxu0 %v1776
      %1787 = vmatprep.subr.bf16.mxu0 0
      %1788 = vmatpush1.bf16.msra.mxu0 %v1775
      %1789 = vmatprep.subr.bf16.mxu0 0
      %1790 = vmatpush1.bf16.msra.mxu0 %v1774
      %1791 = vmatprep.subr.bf16.mxu0 0
      %1792 = vmatpush1.bf16.msra.mxu0 %v1773
      %1793 = vmatprep.subr.bf16.mxu0 0
      %1794 = vmatpush1.bf16.msra.mxu0 %v1772
      %1795 = vmatprep.subr.bf16.mxu0 0
      %1796 = vmatpush1.bf16.msra.mxu0 %v1771
      %1797 = vmatprep.subr.bf16.mxu0 0
      %1798 = vmatpush1.bf16.msra.mxu0 %v1770
      %1799 = vmatprep.subr.bf16.mxu0 0
      %1800 = vmatpush1.bf16.msra.mxu0 %v1769
      %1801 = vmatprep.subr.bf16.mxu0 0
      %1802 = vmatpush2.bf16.msra.mxu0 0
      %1803 = vmatprep.subr.bf16.mxu0 0
      %1804 = vmatpush2.bf16.msra.mxu0 0
      %1805 = vmatprep.subr.bf16.mxu0 0
      %1806 = vmatpush2.bf16.msra.mxu0 0
      %1807 = vmatprep.subr.bf16.mxu0 0
      %1808 = vmatpush2.bf16.msra.mxu0 0
      %1809 = vmatprep.subr.bf16.mxu0 0
      %1810 = vmatpush2.bf16.msra.mxu0 0
      %1811 = vmatprep.subr.bf16.mxu0 0
      %1812 = vmatpush2.bf16.msra.mxu0 0
      %1813 = vmatprep.subr.bf16.mxu0 0
      %1814 = vmatpush2.bf16.msra.mxu0 0
      %1815 = vmatprep.subr.bf16.mxu0 0
      %1816 = vmatpush2.bf16.msra.mxu0 0
      %1817 = vmatprep.mubr.bf16.mxu0 0
      %1818 = vmatmul.mubr.bf16.gmra.mxu0 %v1696
      %v1819 = vpop.f32.mrf.mxu0
      %v1820 = vadd.f32 %v1735, %v1819
      %v1821 = vpop.f32.mrf.mxu0
      %v1822 = vpop.f32.mrf.mxu0
      %v1823 = vadd.f32 %v1735, %v1822
      %v1824 = vpop.f32.mrf.mxu0
      %1825 = vmatprep.mubr.bf16.mxu0 0
      %1826 = vmatmul.mubr.bf16.gmra.mxu0 %v1697
      %v1827 = vpop.f32.mrf.mxu0
      %v1828 = vadd.f32 %v1735, %v1827
      %v1829 = vpop.f32.mrf.mxu0
      %v1830 = vpop.f32.mrf.mxu0
      %v1831 = vadd.f32 %v1735, %v1830
      %v1832 = vpop.f32.mrf.mxu0
      %1833 = vmatprep.mubr.bf16.mxu0 0
      %1834 = vmatmul.mubr.bf16.gmra.mxu0 %v1698
      %v1835 = vpop.f32.mrf.mxu0
      %v1836 = vadd.f32 %v1735, %v1835
      %v1837 = vpop.f32.mrf.mxu0
      %v1838 = vpop.f32.mrf.mxu0
      %v1839 = vadd.f32 %v1735, %v1838
      %v1840 = vpop.f32.mrf.mxu0
      %1841 = vmatprep.mubr.bf16.mxu0 0
      %1842 = vmatmul.mubr.bf16.gmra.mxu0 %v1699
      %v1843 = vpop.f32.mrf.mxu0
      %v1844 = vadd.f32 %v1735, %v1843
      %v1845 = vpop.f32.mrf.mxu0
      %v1846 = vpop.f32.mrf.mxu0
      %v1847 = vadd.f32 %v1735, %v1846
      %v1848 = vpop.f32.mrf.mxu0
      %1849 = vmatprep.mubr.bf16.mxu0 0
      %1850 = vmatmul.mubr.bf16.gmra.mxu0 %v1700
      %v1851 = vpop.f32.mrf.mxu0
      %v1852 = vadd.f32 %v1735, %v1851
      %v1853 = vpop.f32.mrf.mxu0
      %v1854 = vpop.f32.mrf.mxu0
      %v1855 = vadd.f32 %v1735, %v1854
      %v1856 = vpop.f32.mrf.mxu0
      %1857 = vmatprep.mubr.bf16.mxu0 0
      %1858 = vmatmul.mubr.bf16.gmra.mxu0 %v1701
      %v1859 = vpop.f32.mrf.mxu0
      %v1860 = vadd.f32 %v1735, %v1859
      %v1861 = vpop.f32.mrf.mxu0
      %v1862 = vpop.f32.mrf.mxu0
      %v1863 = vadd.f32 %v1735, %v1862
      %v1864 = vpop.f32.mrf.mxu0
      %1865 = vmatprep.mubr.bf16.mxu0 0
      %1866 = vmatmul.mubr.bf16.gmra.mxu0 %v1702
      %v1867 = vpop.f32.mrf.mxu0
      %v1868 = vadd.f32 %v1735, %v1867
      %v1869 = vpop.f32.mrf.mxu0
      %v1870 = vpop.f32.mrf.mxu0
      %v1871 = vadd.f32 %v1735, %v1870
      %v1872 = vpop.f32.mrf.mxu0
      %1873 = vmatprep.mubr.bf16.mxu0 0
      %1874 = vmatmul.mubr.bf16.gmra.mxu0 %v1703
      %v1875 = vpop.f32.mrf.mxu0
      %v1876 = vadd.f32 %v1735, %v1875
      %v1877 = vpop.f32.mrf.mxu0
      %v1878 = vpop.f32.mrf.mxu0
      %v1879 = vadd.f32 %v1735, %v1878
      %v1880 = vpop.f32.mrf.mxu0
      %1881 = vmatprep.mubr.bf16.mxu0 0
      %1882 = vmatmul.mubr.bf16.gmra.mxu0 %v1704
      %v1883 = vpop.f32.mrf.mxu0
      %v1884 = vadd.f32 %v1735, %v1883
      %v1885 = vpop.f32.mrf.mxu0
      %v1886 = vpop.f32.mrf.mxu0
      %v1887 = vadd.f32 %v1735, %v1886
      %v1888 = vpop.f32.mrf.mxu0
      %1889 = vmatprep.mubr.bf16.mxu0 0
      %1890 = vmatmul.mubr.bf16.gmra.mxu0 %v1705
      %v1891 = vpop.f32.mrf.mxu0
      %v1892 = vadd.f32 %v1735, %v1891
      %v1893 = vpop.f32.mrf.mxu0
      %v1894 = vpop.f32.mrf.mxu0
      %v1895 = vadd.f32 %v1735, %v1894
      %v1896 = vpop.f32.mrf.mxu0
      %1897 = vmatprep.mubr.bf16.mxu0 0
      %1898 = vmatmul.mubr.bf16.gmra.mxu0 %v1706
      %v1899 = vpop.f32.mrf.mxu0
      %v1900 = vadd.f32 %v1735, %v1899
      %v1901 = vpop.f32.mrf.mxu0
      %v1902 = vpop.f32.mrf.mxu0
      %v1903 = vadd.f32 %v1735, %v1902
      %v1904 = vpop.f32.mrf.mxu0
      %1905 = vmatprep.mubr.bf16.mxu0 0
      %1906 = vmatmul.mubr.bf16.gmra.mxu0 %v1707
      %v1907 = vpop.f32.mrf.mxu0
      %v1908 = vadd.f32 %v1735, %v1907
      %v1909 = vpop.f32.mrf.mxu0
      %v1910 = vpop.f32.mrf.mxu0
      %v1911 = vadd.f32 %v1735, %v1910
      %v1912 = vpop.f32.mrf.mxu0
      %1913 = vmatprep.mubr.bf16.mxu0 0
      %1914 = vmatmul.mubr.bf16.gmra.mxu0 %v1708
      %v1915 = vpop.f32.mrf.mxu0
      %v1916 = vadd.f32 %v1735, %v1915
      %v1917 = vpop.f32.mrf.mxu0
      %v1918 = vpop.f32.mrf.mxu0
      %v1919 = vadd.f32 %v1735, %v1918
      %v1920 = vpop.f32.mrf.mxu0
      %1921 = vmatprep.mubr.bf16.mxu0 0
      %1922 = vmatmul.mubr.bf16.gmra.mxu0 %v1709
      %v1923 = vpop.f32.mrf.mxu0
      %v1924 = vadd.f32 %v1735, %v1923
      %v1925 = vpop.f32.mrf.mxu0
      %v1926 = vpop.f32.mrf.mxu0
      %v1927 = vadd.f32 %v1735, %v1926
      %v1928 = vpop.f32.mrf.mxu0
      %1929 = vmatprep.mubr.bf16.mxu0 0
      %1930 = vmatmul.mubr.bf16.gmra.mxu0 %v1710
      %v1931 = vpop.f32.mrf.mxu0
      %v1932 = vadd.f32 %v1735, %v1931
      %v1933 = vpop.f32.mrf.mxu0
      %v1934 = vpop.f32.mrf.mxu0
      %v1935 = vadd.f32 %v1735, %v1934
      %v1936 = vpop.f32.mrf.mxu0
      %1937 = vmatprep.mubr.bf16.mxu0 0
      %1938 = vmatmul.mubr.bf16.gmra.mxu0 %v1711
      %v1939 = vpop.f32.mrf.mxu0
      %v1940 = vadd.f32 %v1735, %v1939
      %v1941 = vpop.f32.mrf.mxu0
      %v1942 = vpop.f32.mrf.mxu0
      %v1943 = vadd.f32 %v1735, %v1942
      %v1944 = vpop.f32.mrf.mxu0
      %1945 = vmatprep.mubr.bf16.mxu0 0
      %1946 = vmatmul.mubr.bf16.gmra.mxu0 %v1712
      %v1947 = vpop.f32.mrf.mxu0
      %v1948 = vadd.f32 %v1735, %v1947
      %v1949 = vpop.f32.mrf.mxu0
      %v1950 = vpop.f32.mrf.mxu0
      %v1951 = vadd.f32 %v1735, %v1950
      %v1952 = vpop.f32.mrf.mxu0
      %1953 = vmatprep.mubr.bf16.mxu0 0
      %1954 = vmatmul.mubr.bf16.gmra.mxu0 %v1713
      %v1955 = vpop.f32.mrf.mxu0
      %v1956 = vadd.f32 %v1735, %v1955
      %v1957 = vpop.f32.mrf.mxu0
      %v1958 = vpop.f32.mrf.mxu0
      %v1959 = vadd.f32 %v1735, %v1958
      %v1960 = vpop.f32.mrf.mxu0
      %1961 = vdwg.mxu0
      %vm1962 = vcmp.ge.f32.partialorder %v1820, 0.0
      %vm1963 = vcmp.ge.f32.partialorder %v1823, 0.0
      %vm1964 = vcmp.ge.f32.partialorder %v1828, 0.0
      %vm1965 = vcmp.ge.f32.partialorder %v1831, 0.0
      %vm1966 = vcmp.ge.f32.partialorder %v1836, 0.0
      %vm1967 = vcmp.ge.f32.partialorder %v1839, 0.0
      %vm1968 = vcmp.ge.f32.partialorder %v1844, 0.0
      %vm1969 = vcmp.ge.f32.partialorder %v1847, 0.0
      %vm1970 = vcmp.ge.f32.partialorder %v1852, 0.0
      %vm1971 = vcmp.ge.f32.partialorder %v1855, 0.0
      %vm1972 = vcmp.ge.f32.partialorder %v1860, 0.0
      %vm1973 = vcmp.ge.f32.partialorder %v1863, 0.0
      %vm1974 = vcmp.ge.f32.partialorder %v1868, 0.0
      %vm1975 = vcmp.ge.f32.partialorder %v1871, 0.0
      %vm1976 = vcmp.ge.f32.partialorder %v1876, 0.0
      %vm1977 = vcmp.ge.f32.partialorder %v1879, 0.0
      %vm1978 = vcmp.ge.f32.partialorder %v1884, 0.0
      %vm1979 = vcmp.ge.f32.partialorder %v1887, 0.0
      %vm1980 = vcmp.ge.f32.partialorder %v1892, 0.0
      %vm1981 = vcmp.ge.f32.partialorder %v1895, 0.0
      %vm1982 = vcmp.ge.f32.partialorder %v1900, 0.0
      %vm1983 = vcmp.ge.f32.partialorder %v1903, 0.0
      %vm1984 = vcmp.ge.f32.partialorder %v1908, 0.0
      %vm1985 = vcmp.ge.f32.partialorder %v1911, 0.0
      %vm1986 = vcmp.ge.f32.partialorder %v1916, 0.0
      %vm1987 = vcmp.ge.f32.partialorder %v1919, 0.0
      %vm1988 = vcmp.ge.f32.partialorder %v1924, 0.0
      %vm1989 = vcmp.ge.f32.partialorder %v1927, 0.0
      %vm1990 = vcmp.ge.f32.partialorder %v1932, 0.0
      %vm1991 = vcmp.ge.f32.partialorder %v1935, 0.0
      %vm1992 = vcmp.ge.f32.partialorder %v1940, 0.0
      %vm1993 = vcmp.ge.f32.partialorder %v1943, 0.0
      %vm1994 = vcmp.ge.f32.partialorder %v1948, 0.0
      %vm1995 = vcmp.ge.f32.partialorder %v1951, 0.0
      %vm1996 = vcmp.ge.f32.partialorder %v1956, 0.0
      %vm1997 = vcmp.ge.f32.partialorder %v1959, 0.0
      %v1998 = vmul.f32 %v1820, 0.01
      %v1999 = vmul.f32 %v1823, 0.01
      %v2000 = vmul.f32 %v1828, 0.01
      %v2001 = vmul.f32 %v1831, 0.01
      %v2002 = vmul.f32 %v1836, 0.01
      %v2003 = vmul.f32 %v1839, 0.01
      %v2004 = vmul.f32 %v1844, 0.01
      %v2005 = vmul.f32 %v1847, 0.01
      %v2006 = vmul.f32 %v1852, 0.01
      %v2007 = vmul.f32 %v1855, 0.01
      %v2008 = vmul.f32 %v1860, 0.01
      %v2009 = vmul.f32 %v1863, 0.01
      %v2010 = vmul.f32 %v1868, 0.01
      %v2011 = vmul.f32 %v1871, 0.01
      %v2012 = vmul.f32 %v1876, 0.01
      %v2013 = vmul.f32 %v1879, 0.01
      %v2014 = vmul.f32 %v1884, 0.01
      %v2015 = vmul.f32 %v1887, 0.01
      %v2016 = vmul.f32 %v1892, 0.01
      %v2017 = vmul.f32 %v1895, 0.01
      %v2018 = vmul.f32 %v1900, 0.01
      %v2019 = vmul.f32 %v1903, 0.01
      %v2020 = vmul.f32 %v1908, 0.01
      %v2021 = vmul.f32 %v1911, 0.01
      %v2022 = vmul.f32 %v1916, 0.01
      %v2023 = vmul.f32 %v1919, 0.01
      %v2024 = vmul.f32 %v1924, 0.01
      %v2025 = vmul.f32 %v1927, 0.01
      %v2026 = vmul.f32 %v1932, 0.01
      %v2027 = vmul.f32 %v1935, 0.01
      %v2028 = vmul.f32 %v1940, 0.01
      %v2029 = vmul.f32 %v1943, 0.01
      %v2030 = vmul.f32 %v1948, 0.01
      %v2031 = vmul.f32 %v1951, 0.01
      %v2032 = vmul.f32 %v1956, 0.01
      %v2033 = vmul.f32 %v1959, 0.01
      %v2034 = vsel %vm1962, %v1820, %v1998
      %v2035 = vsel %vm1963, %v1823, %v1999
      %v2036 = vsel %vm1964, %v1828, %v2000
      %v2037 = vsel %vm1965, %v1831, %v2001
      %v2038 = vsel %vm1966, %v1836, %v2002
      %v2039 = vsel %vm1967, %v1839, %v2003
      %v2040 = vsel %vm1968, %v1844, %v2004
      %v2041 = vsel %vm1969, %v1847, %v2005
      %v2042 = vsel %vm1970, %v1852, %v2006
      %v2043 = vsel %vm1971, %v1855, %v2007
      %v2044 = vsel %vm1972, %v1860, %v2008
      %v2045 = vsel %vm1973, %v1863, %v2009
      %v2046 = vsel %vm1974, %v1868, %v2010
      %v2047 = vsel %vm1975, %v1871, %v2011
      %v2048 = vsel %vm1976, %v1876, %v2012
      %v2049 = vsel %vm1977, %v1879, %v2013
      %v2050 = vsel %vm1978, %v1884, %v2014
      %v2051 = vsel %vm1979, %v1887, %v2015
      %v2052 = vsel %vm1980, %v1892, %v2016
      %v2053 = vsel %vm1981, %v1895, %v2017
      %v2054 = vsel %vm1982, %v1900, %v2018
      %v2055 = vsel %vm1983, %v1903, %v2019
      %v2056 = vsel %vm1984, %v1908, %v2020
      %v2057 = vsel %vm1985, %v1911, %v2021
      %v2058 = vsel %vm1986, %v1916, %v2022
      %v2059 = vsel %vm1987, %v1919, %v2023
      %v2060 = vsel %vm1988, %v1924, %v2024
      %v2061 = vsel %vm1989, %v1927, %v2025
      %v2062 = vsel %vm1990, %v1932, %v2026
      %v2063 = vsel %vm1991, %v1935, %v2027
      %v2064 = vsel %vm1992, %v1940, %v2028
      %v2065 = vsel %vm1993, %v1943, %v2029
      %v2066 = vsel %vm1994, %v1948, %v2030
      %v2067 = vsel %vm1995, %v1951, %v2031
      %v2068 = vsel %vm1996, %v1956, %v2032
      %v2069 = vsel %vm1997, %v1959, %v2033
      %vm2070 = vcmask 130048
      %2071 = vst.msk [vmem:[#allocation2] sm:$0xff] %vm2070, %v2034
      %2073 = vrot.lane.b32.xlu0 %v2035, 16
      %v2074 = vpop.permute.xlu0 %2073
      %vm2076 = vcmask 261248
      %2077 = vst.msk [vmem:[#allocation2] sm:$0xff] %vm2076, %v2074
      %2079 = vrot.lane.b32.xlu0 %v2036, 32
      %v2080 = vpop.permute.xlu0 %2079
      %vm2082 = vcmask 392448
      %2083 = vst.msk [vmem:[#allocation2] sm:$0xff] %vm2082, %v2080
      %2085 = vrot.lane.b32.xlu0 %v2037, 48
      %v2086 = vpop.permute.xlu0 %2085
      %vm2088 = vcmask 523648
      %2089 = vst.msk [vmem:[#allocation2] sm:$0xff] %vm2088, %v2086
      %2091 = vrot.lane.b32.xlu0 %v2038, 64
      %v2092 = vpop.permute.xlu0 %2091
      %vm2094 = vcmask 654848
      %2095 = vst.msk [vmem:[#allocation2] sm:$0xff] %vm2094, %v2092
      %2097 = vrot.lane.b32.xlu0 %v2039, 80
      %v2098 = vpop.permute.xlu0 %2097
      %vm2100 = vcmask 786048
      %2101 = vst.msk [vmem:[#allocation2] sm:$0xff] %vm2100, %v2098
      %2103 = vrot.lane.b32.xlu0 %v2040, 96
      %v2104 = vpop.permute.xlu0 %2103
      %vm2106 = vcmask 917248
      %2107 = vst.msk [vmem:[#allocation2] sm:$0xff] %vm2106, %v2104
      %2109 = vrot.lane.b32.xlu0 %v2041, 112
      %v2110 = vpop.permute.xlu0 %2109
      %vm2112 = vcmask 1048448
      %2113 = vst.msk [vmem:[#allocation2] sm:$0xff] %vm2112, %v2110
      %2114 = vst.msk [vmem:[#allocation2 + $0x8] sm:$0xff] %vm2070, %v2042
      %2116 = vrot.lane.b32.xlu0 %v2043, 16
      %v2117 = vpop.permute.xlu0 %2116
      %2119 = vst.msk [vmem:[#allocation2 + $0x8] sm:$0xff] %vm2076, %v2117
      %2121 = vrot.lane.b32.xlu0 %v2044, 32
      %v2122 = vpop.permute.xlu0 %2121
      %2124 = vst.msk [vmem:[#allocation2 + $0x8] sm:$0xff] %vm2082, %v2122
      %2126 = vrot.lane.b32.xlu0 %v2045, 48
      %v2127 = vpop.permute.xlu0 %2126
      %2129 = vst.msk [vmem:[#allocation2 + $0x8] sm:$0xff] %vm2088, %v2127
      %2131 = vrot.lane.b32.xlu0 %v2046, 64
      %v2132 = vpop.permute.xlu0 %2131
      %2134 = vst.msk [vmem:[#allocation2 + $0x8] sm:$0xff] %vm2094, %v2132
      %2136 = vrot.lane.b32.xlu0 %v2047, 80
      %v2137 = vpop.permute.xlu0 %2136
      %2139 = vst.msk [vmem:[#allocation2 + $0x8] sm:$0xff] %vm2100, %v2137
      %2141 = vrot.lane.b32.xlu0 %v2048, 96
      %v2142 = vpop.permute.xlu0 %2141
      %2144 = vst.msk [vmem:[#allocation2 + $0x8] sm:$0xff] %vm2106, %v2142
      %2146 = vrot.lane.b32.xlu0 %v2049, 112
      %v2147 = vpop.permute.xlu0 %2146
      %2149 = vst.msk [vmem:[#allocation2 + $0x8] sm:$0xff] %vm2112, %v2147
      %2150 = vst.msk [vmem:[#allocation2 + $0x10] sm:$0xff] %vm2070, %v2050
      %2152 = vrot.lane.b32.xlu0 %v2051, 16
      %v2153 = vpop.permute.xlu0 %2152
      %2155 = vst.msk [vmem:[#allocation2 + $0x10] sm:$0xff] %vm2076, %v2153
      %2157 = vrot.lane.b32.xlu0 %v2052, 32
      %v2158 = vpop.permute.xlu0 %2157
      %2160 = vst.msk [vmem:[#allocation2 + $0x10] sm:$0xff] %vm2082, %v2158
      %2162 = vrot.lane.b32.xlu0 %v2053, 48
      %v2163 = vpop.permute.xlu0 %2162
      %2165 = vst.msk [vmem:[#allocation2 + $0x10] sm:$0xff] %vm2088, %v2163
      %2167 = vrot.lane.b32.xlu0 %v2054, 64
      %v2168 = vpop.permute.xlu0 %2167
      %2170 = vst.msk [vmem:[#allocation2 + $0x10] sm:$0xff] %vm2094, %v2168
      %2172 = vrot.lane.b32.xlu0 %v2055, 80
      %v2173 = vpop.permute.xlu0 %2172
      %2175 = vst.msk [vmem:[#allocation2 + $0x10] sm:$0xff] %vm2100, %v2173
      %2177 = vrot.lane.b32.xlu0 %v2056, 96
      %v2178 = vpop.permute.xlu0 %2177
      %2180 = vst.msk [vmem:[#allocation2 + $0x10] sm:$0xff] %vm2106, %v2178
      %2182 = vrot.lane.b32.xlu0 %v2057, 112
      %v2183 = vpop.permute.xlu0 %2182
      %2185 = vst.msk [vmem:[#allocation2 + $0x10] sm:$0xff] %vm2112, %v2183
      %2186 = vst.msk [vmem:[#allocation2 + $0x18] sm:$0xff] %vm2070, %v2058
      %2188 = vrot.lane.b32.xlu0 %v2059, 16
      %v2189 = vpop.permute.xlu0 %2188
      %2191 = vst.msk [vmem:[#allocation2 + $0x18] sm:$0xff] %vm2076, %v2189
      %2193 = vrot.lane.b32.xlu0 %v2060, 32
      %v2194 = vpop.permute.xlu0 %2193
      %2196 = vst.msk [vmem:[#allocation2 + $0x18] sm:$0xff] %vm2082, %v2194
      %2198 = vrot.lane.b32.xlu0 %v2061, 48
      %v2199 = vpop.permute.xlu0 %2198
      %2201 = vst.msk [vmem:[#allocation2 + $0x18] sm:$0xff] %vm2088, %v2199
      %2203 = vrot.lane.b32.xlu0 %v2062, 64
      %v2204 = vpop.permute.xlu0 %2203
      %2206 = vst.msk [vmem:[#allocation2 + $0x18] sm:$0xff] %vm2094, %v2204
      %2208 = vrot.lane.b32.xlu0 %v2063, 80
      %v2209 = vpop.permute.xlu0 %2208
      %2211 = vst.msk [vmem:[#allocation2 + $0x18] sm:$0xff] %vm2100, %v2209
      %2213 = vrot.lane.b32.xlu0 %v2064, 96
      %v2214 = vpop.permute.xlu0 %2213
      %2216 = vst.msk [vmem:[#allocation2 + $0x18] sm:$0xff] %vm2106, %v2214
      %2218 = vrot.lane.b32.xlu0 %v2065, 112
      %v2219 = vpop.permute.xlu0 %2218
      %2221 = vst.msk [vmem:[#allocation2 + $0x18] sm:$0xff] %vm2112, %v2219
      %2222 = vst.msk [vmem:[#allocation2 + $0x20] sm:$0xff] %vm2070, %v2066
      %2224 = vrot.lane.b32.xlu0 %v2067, 16
      %v2225 = vpop.permute.xlu0 %2224
      %2227 = vst.msk [vmem:[#allocation2 + $0x20] sm:$0xff] %vm2076, %v2225
      %2229 = vrot.lane.b32.xlu0 %v2068, 32
      %v2230 = vpop.permute.xlu0 %2229
      %2232 = vst.msk [vmem:[#allocation2 + $0x20] sm:$0xff] %vm2082, %v2230
      %2234 = vrot.lane.b32.xlu0 %v2069, 48
      %v2235 = vpop.permute.xlu0 %2234
      %2237 = vst.msk [vmem:[#allocation2 + $0x20] sm:$0xff] %vm2088, %v2235
      %v2238 = vld [vmem:[#allocation2] sm:$0xff]
      %v2239 = vld [vmem:[#allocation2 + $0x8] sm:$0xff]
      %v2240 = vld [vmem:[#allocation2 + $0x10] sm:$0xff]
      %v2241 = vld [vmem:[#allocation2 + $0x18] sm:$0xff]
      %v2242 = vld [vmem:[#allocation2 + $0x20] sm:$0xff]
      %v2243 = vpack.c.bf16 %v2238, %v2238
      %v2244 = vpack.c.bf16 %v2239, %v2239
      %v2245 = vpack.c.bf16 %v2240, %v2240
      %v2246 = vpack.c.bf16 %v2241, %v2241
      %v2247 = vpack.c.bf16 %v2242, %v2242
      %v2248 = vld [vmem:[%s7] sm:$0xf]
      %v2249 = vld [vmem:[%s7 + $0x4] sm:$0xf]
      %v2250 = vld [vmem:[%s7 + $0x8] sm:$0xf]
      %v2251 = vld [vmem:[%s7 + $0xc] sm:$0xf]
      %v2252 = vld [vmem:[%s7 + $0x10] sm:$0xf]
      %v2253 = vld [vmem:[%s7 + $0x14] sm:$0xf]
      %v2254 = vld [vmem:[%s7 + $0x18] sm:$0xf]
      %v2255 = vld [vmem:[%s7 + $0x1c] sm:$0xf]
      %v2256 = vld [vmem:[%s7 + $0x20] sm:$0xf]
      %v2257 = vld [vmem:[%s7 + $0x24] sm:$0xf]
      %v2258 = vld [vmem:[%s7 + $0x28] sm:$0xf]
      %v2259 = vld [vmem:[%s7 + $0x2c] sm:$0xf]
      %v2260 = vld [vmem:[%s7 + $0x30] sm:$0xf]
      %v2261 = vld [vmem:[%s7 + $0x34] sm:$0xf]
      %v2262 = vld [vmem:[%s7 + $0x38] sm:$0xf]
      %v2263 = vld [vmem:[%s7 + $0x3c] sm:$0xf]
      %v2264 = vld [vmem:[%s7 + $0x40] sm:$0xf]
      %v2265 = vld [vmem:[%s7 + $0x44] sm:$0xf]
      %v2266 = vld [vmem:[%s7 + $0x48] sm:$0xf]
      %v2267 = vld [vmem:[%s7 + $0x4c] sm:$0xf]
      %v2268 = vld [vmem:[%s7 + $0x50] sm:$0xf]
      %v2269 = vld [vmem:[%s7 + $0x54] sm:$0xf]
      %v2270 = vld [vmem:[%s7 + $0x58] sm:$0xf]
      %v2271 = vld [vmem:[%s7 + $0x5c] sm:$0xf]
      %v2272 = vld [vmem:[%s7 + $0x60] sm:$0xf]
      %v2273 = vld [vmem:[%s7 + $0x64] sm:$0xf]
      %v2274 = vld [vmem:[%s7 + $0x68] sm:$0xf]
      %v2275 = vld [vmem:[%s7 + $0x6c] sm:$0xf]
      %v2276 = vld [vmem:[%s7 + $0x70] sm:$0xf]
      %v2277 = vld [vmem:[%s7 + $0x74] sm:$0xf]
      %v2278 = vld [vmem:[%s7 + $0x78] sm:$0xf]
      %v2279 = vld [vmem:[%s7 + $0x7c] sm:$0xf]
      %v2280 = vld [vmem:[%s7 + $0x80] sm:$0xf]
      %v2281 = vld [vmem:[%s7 + $0x84] sm:$0xf]
      %v2282 = vld [vmem:[%s7 + $0x88] sm:$0xf]
      %v2283 = vld [vmem:[%s7 + $0x8c] sm:$0xf]
      %v2284 = vld [vmem:[%s7 + $0x90] sm:$0xf]
      %v2285 = vld [vmem:[%s7 + $0x94] sm:$0xf]
      %v2286 = vld [vmem:[%s7 + $0x98] sm:$0xf]
      %v2287 = vld [vmem:[%s7 + $0x9c] sm:$0xf]
      %v2288 = vld [vmem:[%s7 + $0xa0] sm:$0xf]
      %v2289 = vld [vmem:[%s7 + $0xa4] sm:$0xf]
      %v2290 = vld [vmem:[%s7 + $0xa8] sm:$0xf]
      %v2291 = vld [vmem:[%s7 + $0xac] sm:$0xf]
      %v2292 = vld [vmem:[%s7 + $0xb0] sm:$0xf]
      %v2293 = vld [vmem:[%s7 + $0xb4] sm:$0xf]
      %v2294 = vld [vmem:[%s7 + $0xb8] sm:$0xf]
      %v2295 = vld [vmem:[%s7 + $0xbc] sm:$0xf]
      %v2296 = vld [vmem:[%s7 + $0xc0] sm:$0xf]
      %v2297 = vld [vmem:[%s7 + $0xc4] sm:$0xf]
      %v2298 = vld [vmem:[%s7 + $0xc8] sm:$0xf]
      %v2299 = vld [vmem:[%s7 + $0xcc] sm:$0xf]
      %v2300 = vld [vmem:[%s7 + $0xd0] sm:$0xf]
      %v2301 = vld [vmem:[%s7 + $0xd4] sm:$0xf]
      %v2302 = vld [vmem:[%s7 + $0xd8] sm:$0xf]
      %v2303 = vld [vmem:[%s7 + $0xdc] sm:$0xf]
      %v2304 = vld [vmem:[%s7 + $0xe0] sm:$0xf]
      %v2305 = vld [vmem:[%s7 + $0xe4] sm:$0xf]
      %v2306 = vld [vmem:[%s7 + $0xe8] sm:$0xf]
      %v2307 = vld [vmem:[%s7 + $0xec] sm:$0xf]
      %v2308 = vld [vmem:[%s7 + $0xf0] sm:$0xf]
      %v2309 = vld [vmem:[%s7 + $0xf4] sm:$0xf]
      %v2310 = vld [vmem:[%s7 + $0xf8] sm:$0xf]
      %v2311 = vld [vmem:[%s7 + $0xfc] sm:$0xf]
      %v2312 = vld [vmem:[%s7 + $0x100] sm:$0xf]
      %v2313 = vld [vmem:[%s7 + $0x104] sm:$0xf]
      %v2314 = vld [vmem:[%s7 + $0x108] sm:$0xf]
      %v2315 = vld [vmem:[%s7 + $0x10c] sm:$0xf]
      %v2316 = vld [vmem:[%s7 + $0x110] sm:$0xf]
      %v2317 = vld [vmem:[%s7 + $0x114] sm:$0xf]
      %v2318 = vld [vmem:[%s7 + $0x118] sm:$0xf]
      %v2319 = vld [vmem:[%s7 + $0x11c] sm:$0xf]
      %v2320 = vld [vmem:[%s8] sm:$0x1]
      %v2322 = vlaneseq
      %v2323 = vshrl.u32 %v2322, 7
      %v2324 = vsub.s32 0, %v2323
      %v2325 = vrot.slane %v2320, %v2324
      %v2399 = vunpack.c.l.b16 %v2248
      %v2400 = vunpack.c.l.b16 %v2249
      %v2401 = vunpack.c.l.b16 %v2250
      %v2402 = vunpack.c.l.b16 %v2251
      %v2403 = vunpack.c.l.b16 %v2252
      %v2404 = vunpack.c.l.b16 %v2253
      %v2405 = vunpack.c.l.b16 %v2254
      %v2406 = vunpack.c.l.b16 %v2255
      %v2407 = vunpack.c.l.b16 %v2256
      %v2408 = vunpack.c.l.b16 %v2257
      %v2409 = vunpack.c.l.b16 %v2258
      %v2410 = vunpack.c.l.b16 %v2259
      %v2411 = vunpack.c.l.b16 %v2260
      %v2412 = vunpack.c.l.b16 %v2261
      %v2413 = vunpack.c.l.b16 %v2262
      %v2414 = vunpack.c.l.b16 %v2263
      %v2415 = vunpack.c.l.b16 %v2264
      %v2416 = vunpack.c.l.b16 %v2265
      %v2417 = vunpack.c.l.b16 %v2266
      %v2418 = vunpack.c.l.b16 %v2267
      %v2419 = vunpack.c.l.b16 %v2268
      %v2420 = vunpack.c.l.b16 %v2269
      %v2421 = vunpack.c.l.b16 %v2270
      %v2422 = vunpack.c.l.b16 %v2271
      %v2423 = vunpack.c.l.b16 %v2272
      %v2424 = vunpack.c.l.b16 %v2273
      %v2425 = vunpack.c.l.b16 %v2274
      %v2426 = vunpack.c.l.b16 %v2275
      %v2427 = vunpack.c.l.b16 %v2276
      %v2428 = vunpack.c.l.b16 %v2277
      %v2429 = vunpack.c.l.b16 %v2278
      %v2430 = vunpack.c.l.b16 %v2279
      %v2431 = vunpack.c.l.b16 %v2280
      %v2432 = vunpack.c.l.b16 %v2281
      %v2433 = vunpack.c.l.b16 %v2282
      %v2434 = vunpack.c.l.b16 %v2283
      %v2435 = vunpack.c.l.b16 %v2284
      %v2436 = vunpack.c.l.b16 %v2285
      %v2437 = vunpack.c.l.b16 %v2286
      %v2438 = vunpack.c.l.b16 %v2287
      %v2439 = vunpack.c.l.b16 %v2288
      %v2440 = vunpack.c.l.b16 %v2289
      %v2441 = vunpack.c.l.b16 %v2290
      %v2442 = vunpack.c.l.b16 %v2291
      %v2443 = vunpack.c.l.b16 %v2292
      %v2444 = vunpack.c.l.b16 %v2293
      %v2445 = vunpack.c.l.b16 %v2294
      %v2446 = vunpack.c.l.b16 %v2295
      %v2447 = vunpack.c.l.b16 %v2296
      %v2448 = vunpack.c.l.b16 %v2297
      %v2449 = vunpack.c.l.b16 %v2298
      %v2450 = vunpack.c.l.b16 %v2299
      %v2451 = vunpack.c.l.b16 %v2300
      %v2452 = vunpack.c.l.b16 %v2301
      %v2453 = vunpack.c.l.b16 %v2302
      %v2454 = vunpack.c.l.b16 %v2303
      %v2455 = vunpack.c.l.b16 %v2304
      %v2456 = vunpack.c.l.b16 %v2305
      %v2457 = vunpack.c.l.b16 %v2306
      %v2458 = vunpack.c.l.b16 %v2307
      %v2459 = vunpack.c.l.b16 %v2308
      %v2460 = vunpack.c.l.b16 %v2309
      %v2461 = vunpack.c.l.b16 %v2310
      %v2462 = vunpack.c.l.b16 %v2311
      %v2463 = vunpack.c.l.b16 %v2312
      %v2464 = vunpack.c.l.b16 %v2313
      %v2465 = vunpack.c.l.b16 %v2314
      %v2466 = vunpack.c.l.b16 %v2315
      %v2467 = vunpack.c.l.b16 %v2316
      %v2468 = vunpack.c.l.b16 %v2317
      %v2469 = vunpack.c.l.b16 %v2318
      %v2470 = vunpack.c.l.b16 %v2319
      %v2471 = vpack.c.b16 %v2400, %v2399
      %v2472 = vpack.c.b16 %v2402, %v2401
      %v2473 = vpack.c.b16 %v2404, %v2403
      %v2474 = vpack.c.b16 %v2406, %v2405
      %v2475 = vpack.c.b16 %v2408, %v2407
      %v2476 = vpack.c.b16 %v2410, %v2409
      %v2477 = vpack.c.b16 %v2412, %v2411
      %v2478 = vpack.c.b16 %v2414, %v2413
      %v2479 = vpack.c.b16 %v2416, %v2415
      %v2480 = vpack.c.b16 %v2418, %v2417
      %v2481 = vpack.c.b16 %v2420, %v2419
      %v2482 = vpack.c.b16 %v2422, %v2421
      %v2483 = vpack.c.b16 %v2424, %v2423
      %v2484 = vpack.c.b16 %v2426, %v2425
      %v2485 = vpack.c.b16 %v2428, %v2427
      %v2486 = vpack.c.b16 %v2430, %v2429
      %v2487 = vpack.c.b16 %v2432, %v2431
      %v2488 = vpack.c.b16 %v2434, %v2433
      %v2489 = vpack.c.b16 %v2436, %v2435
      %v2490 = vpack.c.b16 %v2438, %v2437
      %v2491 = vpack.c.b16 %v2440, %v2439
      %v2492 = vpack.c.b16 %v2442, %v2441
      %v2493 = vpack.c.b16 %v2444, %v2443
      %v2494 = vpack.c.b16 %v2446, %v2445
      %v2495 = vpack.c.b16 %v2448, %v2447
      %v2496 = vpack.c.b16 %v2450, %v2449
      %v2497 = vpack.c.b16 %v2452, %v2451
      %v2498 = vpack.c.b16 %v2454, %v2453
      %v2499 = vpack.c.b16 %v2456, %v2455
      %v2500 = vpack.c.b16 %v2458, %v2457
      %v2501 = vpack.c.b16 %v2460, %v2459
      %v2502 = vpack.c.b16 %v2462, %v2461
      %v2503 = vpack.c.b16 %v2464, %v2463
      %v2504 = vpack.c.b16 %v2466, %v2465
      %v2505 = vpack.c.b16 %v2468, %v2467
      %v2506 = vpack.c.b16 %v2470, %v2469
      %vm2543 = vcmask 523264
      %v2545 = vsel %vm2543, %v2247, 0
      %2547 = vmatprep.subr.bf16.mxu0 0
      %2548 = vmatpush1.bf16.msra.mxu0 %v2478
      %2549 = vmatprep.subr.bf16.mxu0 0
      %2550 = vmatpush1.bf16.msra.mxu0 %v2477
      %2551 = vmatprep.subr.bf16.mxu0 0
      %2552 = vmatpush1.bf16.msra.mxu0 %v2476
      %2553 = vmatprep.subr.bf16.mxu0 0
      %2554 = vmatpush1.bf16.msra.mxu0 %v2475
      %2555 = vmatprep.subr.bf16.mxu0 0
      %2556 = vmatpush1.bf16.msra.mxu0 %v2474
      %2557 = vmatprep.subr.bf16.mxu0 0
      %2558 = vmatpush1.bf16.msra.mxu0 %v2473
      %2559 = vmatprep.subr.bf16.mxu0 0
      %2560 = vmatpush1.bf16.msra.mxu0 %v2472
      %2561 = vmatprep.subr.bf16.mxu0 0
      %2562 = vmatpush1.bf16.msra.mxu0 %v2471
      %2563 = vmatprep.subr.bf16.mxu0 0
      %2564 = vmatpush2.bf16.msra.mxu0 %v2486
      %2565 = vmatprep.subr.bf16.mxu0 0
      %2566 = vmatpush2.bf16.msra.mxu0 %v2485
      %2567 = vmatprep.subr.bf16.mxu0 0
      %2568 = vmatpush2.bf16.msra.mxu0 %v2484
      %2569 = vmatprep.subr.bf16.mxu0 0
      %2570 = vmatpush2.bf16.msra.mxu0 %v2483
      %2571 = vmatprep.subr.bf16.mxu0 0
      %2572 = vmatpush2.bf16.msra.mxu0 %v2482
      %2573 = vmatprep.subr.bf16.mxu0 0
      %2574 = vmatpush2.bf16.msra.mxu0 %v2481
      %2575 = vmatprep.subr.bf16.mxu0 0
      %2576 = vmatpush2.bf16.msra.mxu0 %v2480
      %2577 = vmatprep.subr.bf16.mxu0 0
      %2578 = vmatpush2.bf16.msra.mxu0 %v2479
      %2579 = vmatprep.mubr.bf16.mxu0 %v2244
      %2580 = vmatmul.mubr.bf16.gmra.mxu0 %v2243
      %v2581 = vpop.f32.mrf.mxu0
      %v2582 = vadd.f32 %v2325, %v2581
      %v2583 = vpop.f32.mrf.mxu0
      %v2584 = vpop.f32.mrf.mxu0
      %v2585 = vpop.f32.mrf.mxu0
      %2586 = vdwg.mxu0
      %2587 = vmatprep.subr.bf16.mxu0 0
      %2588 = vmatpush1.bf16.msra.mxu0 %v2494
      %2589 = vmatprep.subr.bf16.mxu0 0
      %2590 = vmatpush1.bf16.msra.mxu0 %v2493
      %2591 = vmatprep.subr.bf16.mxu0 0
      %2592 = vmatpush1.bf16.msra.mxu0 %v2492
      %2593 = vmatprep.subr.bf16.mxu0 0
      %2594 = vmatpush1.bf16.msra.mxu0 %v2491
      %2595 = vmatprep.subr.bf16.mxu0 0
      %2596 = vmatpush1.bf16.msra.mxu0 %v2490
      %2597 = vmatprep.subr.bf16.mxu0 0
      %2598 = vmatpush1.bf16.msra.mxu0 %v2489
      %2599 = vmatprep.subr.bf16.mxu0 0
      %2600 = vmatpush1.bf16.msra.mxu0 %v2488
      %2601 = vmatprep.subr.bf16.mxu0 0
      %2602 = vmatpush1.bf16.msra.mxu0 %v2487
      %2603 = vmatprep.subr.bf16.mxu0 0
      %2604 = vmatpush2.bf16.msra.mxu0 %v2502
      %2605 = vmatprep.subr.bf16.mxu0 0
      %2606 = vmatpush2.bf16.msra.mxu0 %v2501
      %2607 = vmatprep.subr.bf16.mxu0 0
      %2608 = vmatpush2.bf16.msra.mxu0 %v2500
      %2609 = vmatprep.subr.bf16.mxu0 0
      %2610 = vmatpush2.bf16.msra.mxu0 %v2499
      %2611 = vmatprep.subr.bf16.mxu0 0
      %2612 = vmatpush2.bf16.msra.mxu0 %v2498
      %2613 = vmatprep.subr.bf16.mxu0 0
      %2614 = vmatpush2.bf16.msra.mxu0 %v2497
      %2615 = vmatprep.subr.bf16.mxu0 0
      %2616 = vmatpush2.bf16.msra.mxu0 %v2496
      %2617 = vmatprep.subr.bf16.mxu0 0
      %2618 = vmatpush2.bf16.msra.mxu0 %v2495
      %2619 = vmatprep.mubr.bf16.mxu0 %v2246
      %2620 = vmatmul.mubr.bf16.gmra.mxu0 %v2245
      %v2621 = vpop.f32.mrf.mxu0
      %v2622 = vadd.f32 %v2582, %v2621
      %v2623 = vpop.f32.mrf.mxu0
      %v2624 = vpop.f32.mrf.mxu0
      %v2625 = vpop.f32.mrf.mxu0
      %2626 = vdwg.mxu0
      %2627 = vmatprep.subr.bf16.mxu0 0
      %2628 = vmatpush1.bf16.msra.mxu0 0
      %2629 = vmatprep.subr.bf16.mxu0 0
      %2630 = vmatpush1.bf16.msra.mxu0 0
      %2631 = vmatprep.subr.bf16.mxu0 0
      %2632 = vmatpush1.bf16.msra.mxu0 0
      %2633 = vmatprep.subr.bf16.mxu0 0
      %2634 = vmatpush1.bf16.msra.mxu0 0
      %2635 = vmatprep.subr.bf16.mxu0 0
      %2636 = vmatpush1.bf16.msra.mxu0 %v2506
      %2637 = vmatprep.subr.bf16.mxu0 0
      %2638 = vmatpush1.bf16.msra.mxu0 %v2505
      %2639 = vmatprep.subr.bf16.mxu0 0
      %2640 = vmatpush1.bf16.msra.mxu0 %v2504
      %2641 = vmatprep.subr.bf16.mxu0 0
      %2642 = vmatpush1.bf16.msra.mxu0 %v2503
      %2643 = vmatprep.subr.bf16.mxu0 0
      %2644 = vmatpush2.bf16.msra.mxu0 0
      %2645 = vmatprep.subr.bf16.mxu0 0
      %2646 = vmatpush2.bf16.msra.mxu0 0
      %2647 = vmatprep.subr.bf16.mxu0 0
      %2648 = vmatpush2.bf16.msra.mxu0 0
      %2649 = vmatprep.subr.bf16.mxu0 0
      %2650 = vmatpush2.bf16.msra.mxu0 0
      %2651 = vmatprep.subr.bf16.mxu0 0
      %2652 = vmatpush2.bf16.msra.mxu0 0
      %2653 = vmatprep.subr.bf16.mxu0 0
      %2654 = vmatpush2.bf16.msra.mxu0 0
      %2655 = vmatprep.subr.bf16.mxu0 0
      %2656 = vmatpush2.bf16.msra.mxu0 0
      %2657 = vmatprep.subr.bf16.mxu0 0
      %2658 = vmatpush2.bf16.msra.mxu0 0
      %2659 = vmatprep.mubr.bf16.mxu0 0
      %2660 = vmatmul.mubr.bf16.gmra.mxu0 %v2545
      %v2661 = vpop.f32.mrf.mxu0
      %v2662 = vadd.f32 %v2622, %v2661
      %v2663 = vpop.f32.mrf.mxu0
      %v2664 = vpop.f32.mrf.mxu0
      %v2665 = vpop.f32.mrf.mxu0
      %2666 = vdwg.mxu0
      %vm2667 = vcmp.ge.f32.partialorder %v2662, 0.0
      %v2668 = vmul.f32 %v2662, 0.01
      %v2669 = vsel %vm2667, %v2662, %v2668
      %v2670 = vpack.c.bf16 %v2669, %v2669
      %v2671 = vld [vmem:[%s9] sm:$0xf]
      %v2672 = vld [vmem:[%s9 + $0x4] sm:$0xf]
      %v2673 = vld [vmem:[%s9 + $0x8] sm:$0xf]
      %v2674 = vld [vmem:[%s9 + $0xc] sm:$0xf]
      %v2675 = vld [vmem:[%s9 + $0x10] sm:$0xf]
      %v2676 = vld [vmem:[%s9 + $0x14] sm:$0xf]
      %v2677 = vld [vmem:[%s9 + $0x18] sm:$0xf]
      %v2678 = vld [vmem:[%s9 + $0x1c] sm:$0xf]
      %v2679 = vld [vmem:[%s9 + $0x20] sm:$0xf]
      %v2680 = vld [vmem:[%s9 + $0x24] sm:$0xf]
      %v2681 = vld [vmem:[%s9 + $0x28] sm:$0xf]
      %v2682 = vld [vmem:[%s9 + $0x2c] sm:$0xf]
      %v2683 = vld [vmem:[%s9 + $0x30] sm:$0xf]
      %v2684 = vld [vmem:[%s9 + $0x34] sm:$0xf]
      %v2685 = vld [vmem:[%s9 + $0x38] sm:$0xf]
      %v2686 = vld [vmem:[%s9 + $0x3c] sm:$0xf]
      %v2687 = vld [vmem:[%s10] sm:$0x1]
      %v2689 = vlaneseq
      %v2690 = vshrl.u32 %v2689, 7
      %v2691 = vsub.s32 0, %v2690
      %v2692 = vrot.slane %v2687, %v2691
      %v2710 = vunpack.c.l.b16 %v2671
      %v2711 = vunpack.c.l.b16 %v2672
      %v2712 = vunpack.c.l.b16 %v2673
      %v2713 = vunpack.c.l.b16 %v2674
      %v2714 = vunpack.c.l.b16 %v2675
      %v2715 = vunpack.c.l.b16 %v2676
      %v2716 = vunpack.c.l.b16 %v2677
      %v2717 = vunpack.c.l.b16 %v2678
      %v2718 = vunpack.c.l.b16 %v2679
      %v2719 = vunpack.c.l.b16 %v2680
      %v2720 = vunpack.c.l.b16 %v2681
      %v2721 = vunpack.c.l.b16 %v2682
      %v2722 = vunpack.c.l.b16 %v2683
      %v2723 = vunpack.c.l.b16 %v2684
      %v2724 = vunpack.c.l.b16 %v2685
      %v2725 = vunpack.c.l.b16 %v2686
      %v2726 = vpack.c.b16 %v2711, %v2710
      %v2727 = vpack.c.b16 %v2713, %v2712
      %v2728 = vpack.c.b16 %v2715, %v2714
      %v2729 = vpack.c.b16 %v2717, %v2716
      %v2730 = vpack.c.b16 %v2719, %v2718
      %v2731 = vpack.c.b16 %v2721, %v2720
      %v2732 = vpack.c.b16 %v2723, %v2722
      %v2733 = vpack.c.b16 %v2725, %v2724
      %2742 = vmatprep.subr.bf16.mxu0 0
      %2743 = vmatpush1.bf16.msra.mxu0 %v2733
      %2744 = vmatprep.subr.bf16.mxu0 0
      %2745 = vmatpush1.bf16.msra.mxu0 %v2732
      %2746 = vmatprep.subr.bf16.mxu0 0
      %2747 = vmatpush1.bf16.msra.mxu0 %v2731
      %2748 = vmatprep.subr.bf16.mxu0 0
      %2749 = vmatpush1.bf16.msra.mxu0 %v2730
      %2750 = vmatprep.subr.bf16.mxu0 0
      %2751 = vmatpush1.bf16.msra.mxu0 %v2729
      %2752 = vmatprep.subr.bf16.mxu0 0
      %2753 = vmatpush1.bf16.msra.mxu0 %v2728
      %2754 = vmatprep.subr.bf16.mxu0 0
      %2755 = vmatpush1.bf16.msra.mxu0 %v2727
      %2756 = vmatprep.subr.bf16.mxu0 0
      %2757 = vmatpush1.bf16.msra.mxu0 %v2726
      %2758 = vmatprep.subr.bf16.mxu0 0
      %2759 = vmatpush2.bf16.msra.mxu0 0
      %2760 = vmatprep.subr.bf16.mxu0 0
      %2761 = vmatpush2.bf16.msra.mxu0 0
      %2762 = vmatprep.subr.bf16.mxu0 0
      %2763 = vmatpush2.bf16.msra.mxu0 0
      %2764 = vmatprep.subr.bf16.mxu0 0
      %2765 = vmatpush2.bf16.msra.mxu0 0
      %2766 = vmatprep.subr.bf16.mxu0 0
      %2767 = vmatpush2.bf16.msra.mxu0 0
      %2768 = vmatprep.subr.bf16.mxu0 0
      %2769 = vmatpush2.bf16.msra.mxu0 0
      %2770 = vmatprep.subr.bf16.mxu0 0
      %2771 = vmatpush2.bf16.msra.mxu0 0
      %2772 = vmatprep.subr.bf16.mxu0 0
      %2773 = vmatpush2.bf16.msra.mxu0 0
      %2774 = vmatprep.mubr.bf16.mxu0 0
      %2775 = vmatmul.mubr.bf16.gmra.mxu0 %v2670
      %v2776 = vpop.f32.mrf.mxu0
      %v2777 = vadd.f32 %v2692, %v2776
      %v2778 = vpop.f32.mrf.mxu0
      %v2779 = vpop.f32.mrf.mxu0
      %v2780 = vpop.f32.mrf.mxu0
      %2781 = vdwg.mxu0
      %2782 = vst.msk [vmem:[%s389] sm:$0xff] %vm2543, %v2777
      %p2783 = scmp.lt.s32.totalorder %s22, 1
      %s2784 = scalar_select %p2783, %s22, 1
      %s2785 = smul.addr %s2784, 8
      %s2786 = scalar_lea.vmem %s11, %s2785
      // Predicated region
      $region65: #{conv_encoder_forward.1} parent=63 // pred_check
        %p2787 = pneg %p276
      $region66: #{conv_encoder_forward.1} parent=63 // pred_check_branch
        %2789 = sbr.rel (%p2787) target = $region68
      $region67: #{conv_encoder_forward.1} parent=63 // pred_region
        _
      $region68: #{conv_encoder_forward.1} parent=63 // pred_fallthru
        _
    $region64: #{conv_encoder_forward.1} parent=5 // pred_fallthru
      _
    %p2790 = scmp.le.s32.totalorder 2, %s17
    // Predicated region
    $region69: #{conv_encoder_forward.1} parent=5 // pred_check
      %p2791 = pneg %p2790
    $region70: #{conv_encoder_forward.1} parent=5 // pred_check_branch
      %2793 = sbr.rel (%p2791) target = $region72
    $region71: #{conv_encoder_forward.1} parent=5 // pred_region
      %s2794 = ssub.s32 %s17, 2
      // Predicated region
      $region73: #{conv_encoder_forward.1} parent=71 // pred_check
        %p2795 = pneg %p282
      $region74: #{conv_encoder_forward.1} parent=71 // pred_check_branch
        %2797 = sbr.rel (%p2795) target = $region76
      $region75: #{conv_encoder_forward.1} parent=71 // pred_region
        %p2798 = scmp.lt.s32.totalorder %s23, 1
        %s2799 = scalar_select %p2798, %s23, 1
        %s2800 = smul.addr %s2799, 8
        %s2801 = scalar_lea.vmem %s11, %s2800
      $region76: #{conv_encoder_forward.1} parent=71 // pred_fallthru
        _
    $region72: #{conv_encoder_forward.1} parent=5 // pred_fallthru
      _
  $region6: #{conv_encoder_forward.1} parent=0 // loop_footer
    %s21 = sadd.s32 1, %s17
  $region7: #{conv_encoder_forward.1} parent=0 // loop_footer_branch
    %16 = sbr.rel target = $region3
  $region8: #{conv_encoder_forward.1} parent=0 // loop_exit
    _

</llo_original>
